<compile_context>
chip_gen: v5e
topology: v5e:2x2
jax: 0.10.0
libtpu: 0.0.40
codegen_flags: <defaults>
</compile_context>

<pallas_src>
import functools

import jax
import jax.numpy as jnp
from jax.experimental import pallas as pl
from jax.experimental.pallas import tpu as pltpu

KPAD = 128  # lane-dense output width for the classifier head


# ----------------------------------------------------------------------------
# Fused kernel: shard0 (conv+relu, conv+relu) -> shard1 (pool + linear)
# ----------------------------------------------------------------------------
def _fused_shards_kernel(x_ref, w1_ref, b1_ref, w2_ref, b2_ref, fcw_ref, fcb_ref,
                         o_ref, xpad_ref, a1pad_ref, *, H, W, Cin, C1):
    # x_ref:   (1, H, W, Cin)        input tile for one batch element
    # w1_ref:  (9*Cin, C1)           conv1 weights, im2col-flattened
    # b1_ref:  (1, C1)
    # w2_ref:  (9*C1, C1)            conv2 weights, im2col-flattened
    # b2_ref:  (1, C1)
    # fcw_ref: (C1, KPAD)            classifier weights, zero-padded to 128 lanes
    # fcb_ref: (1, KPAD)
    # o_ref:   (1, 1, KPAD)          lane-dense logits slab
    # xpad_ref:  VMEM (H+2, W+2, Cin)  in-kernel "same" padding halo
    # a1pad_ref: VMEM (H+2, W+2, C1)   VMEM-resident inter-layer activation

    # In-kernel "same" padding: zero the halo scratches, write interiors.
    # (Zeroed every grid step so megacore "parallel" partitioning stays correct.)
    xpad_ref[...] = jnp.zeros_like(xpad_ref)
    a1pad_ref[...] = jnp.zeros_like(a1pad_ref)
    xpad_ref[pl.ds(1, H), pl.ds(1, W), :] = x_ref[0, :, :, :]

    def im2col(pad_ref, c):
        # Build the (H*W, 9*c) patch matrix from the padded activation: the
        # nine shifted windows concatenated on the lane axis, ordered
        # (kh, kw, c) to match w.reshape(9*c, Cout).
        cols = []
        for kh in range(3):
            for kw in range(3):
                cols.append(
                    pad_ref[pl.ds(kh, H), pl.ds(kw, W), :].reshape(H * W, c))
        return jnp.concatenate(cols, axis=1)

    # shard 0 / conv1: single MXU push, K = 9*Cin; bias + ReLU on the VPU.
    a1 = jnp.dot(im2col(xpad_ref, Cin), w1_ref[...],
                 preferred_element_type=jnp.float32) + b1_ref[...]
    a1 = jnp.maximum(a1, 0.0)                                   # (H*W, C1)
    a1pad_ref[pl.ds(1, H), pl.ds(1, W), :] = a1.reshape(H, W, C1)

    # shard 0 / conv2: single MXU push, K = 9*C1.
    a2 = jnp.dot(im2col(a1pad_ref, C1), w2_ref[...],
                 preferred_element_type=jnp.float32) + b2_ref[...]
    a2 = jnp.maximum(a2, 0.0)                                   # (H*W, C1)

    # shard 1: global average pool as an MXU ones-row matmul (scale folded into
    # the ones row), chained into the classifier matmul.
    ones_row = jnp.full((1, H * W), 1.0 / (H * W), jnp.float32)
    pooled = jnp.dot(ones_row, a2, preferred_element_type=jnp.float32)   # (1, C1)
    logits = jnp.dot(pooled, fcw_ref[...],
                     preferred_element_type=jnp.float32) + fcb_ref[...]  # (1, KPAD)
    o_ref[...] = logits.reshape(1, 1, KPAD).astype(o_ref.dtype)


# ----------------------------------------------------------------------------
# "DistributedModel" equivalent: build shards, run the fused shard chain
# ----------------------------------------------------------------------------
def init_params(key, cin=4, c1=8, num_classes=10):
    ks = jax.random.split(key, 6)
    scale = 0.1
    return {
        "conv1_w": scale * jax.random.normal(ks[0], (3, 3, cin, c1), jnp.float32),
        "conv1_b": scale * jax.random.normal(ks[1], (c1,), jnp.float32),
        "conv2_w": scale * jax.random.normal(ks[2], (3, 3, c1, c1), jnp.float32),
        "conv2_b": scale * jax.random.normal(ks[3], (c1,), jnp.float32),
        "fc_w": scale * jax.random.normal(ks[4], (c1, num_classes), jnp.float32),
        "fc_b": scale * jax.random.normal(ks[5], (num_classes,), jnp.float32),
    }


def distributed_model_forward(x_nchw, params):
    """Mirrors DistributedModel._forward_sequential (non-pipelined path).

    x_nchw: (N, Cin, H, W) float32 (PyTorch convention). Returns (N, num_classes).
    """
    # TODO(synk): RPC/RRef shard deployment, pipelining and metrics collection
    # have no Pallas equivalent; the shard chain runs fused on this device.
    # TODO(synk): optional bf16 activations/weights for v6e/v7x left off to keep
    # exact f32 parity with the PyTorch module.

    # layout: transpose NCHW -> NHWC once; the kernel operates in NHWC.
    x = jnp.transpose(x_nchw, (0, 2, 3, 1))
    N, H, W, Cin = x.shape
    C1 = params["conv1_b"].shape[0]
    K = params["fc_b"].shape[0]

    # One-time weight prep (im2col-flatten convs; pad the head to 128 lanes).
    w1 = params["conv1_w"].reshape(9 * Cin, C1)
    b1 = params["conv1_b"].reshape(1, C1)
    w2 = params["conv2_w"].reshape(9 * C1, C1)
    b2 = params["conv2_b"].reshape(1, C1)
    fcw = jnp.zeros((C1, KPAD), jnp.float32).at[:, :K].set(params["fc_w"])
    fcb = jnp.zeros((1, KPAD), jnp.float32).at[0, :K].set(params["fc_b"])

    flops = int(
        2 * N * H * W * (9 * Cin * C1 + 9 * C1 * C1)   # the two convs
        + 2 * N * H * W * C1                           # MXU pooling
        + 2 * N * C1 * KPAD)                           # classifier
    bytes_accessed = 4 * int(
        x.size + w1.size + b1.size + w2.size + b2.size + fcw.size + fcb.size
        + N * KPAD)
    ce = pl.CostEstimate(flops=flops, transcendentals=0,
                         bytes_accessed=bytes_accessed)

    kernel = functools.partial(_fused_shards_kernel, H=H, W=W, Cin=Cin, C1=C1)
    out = pl.pallas_call(
        kernel,
        out_shape=jax.ShapeDtypeStruct((N, 1, KPAD), jnp.float32),
        grid_spec=pltpu.PrefetchScalarGridSpec(
            num_scalar_prefetch=0,
            grid=(N,),
            in_specs=[
                pl.BlockSpec((1, H, W, Cin), lambda n: (n, 0, 0, 0)),
                pl.BlockSpec((9 * Cin, C1), lambda n: (0, 0)),
                pl.BlockSpec((1, C1), lambda n: (0, 0)),
                pl.BlockSpec((9 * C1, C1), lambda n: (0, 0)),
                pl.BlockSpec((1, C1), lambda n: (0, 0)),
                pl.BlockSpec((C1, KPAD), lambda n: (0, 0)),
                pl.BlockSpec((1, KPAD), lambda n: (0, 0)),
            ],
            out_specs=pl.BlockSpec((1, 1, KPAD), lambda n: (n, 0, 0)),
            scratch_shapes=[
                pltpu.VMEM((H + 2, W + 2, Cin), jnp.float32),  # padded input
                pltpu.VMEM((H + 2, W + 2, C1), jnp.float32),   # padded act1
            ],
        ),
        compiler_params=pltpu.CompilerParams(
            dimension_semantics=("parallel",)),
        cost_estimate=ce,
    )(x, w1, b1, w2, b2, fcw, fcb)

    return out.reshape(N, KPAD)[:, :K]


# Pure-JAX reference for correctness checking.
def _reference_forward(x_nchw, params):
    x = jnp.transpose(x_nchw, (0, 2, 3, 1))
    dn = ("NHWC", "HWIO", "NHWC")
    x = jax.lax.conv_general_dilated(x, params["conv1_w"], (1, 1), "SAME",
                                     dimension_numbers=dn) + params["conv1_b"]
    x = jnp.maximum(x, 0.0)
    x = jax.lax.conv_general_dilated(x, params["conv2_w"], (1, 1), "SAME",
                                     dimension_numbers=dn) + params["conv2_b"]
    x = jnp.maximum(x, 0.0)
    pooled = jnp.mean(x, axis=(1, 2))
    return pooled @ params["fc_w"] + params["fc_b"]


if __name__ == "__main__":
    key = jax.random.PRNGKey(0)
    kx, kp = jax.random.split(key)

    N, CIN, H, W = 2, 4, 16, 16
    NUM_CLASSES = 10
    x = jax.random.normal(kx, (N, CIN, H, W), jnp.float32)      # NCHW, like PyTorch
    params = init_params(kp, cin=CIN, c1=8, num_classes=NUM_CLASSES)

    out = distributed_model_forward(x, params)
    out = jax.block_until_ready(out)

    ref = jax.block_until_ready(_reference_forward(x, params))
    assert out.shape == (N, NUM_CLASSES)
    assert jnp.max(jnp.abs(out - ref)) < 1e-4

    print("KERNEL_OK")
</pallas_src>

<mosaic_0001>
module attributes {stable_mosaic.version = 11 : i64} {
  func.func @_fused_shards_kernel(%arg0: i32, %arg1: memref<1x16x16x4xf32, #tpu.memory_space<vmem>>, %arg2: memref<36x8xf32, #tpu.memory_space<vmem>>, %arg3: memref<1x8xf32, #tpu.memory_space<vmem>>, %arg4: memref<72x8xf32, #tpu.memory_space<vmem>>, %arg5: memref<1x8xf32, #tpu.memory_space<vmem>>, %arg6: memref<8x128xf32, #tpu.memory_space<vmem>>, %arg7: memref<1x128xf32, #tpu.memory_space<vmem>>, %arg8: memref<1x1x128xf32, #tpu.memory_space<vmem>>, %arg9: memref<18x18x4xf32, #tpu.memory_space<vmem>>, %arg10: memref<18x18x8xf32, #tpu.memory_space<vmem>>) attributes {dimension_semantics = [#tpu.dimension_semantics<parallel>], iteration_bounds = array<i64: 2>, scalar_prefetch = 0 : i64, scratch_operands = 2 : i64, tpu.core_type = #tpu.core_type<tc>, window_params = [{transform_indices = @transform_0, window_bounds = array<i64: 1, 16, 16, 4>}, {pipeline_mode = #tpu.pipeline_mode<synchronous>, transform_indices = @transform_1, window_bounds = array<i64: 36, 8>}, {pipeline_mode = #tpu.pipeline_mode<synchronous>, transform_indices = @transform_2, window_bounds = array<i64: 1, 8>}, {pipeline_mode = #tpu.pipeline_mode<synchronous>, transform_indices = @transform_3, window_bounds = array<i64: 72, 8>}, {pipeline_mode = #tpu.pipeline_mode<synchronous>, transform_indices = @transform_4, window_bounds = array<i64: 1, 8>}, {pipeline_mode = #tpu.pipeline_mode<synchronous>, transform_indices = @transform_5, window_bounds = array<i64: 8, 128>}, {pipeline_mode = #tpu.pipeline_mode<synchronous>, transform_indices = @transform_6, window_bounds = array<i64: 1, 128>}, {transform_indices = @transform_7, window_bounds = array<i64: 1, 1, 128>}]} {
    %cst = arith.constant 0.000000e+00 : f32
    %0 = vector.broadcast %cst : f32 to vector<18x18x4xf32>
    %c0 = arith.constant 0 : index
    %c0_0 = arith.constant 0 : index
    %c0_1 = arith.constant 0 : index
    %1 = vector.load %arg9[%c0, %c0_0, %c0_1] : memref<18x18x4xf32, #tpu.memory_space<vmem>>, vector<18x18x4xf32>
    tpu.vector_store %arg9[%c0, %c0_0, %c0_1], %0 {strides = array<i32>} : memref<18x18x4xf32, #tpu.memory_space<vmem>>, vector<18x18x4xf32>,
    %cst_2 = arith.constant 0.000000e+00 : f32
    %2 = vector.broadcast %cst_2 : f32 to vector<18x18x8xf32>
    %c0_3 = arith.constant 0 : index
    %c0_4 = arith.constant 0 : index
    %c0_5 = arith.constant 0 : index
    %3 = vector.load %arg10[%c0_3, %c0_4, %c0_5] : memref<18x18x8xf32, #tpu.memory_space<vmem>>, vector<18x18x8xf32>
    tpu.vector_store %arg10[%c0_3, %c0_4, %c0_5], %2 {strides = array<i32>} : memref<18x18x8xf32, #tpu.memory_space<vmem>>, vector<18x18x8xf32>,
    %c0_6 = arith.constant 0 : index
    %c0_7 = arith.constant 0 : index
    %c0_8 = arith.constant 0 : index
    %c0_9 = arith.constant 0 : index
    %4 = vector.load %arg1[%c0_6, %c0_7, %c0_8, %c0_9] : memref<1x16x16x4xf32, #tpu.memory_space<vmem>>, vector<1x16x16x4xf32>
    %5 = vector.shape_cast %4 : vector<1x16x16x4xf32> to vector<16x16x4xf32>
    %c1 = arith.constant 1 : index
    %c1_10 = arith.constant 1 : index
    %c0_11 = arith.constant 0 : index
    %6 = vector.load %arg9[%c1, %c1_10, %c0_11] : memref<18x18x4xf32, #tpu.memory_space<vmem>>, vector<16x16x4xf32>
    tpu.vector_store %arg9[%c1, %c1_10, %c0_11], %5 {strides = array<i32>} : memref<18x18x4xf32, #tpu.memory_space<vmem>>, vector<16x16x4xf32>,
    %c0_12 = arith.constant 0 : index
    %c0_13 = arith.constant 0 : index
    %c0_14 = arith.constant 0 : index
    %7 = vector.load %arg9[%c0_12, %c0_13, %c0_14] : memref<18x18x4xf32, #tpu.memory_space<vmem>>, vector<16x16x4xf32>
    %8 = vector.shape_cast %7 : vector<16x16x4xf32> to vector<256x4xf32>
    %c0_15 = arith.constant 0 : index
    %c1_16 = arith.constant 1 : index
    %c0_17 = arith.constant 0 : index
    %9 = vector.load %arg9[%c0_15, %c1_16, %c0_17] : memref<18x18x4xf32, #tpu.memory_space<vmem>>, vector<16x16x4xf32>
    %10 = vector.shape_cast %9 : vector<16x16x4xf32> to vector<256x4xf32>
    %c0_18 = arith.constant 0 : index
    %c2 = arith.constant 2 : index
    %c0_19 = arith.constant 0 : index
    %11 = vector.load %arg9[%c0_18, %c2, %c0_19] : memref<18x18x4xf32, #tpu.memory_space<vmem>>, vector<16x16x4xf32>
    %12 = vector.shape_cast %11 : vector<16x16x4xf32> to vector<256x4xf32>
    %c1_20 = arith.constant 1 : index
    %c0_21 = arith.constant 0 : index
    %c0_22 = arith.constant 0 : index
    %13 = vector.load %arg9[%c1_20, %c0_21, %c0_22] : memref<18x18x4xf32, #tpu.memory_space<vmem>>, vector<16x16x4xf32>
    %14 = vector.shape_cast %13 : vector<16x16x4xf32> to vector<256x4xf32>
    %c1_23 = arith.constant 1 : index
    %c1_24 = arith.constant 1 : index
    %c0_25 = arith.constant 0 : index
    %15 = vector.load %arg9[%c1_23, %c1_24, %c0_25] : memref<18x18x4xf32, #tpu.memory_space<vmem>>, vector<16x16x4xf32>
    %16 = vector.shape_cast %15 : vector<16x16x4xf32> to vector<256x4xf32>
    %c1_26 = arith.constant 1 : index
    %c2_27 = arith.constant 2 : index
    %c0_28 = arith.constant 0 : index
    %17 = vector.load %arg9[%c1_26, %c2_27, %c0_28] : memref<18x18x4xf32, #tpu.memory_space<vmem>>, vector<16x16x4xf32>
    %18 = vector.shape_cast %17 : vector<16x16x4xf32> to vector<256x4xf32>
    %c2_29 = arith.constant 2 : index
    %c0_30 = arith.constant 0 : index
    %c0_31 = arith.constant 0 : index
    %19 = vector.load %arg9[%c2_29, %c0_30, %c0_31] : memref<18x18x4xf32, #tpu.memory_space<vmem>>, vector<16x16x4xf32>
    %20 = vector.shape_cast %19 : vector<16x16x4xf32> to vector<256x4xf32>
    %c2_32 = arith.constant 2 : index
    %c1_33 = arith.constant 1 : index
    %c0_34 = arith.constant 0 : index
    %21 = vector.load %arg9[%c2_32, %c1_33, %c0_34] : memref<18x18x4xf32, #tpu.memory_space<vmem>>, vector<16x16x4xf32>
    %22 = vector.shape_cast %21 : vector<16x16x4xf32> to vector<256x4xf32>
    %c2_35 = arith.constant 2 : index
    %c2_36 = arith.constant 2 : index
    %c0_37 = arith.constant 0 : index
    %23 = vector.load %arg9[%c2_35, %c2_36, %c0_37] : memref<18x18x4xf32, #tpu.memory_space<vmem>>, vector<16x16x4xf32>
    %24 = vector.shape_cast %23 : vector<16x16x4xf32> to vector<256x4xf32>
    %25 = tpu.concatenate %8, %10, %12, %14, %16, %18, %20, %22, %24 in 1 : vector<256x4xf32>, vector<256x4xf32>, vector<256x4xf32>, vector<256x4xf32>, vector<256x4xf32>, vector<256x4xf32>, vector<256x4xf32>, vector<256x4xf32>, vector<256x4xf32> -> vector<256x36xf32>
    %c0_38 = arith.constant 0 : index
    %c0_39 = arith.constant 0 : index
    %26 = vector.load %arg2[%c0_38, %c0_39] : memref<36x8xf32, #tpu.memory_space<vmem>>, vector<36x8xf32>
    %cst_40 = arith.constant dense<0.000000e+00> : vector<256x8xf32>
    %27 = tpu.matmul %25, %26, %cst_40 {dimension_numbers = #tpu.dot_dimension_numbers<[1], [0], [0], [1], [0, 0, 1, 1], [], []>} : vector<256x36xf32>, vector<36x8xf32>, vector<256x8xf32> -> vector<256x8xf32>
    %c0_41 = arith.constant 0 : index
    %c0_42 = arith.constant 0 : index
    %28 = vector.load %arg3[%c0_41, %c0_42] : memref<1x8xf32, #tpu.memory_space<vmem>>, vector<1x8xf32>
    %29 = vector.broadcast %28 : vector<1x8xf32> to vector<256x8xf32>
    %30 = arith.addf %27, %29 : vector<256x8xf32>
    %cst_43 = arith.constant 0.000000e+00 : f32
    %31 = vector.broadcast %cst_43 : f32 to vector<256x8xf32>
    %32 = arith.maximumf %30, %31 : vector<256x8xf32>
    %33 = vector.shape_cast %32 : vector<256x8xf32> to vector<16x16x8xf32>
    %c1_44 = arith.constant 1 : index
    %c1_45 = arith.constant 1 : index
    %c0_46 = arith.constant 0 : index
    %34 = vector.load %arg10[%c1_44, %c1_45, %c0_46] : memref<18x18x8xf32, #tpu.memory_space<vmem>>, vector<16x16x8xf32>
    tpu.vector_store %arg10[%c1_44, %c1_45, %c0_46], %33 {strides = array<i32>} : memref<18x18x8xf32, #tpu.memory_space<vmem>>, vector<16x16x8xf32>,
    %c0_47 = arith.constant 0 : index
    %c0_48 = arith.constant 0 : index
    %c0_49 = arith.constant 0 : index
    %35 = vector.load %arg10[%c0_47, %c0_48, %c0_49] : memref<18x18x8xf32, #tpu.memory_space<vmem>>, vector<16x16x8xf32>
    %36 = vector.shape_cast %35 : vector<16x16x8xf32> to vector<256x8xf32>
    %c0_50 = arith.constant 0 : index
    %c1_51 = arith.constant 1 : index
    %c0_52 = arith.constant 0 : index
    %37 = vector.load %arg10[%c0_50, %c1_51, %c0_52] : memref<18x18x8xf32, #tpu.memory_space<vmem>>, vector<16x16x8xf32>
    %38 = vector.shape_cast %37 : vector<16x16x8xf32> to vector<256x8xf32>
    %c0_53 = arith.constant 0 : index
    %c2_54 = arith.constant 2 : index
    %c0_55 = arith.constant 0 : index
    %39 = vector.load %arg10[%c0_53, %c2_54, %c0_55] : memref<18x18x8xf32, #tpu.memory_space<vmem>>, vector<16x16x8xf32>
    %40 = vector.shape_cast %39 : vector<16x16x8xf32> to vector<256x8xf32>
    %c1_56 = arith.constant 1 : index
    %c0_57 = arith.constant 0 : index
    %c0_58 = arith.constant 0 : index
    %41 = vector.load %arg10[%c1_56, %c0_57, %c0_58] : memref<18x18x8xf32, #tpu.memory_space<vmem>>, vector<16x16x8xf32>
    %42 = vector.shape_cast %41 : vector<16x16x8xf32> to vector<256x8xf32>
    %c1_59 = arith.constant 1 : index
    %c1_60 = arith.constant 1 : index
    %c0_61 = arith.constant 0 : index
    %43 = vector.load %arg10[%c1_59, %c1_60, %c0_61] : memref<18x18x8xf32, #tpu.memory_space<vmem>>, vector<16x16x8xf32>
    %44 = vector.shape_cast %43 : vector<16x16x8xf32> to vector<256x8xf32>
    %c1_62 = arith.constant 1 : index
    %c2_63 = arith.constant 2 : index
    %c0_64 = arith.constant 0 : index
    %45 = vector.load %arg10[%c1_62, %c2_63, %c0_64] : memref<18x18x8xf32, #tpu.memory_space<vmem>>, vector<16x16x8xf32>
    %46 = vector.shape_cast %45 : vector<16x16x8xf32> to vector<256x8xf32>
    %c2_65 = arith.constant 2 : index
    %c0_66 = arith.constant 0 : index
    %c0_67 = arith.constant 0 : index
    %47 = vector.load %arg10[%c2_65, %c0_66, %c0_67] : memref<18x18x8xf32, #tpu.memory_space<vmem>>, vector<16x16x8xf32>
    %48 = vector.shape_cast %47 : vector<16x16x8xf32> to vector<256x8xf32>
    %c2_68 = arith.constant 2 : index
    %c1_69 = arith.constant 1 : index
    %c0_70 = arith.constant 0 : index
    %49 = vector.load %arg10[%c2_68, %c1_69, %c0_70] : memref<18x18x8xf32, #tpu.memory_space<vmem>>, vector<16x16x8xf32>
    %50 = vector.shape_cast %49 : vector<16x16x8xf32> to vector<256x8xf32>
    %c2_71 = arith.constant 2 : index
    %c2_72 = arith.constant 2 : index
    %c0_73 = arith.constant 0 : index
    %51 = vector.load %arg10[%c2_71, %c2_72, %c0_73] : memref<18x18x8xf32, #tpu.memory_space<vmem>>, vector<16x16x8xf32>
    %52 = vector.shape_cast %51 : vector<16x16x8xf32> to vector<256x8xf32>
    %53 = tpu.concatenate %36, %38, %40, %42, %44, %46, %48, %50, %52 in 1 : vector<256x8xf32>, vector<256x8xf32>, vector<256x8xf32>, vector<256x8xf32>, vector<256x8xf32>, vector<256x8xf32>, vector<256x8xf32>, vector<256x8xf32>, vector<256x8xf32> -> vector<256x72xf32>
    %c0_74 = arith.constant 0 : index
    %c0_75 = arith.constant 0 : index
    %54 = vector.load %arg4[%c0_74, %c0_75] : memref<72x8xf32, #tpu.memory_space<vmem>>, vector<72x8xf32>
    %cst_76 = arith.constant dense<0.000000e+00> : vector<256x8xf32>
    %55 = tpu.matmul %53, %54, %cst_76 {dimension_numbers = #tpu.dot_dimension_numbers<[1], [0], [0], [1], [0, 0, 1, 1], [], []>} : vector<256x72xf32>, vector<72x8xf32>, vector<256x8xf32> -> vector<256x8xf32>
    %c0_77 = arith.constant 0 : index
    %c0_78 = arith.constant 0 : index
    %56 = vector.load %arg5[%c0_77, %c0_78] : memref<1x8xf32, #tpu.memory_space<vmem>>, vector<1x8xf32>
    %57 = vector.broadcast %56 : vector<1x8xf32> to vector<256x8xf32>
    %58 = arith.addf %55, %57 : vector<256x8xf32>
    %cst_79 = arith.constant 0.000000e+00 : f32
    %59 = vector.broadcast %cst_79 : f32 to vector<256x8xf32>
    %60 = arith.maximumf %58, %59 : vector<256x8xf32>
    %cst_80 = arith.constant 3.906250e-03 : f32
    %61 = vector.broadcast %cst_80 : f32 to vector<1x256xf32>
    %cst_81 = arith.constant dense<0.000000e+00> : vector<1x8xf32>
    %62 = tpu.matmul %61, %60, %cst_81 {dimension_numbers = #tpu.dot_dimension_numbers<[1], [0], [0], [1], [0, 0, 1, 1], [], []>} : vector<1x256xf32>, vector<256x8xf32>, vector<1x8xf32> -> vector<1x8xf32>
    %c0_82 = arith.constant 0 : index
    %c0_83 = arith.constant 0 : index
    %63 = vector.load %arg6[%c0_82, %c0_83] : memref<8x128xf32, #tpu.memory_space<vmem>>, vector<8x128xf32>
    %cst_84 = arith.constant dense<0.000000e+00> : vector<1x128xf32>
    %64 = tpu.matmul %62, %63, %cst_84 {dimension_numbers = #tpu.dot_dimension_numbers<[1], [0], [0], [1], [0, 0, 1, 1], [], []>} : vector<1x8xf32>, vector<8x128xf32>, vector<1x128xf32> -> vector<1x128xf32>
    %c0_85 = arith.constant 0 : index
    %c0_86 = arith.constant 0 : index
    %65 = vector.load %arg7[%c0_85, %c0_86] : memref<1x128xf32, #tpu.memory_space<vmem>>, vector<1x128xf32>
    %66 = arith.addf %64, %65 : vector<1x128xf32>
    %67 = vector.shape_cast %66 : vector<1x128xf32> to vector<1x1x128xf32>
    %c0_87 = arith.constant 0 : index
    %c0_88 = arith.constant 0 : index
    %c0_89 = arith.constant 0 : index
    %68 = vector.load %arg8[%c0_87, %c0_88, %c0_89] : memref<1x1x128xf32, #tpu.memory_space<vmem>>, vector<1x1x128xf32>
    tpu.vector_store %arg8[%c0_87, %c0_88, %c0_89], %67 {strides = array<i32>} : memref<1x1x128xf32, #tpu.memory_space<vmem>>, vector<1x1x128xf32>,
    return
  }
  func.func @transform_0(%arg0: i32) -> (i32, i32, i32, i32) {
    %c0_i32 = arith.constant 0 : i32
    %c0_i32_0 = arith.constant 0 : i32
    %c0_i32_1 = arith.constant 0 : i32
    %c0_i32_2 = arith.constant 0 : i32
    return %arg0, %c0_i32, %c0_i32_0, %c0_i32_1 : i32, i32, i32, i32
  }
  func.func @transform_1(%arg0: i32) -> (i32, i32) {
    %c0_i32 = arith.constant 0 : i32
    %c0_i32_0 = arith.constant 0 : i32
    %c0_i32_1 = arith.constant 0 : i32
    return %c0_i32, %c0_i32_0 : i32, i32
  }
  func.func @transform_2(%arg0: i32) -> (i32, i32) {
    %c0_i32 = arith.constant 0 : i32
    %c0_i32_0 = arith.constant 0 : i32
    %c0_i32_1 = arith.constant 0 : i32
    return %c0_i32, %c0_i32_0 : i32, i32
  }
  func.func @transform_3(%arg0: i32) -> (i32, i32) {
    %c0_i32 = arith.constant 0 : i32
    %c0_i32_0 = arith.constant 0 : i32
    %c0_i32_1 = arith.constant 0 : i32
    return %c0_i32, %c0_i32_0 : i32, i32
  }
  func.func @transform_4(%arg0: i32) -> (i32, i32) {
    %c0_i32 = arith.constant 0 : i32
    %c0_i32_0 = arith.constant 0 : i32
    %c0_i32_1 = arith.constant 0 : i32
    return %c0_i32, %c0_i32_0 : i32, i32
  }
  func.func @transform_5(%arg0: i32) -> (i32, i32) {
    %c0_i32 = arith.constant 0 : i32
    %c0_i32_0 = arith.constant 0 : i32
    %c0_i32_1 = arith.constant 0 : i32
    return %c0_i32, %c0_i32_0 : i32, i32
  }
  func.func @transform_6(%arg0: i32) -> (i32, i32) {
    %c0_i32 = arith.constant 0 : i32
    %c0_i32_0 = arith.constant 0 : i32
    %c0_i32_1 = arith.constant 0 : i32
    return %c0_i32, %c0_i32_0 : i32, i32
  }
  func.func @transform_7(%arg0: i32) -> (i32, i32, i32) {
    %c0_i32 = arith.constant 0 : i32
    %c0_i32_0 = arith.constant 0 : i32
    %c0_i32_1 = arith.constant 0 : i32
    return %arg0, %c0_i32, %c0_i32_0 : i32, i32, i32
  }
}

</mosaic_0001>

<llo_original>
// kernel: tpu_custom_call.1
$region0: #{tpu_custom_call.1}
  #allocation0 [shape = 'u32[]', space=smem, size = 0x4, offset = 0x4, fixed_abs, tag = 'smem constant byte address 0x4 - core index']
  #allocation1 [shape = 'u32[72,128]{1,0:T(1,128)}', space=vmem, size = 0x9000, scoped, tag = 'internal scratch']
  #allocation2 [shape = 'f32[18,18,4]{2,1,0:T(8,128)}', space=vmem, size = 0x36000, scoped, tag = 'scratch operand']
  #allocation3 [shape = 'f32[18,18,8]{2,1,0:T(8,128)}', space=vmem, size = 0x36000, scoped, tag = 'scratch operand']
  %s0 = inlined_call_operand.vmem [shape: f32[2,16,16,4], index: 0, kind: input, shape index: {}]
  %s1 = inlined_call_operand.vmem [shape: f32[36,8], index: 1, kind: input, shape index: {}]
  %s2 = inlined_call_operand.vmem [shape: f32[1,8], index: 2, kind: input, shape index: {}]
  %s3 = inlined_call_operand.vmem [shape: f32[72,8], index: 3, kind: input, shape index: {}]
  %s4 = inlined_call_operand.vmem [shape: f32[1,8], index: 4, kind: input, shape index: {}]
  %s5 = inlined_call_operand.vmem [shape: f32[8,128], index: 5, kind: input, shape index: {}]
  %s6 = inlined_call_operand.vmem [shape: f32[1,128], index: 6, kind: input, shape index: {}]
  %s7 = inlined_call_operand.hbm [shape: f32[2,1,128], index: 7, kind: output, shape index: {}]
  %s8 = sld [smem:[#allocation0]]
  $region61: #{tpu_custom_call.1} parent=0
    _
  %s10 = ssub.s32 1, %s8
  %s11 = scalar_select 0, %s10, %s8
  $region1: #{tpu_custom_call.1} parent=0
    #allocation4 [shape = 'u8[1024]{0}', space=vmem, size = 0x400, scoped, tag = 'output window, operand 0']
    #allocation5 [shape = 's32[2]{0}', space=sflag, size = 0x8, scoped, tag = 'scoped memory for tpu_custom_call.1']
    %12 = vsyncpa [#allocation5], 0
    %s13 = scalar_lea.sflag [#allocation5], 1
    %14 = vsyncpa %s13, 0
    loop: start=0, step=1, limit=4
    $region2: #{tpu_custom_call.1} parent=1 // loop_pre_header
      _
    $region3: #{tpu_custom_call.1} parent=1 // loop_header
      %s16 = sphi 0, %s20
      %p17 = scmp.ge.s32.totalorder %s16, 4
      %s26 = sphi 0, %s28
      %s29 = sphi 0, %s26
      %s30 = sphi 0, %s29
      %s46 = sphi 0, %s30
      %s50 = sphi 0, %s50
      %s52 = sphi 0, %s50
      %s53 = sphi 0, %s52
      %s67 = sphi 0, %s53
      %s71 = sphi 0, %s71
      %s73 = sphi 0, %s71
      %s74 = sphi 0, %s73
      %s88 = sphi 0, %s74
      %s92 = sphi 0, %s92
      %s94 = sphi 0, %s92
      %s95 = sphi 0, %s94
      %s109 = sphi 0, %s95
      %s113 = sphi 0, %s113
      %s115 = sphi 0, %s113
      %s116 = sphi 0, %s115
      %s130 = sphi 0, %s116
      %s134 = sphi 0, %s134
      %s136 = sphi 0, %s134
      %s137 = sphi 0, %s136
      %s151 = sphi 0, %s137
      %s155 = sphi 0, %s155
      %s157 = sphi 0, %s155
      %s158 = sphi 0, %s157
      %s172 = sphi 0, %s158
      %s178 = sphi 0, %s180
      %s181 = sphi 0, %s178
      %s182 = sphi 0, %s181
      %s198 = sphi 0, %s182
    $region4: #{tpu_custom_call.1} parent=1 // loop_header_branch
      %19 = sbr.rel (%p17) target = $region8
    $region5: #{tpu_custom_call.1} parent=1 // loop_body
      %s21 = ssub.s32 %s16, 1
      %s22 = ssub.s32 %s16, 2
      %s23 = sadd.s32 %s16, 1
      %s24 = ssub.s32 %s16, %s23
      %p25 = scmp.eq.s32.totalorder %s24, 0
      %s27 = sadd.s32 %s26, 1
      %s28 = scalar_select %p25, %s26, %s27
      %p31 = pneg %p25
      %p32 = scmp.eq.s32.totalorder %s16, 1
      %p33 = por %p31, %p32
      %p34 = scmp.ne.s32.totalorder %s26, %s29
      %p35 = scmp.eq.s32.totalorder %s16, 0
      %p36 = por %p34, %p35
      %p37 = scmp.ne.s32.totalorder %s26, %s29
      %p38 = scmp.eq.s32.totalorder %s21, 1
      %p39 = por %p37, %p38
      %p40 = scmp.ne.s32.totalorder %s29, %s30
      %p41 = scmp.eq.s32.totalorder %s21, 0
      %p42 = por %p40, %p41
      %p43 = scmp.ne.s32.totalorder %s29, %s30
      %p44 = scmp.eq.s32.totalorder %s22, 1
      %p45 = por %p43, %p44
      %p47 = scmp.ne.s32.totalorder %s30, %s46
      %p48 = scmp.eq.s32.totalorder %s22, 0
      %p49 = por %p47, %p48
      %s51 = sadd.s32 %s50, 1
      %p54 = scmp.eq.s32.totalorder %s16, 1
      %p55 = scmp.ne.s32.totalorder %s50, %s52
      %p56 = scmp.eq.s32.totalorder %s16, 0
      %p57 = por %p55, %p56
      %p58 = scmp.ne.s32.totalorder %s50, %s52
      %p59 = scmp.eq.s32.totalorder %s21, 1
      %p60 = por %p58, %p59
      %p61 = scmp.ne.s32.totalorder %s52, %s53
      %p62 = scmp.eq.s32.totalorder %s21, 0
      %p63 = por %p61, %p62
      %p64 = scmp.ne.s32.totalorder %s52, %s53
      %p65 = scmp.eq.s32.totalorder %s22, 1
      %p66 = por %p64, %p65
      %p68 = scmp.ne.s32.totalorder %s53, %s67
      %p69 = scmp.eq.s32.totalorder %s22, 0
      %p70 = por %p68, %p69
      %s72 = sadd.s32 %s71, 1
      %p75 = scmp.eq.s32.totalorder %s16, 1
      %p76 = scmp.ne.s32.totalorder %s71, %s73
      %p77 = scmp.eq.s32.totalorder %s16, 0
      %p78 = por %p76, %p77
      %p79 = scmp.ne.s32.totalorder %s71, %s73
      %p80 = scmp.eq.s32.totalorder %s21, 1
      %p81 = por %p79, %p80
      %p82 = scmp.ne.s32.totalorder %s73, %s74
      %p83 = scmp.eq.s32.totalorder %s21, 0
      %p84 = por %p82, %p83
      %p85 = scmp.ne.s32.totalorder %s73, %s74
      %p86 = scmp.eq.s32.totalorder %s22, 1
      %p87 = por %p85, %p86
      %p89 = scmp.ne.s32.totalorder %s74, %s88
      %p90 = scmp.eq.s32.totalorder %s22, 0
      %p91 = por %p89, %p90
      %s93 = sadd.s32 %s92, 1
      %p96 = scmp.eq.s32.totalorder %s16, 1
      %p97 = scmp.ne.s32.totalorder %s92, %s94
      %p98 = scmp.eq.s32.totalorder %s16, 0
      %p99 = por %p97, %p98
      %p100 = scmp.ne.s32.totalorder %s92, %s94
      %p101 = scmp.eq.s32.totalorder %s21, 1
      %p102 = por %p100, %p101
      %p103 = scmp.ne.s32.totalorder %s94, %s95
      %p104 = scmp.eq.s32.totalorder %s21, 0
      %p105 = por %p103, %p104
      %p106 = scmp.ne.s32.totalorder %s94, %s95
      %p107 = scmp.eq.s32.totalorder %s22, 1
      %p108 = por %p106, %p107
      %p110 = scmp.ne.s32.totalorder %s95, %s109
      %p111 = scmp.eq.s32.totalorder %s22, 0
      %p112 = por %p110, %p111
      %s114 = sadd.s32 %s113, 1
      %p117 = scmp.eq.s32.totalorder %s16, 1
      %p118 = scmp.ne.s32.totalorder %s113, %s115
      %p119 = scmp.eq.s32.totalorder %s16, 0
      %p120 = por %p118, %p119
      %p121 = scmp.ne.s32.totalorder %s113, %s115
      %p122 = scmp.eq.s32.totalorder %s21, 1
      %p123 = por %p121, %p122
      %p124 = scmp.ne.s32.totalorder %s115, %s116
      %p125 = scmp.eq.s32.totalorder %s21, 0
      %p126 = por %p124, %p125
      %p127 = scmp.ne.s32.totalorder %s115, %s116
      %p128 = scmp.eq.s32.totalorder %s22, 1
      %p129 = por %p127, %p128
      %p131 = scmp.ne.s32.totalorder %s116, %s130
      %p132 = scmp.eq.s32.totalorder %s22, 0
      %p133 = por %p131, %p132
      %s135 = sadd.s32 %s134, 1
      %p138 = scmp.eq.s32.totalorder %s16, 1
      %p139 = scmp.ne.s32.totalorder %s134, %s136
      %p140 = scmp.eq.s32.totalorder %s16, 0
      %p141 = por %p139, %p140
      %p142 = scmp.ne.s32.totalorder %s134, %s136
      %p143 = scmp.eq.s32.totalorder %s21, 1
      %p144 = por %p142, %p143
      %p145 = scmp.ne.s32.totalorder %s136, %s137
      %p146 = scmp.eq.s32.totalorder %s21, 0
      %p147 = por %p145, %p146
      %p148 = scmp.ne.s32.totalorder %s136, %s137
      %p149 = scmp.eq.s32.totalorder %s22, 1
      %p150 = por %p148, %p149
      %p152 = scmp.ne.s32.totalorder %s137, %s151
      %p153 = scmp.eq.s32.totalorder %s22, 0
      %p154 = por %p152, %p153
      %s156 = sadd.s32 %s155, 1
      %p159 = scmp.eq.s32.totalorder %s16, 1
      %p160 = scmp.ne.s32.totalorder %s155, %s157
      %p161 = scmp.eq.s32.totalorder %s16, 0
      %p162 = por %p160, %p161
      %p163 = scmp.ne.s32.totalorder %s155, %s157
      %p164 = scmp.eq.s32.totalorder %s21, 1
      %p165 = por %p163, %p164
      %p166 = scmp.ne.s32.totalorder %s157, %s158
      %p167 = scmp.eq.s32.totalorder %s21, 0
      %p168 = por %p166, %p167
      %p169 = scmp.ne.s32.totalorder %s157, %s158
      %p170 = scmp.eq.s32.totalorder %s22, 1
      %p171 = por %p169, %p170
      %p173 = scmp.ne.s32.totalorder %s158, %s172
      %p174 = scmp.eq.s32.totalorder %s22, 0
      %p175 = por %p173, %p174
      %s176 = ssub.s32 %s16, %s23
      %p177 = scmp.eq.s32.totalorder %s176, 0
      %s179 = sadd.s32 %s178, 1
      %s180 = scalar_select %p177, %s178, %s179
      %p183 = pneg %p177
      %p184 = scmp.eq.s32.totalorder %s16, 1
      %p185 = por %p183, %p184
      %p186 = scmp.ne.s32.totalorder %s178, %s181
      %p187 = scmp.eq.s32.totalorder %s16, 0
      %p188 = por %p186, %p187
      %p189 = scmp.ne.s32.totalorder %s178, %s181
      %p190 = scmp.eq.s32.totalorder %s21, 1
      %p191 = por %p189, %p190
      %p192 = scmp.ne.s32.totalorder %s181, %s182
      %p193 = scmp.eq.s32.totalorder %s21, 0
      %p194 = por %p192, %p193
      %p195 = scmp.ne.s32.totalorder %s181, %s182
      %p196 = scmp.eq.s32.totalorder %s22, 1
      %p197 = por %p195, %p196
      %p199 = scmp.ne.s32.totalorder %s182, %s198
      %p200 = scmp.eq.s32.totalorder %s22, 0
      %p201 = por %p199, %p200
      %p202 = scmp.le.s32.totalorder 1, %s16
      %p203 = scmp.lt.s32.totalorder %s16, 3
      %p204 = pnand %p202, %p203
      %p205 = pneg %p204
      // Predicated region
      $region9: #{tpu_custom_call.1} parent=5 // pred_check
        _
      $region10: #{tpu_custom_call.1} parent=5 // pred_check_branch
        %207 = sbr.rel (%p204) target = $region12
      $region11: #{tpu_custom_call.1} parent=5 // pred_region
        %s208 = ssub.s32 %s16, 1
        // Predicated region
        $region13: #{tpu_custom_call.1} parent=11 // pred_check
          %p209 = pneg %p63
        $region14: #{tpu_custom_call.1} parent=11 // pred_check_branch
          %211 = sbr.rel (%p209) target = $region16
        $region15: #{tpu_custom_call.1} parent=11 // pred_region
          _
        $region16: #{tpu_custom_call.1} parent=11 // pred_fallthru
          _
        // Predicated region
        $region17: #{tpu_custom_call.1} parent=11 // pred_check
          %p212 = pneg %p84
        $region18: #{tpu_custom_call.1} parent=11 // pred_check_branch
          %214 = sbr.rel (%p212) target = $region20
        $region19: #{tpu_custom_call.1} parent=11 // pred_region
          _
        $region20: #{tpu_custom_call.1} parent=11 // pred_fallthru
          _
        // Predicated region
        $region21: #{tpu_custom_call.1} parent=11 // pred_check
          %p215 = pneg %p105
        $region22: #{tpu_custom_call.1} parent=11 // pred_check_branch
          %217 = sbr.rel (%p215) target = $region24
        $region23: #{tpu_custom_call.1} parent=11 // pred_region
          _
        $region24: #{tpu_custom_call.1} parent=11 // pred_fallthru
          _
        // Predicated region
        $region25: #{tpu_custom_call.1} parent=11 // pred_check
          %p218 = pneg %p126
        $region26: #{tpu_custom_call.1} parent=11 // pred_check_branch
          %220 = sbr.rel (%p218) target = $region28
        $region27: #{tpu_custom_call.1} parent=11 // pred_region
          _
        $region28: #{tpu_custom_call.1} parent=11 // pred_fallthru
          _
        // Predicated region
        $region29: #{tpu_custom_call.1} parent=11 // pred_check
          %p221 = pneg %p147
        $region30: #{tpu_custom_call.1} parent=11 // pred_check_branch
          %223 = sbr.rel (%p221) target = $region32
        $region31: #{tpu_custom_call.1} parent=11 // pred_region
          _
        $region32: #{tpu_custom_call.1} parent=11 // pred_fallthru
          _
        // Predicated region
        $region33: #{tpu_custom_call.1} parent=11 // pred_check
          %p224 = pneg %p168
        $region34: #{tpu_custom_call.1} parent=11 // pred_check_branch
          %226 = sbr.rel (%p224) target = $region36
        $region35: #{tpu_custom_call.1} parent=11 // pred_region
          _
        $region36: #{tpu_custom_call.1} parent=11 // pred_fallthru
          _
      $region12: #{tpu_custom_call.1} parent=5 // pred_fallthru
        _
      %p227 = scmp.lt.s32.totalorder %s16, 2
      // Predicated region
      $region37: #{tpu_custom_call.1} parent=5 // pred_check
        %p228 = pneg %p227
      $region38: #{tpu_custom_call.1} parent=5 // pred_check_branch
        %230 = sbr.rel (%p228) target = $region40
      $region39: #{tpu_custom_call.1} parent=5 // pred_region
        // Predicated region
        $region41: #{tpu_custom_call.1} parent=39 // pred_check
          %p231 = pneg %p36
        $region42: #{tpu_custom_call.1} parent=39 // pred_check_branch
          %233 = sbr.rel (%p231) target = $region44
        $region43: #{tpu_custom_call.1} parent=39 // pred_region
          %p234 = scmp.lt.s32.totalorder %s16, 1
          %s235 = scalar_select %p234, %s16, 1
          %s236 = smul.addr %s235, 32
          %s237 = smul.addr %s236, 8
          %s238 = scalar_lea.vmem %s0, %s237
        $region44: #{tpu_custom_call.1} parent=39 // pred_fallthru
          _
      $region40: #{tpu_custom_call.1} parent=5 // pred_fallthru
        _
      %p239 = scmp.le.s32.totalorder 1, %s16
      %p240 = scmp.lt.s32.totalorder %s16, 3
      %p241 = pnand %p239, %p240
      %p242 = pneg %p241
      // Predicated region
      $region45: #{tpu_custom_call.1} parent=5 // pred_check
        _
      $region46: #{tpu_custom_call.1} parent=5 // pred_check_branch
        %244 = sbr.rel (%p241) target = $region48
      $region47: #{tpu_custom_call.1} parent=5 // pred_region
        %s245 = ssub.s32 %s16, 1
        %p246 = scmp.lt.s32.totalorder %s21, 1
        %s247 = scalar_select %p246, %s21, 1
        %s248 = smul.addr %s247, 32
        %s249 = smul.addr %s248, 8
        %s250 = scalar_lea.vmem %s0, %s249
        %p251 = pneg %p42
        %p252 = pneg %p39
        %p253 = pneg %p63
        %p254 = pneg %p60
        %p255 = pneg %p84
        %p256 = pneg %p81
        %p257 = pneg %p105
        %p258 = pneg %p102
        %p259 = pneg %p126
        %p260 = pneg %p123
        %p261 = pneg %p147
        %p262 = pneg %p144
        %p263 = pneg %p168
        %p264 = pneg %p165
        %p265 = pneg %p194
        %p266 = pneg %p191
        %s267 = sand.u32 %s181, 1
        %s268 = scalar_lea.sflag [#allocation5], %s267
        %s269 = sand.u32 %s181, 1
        %s270 = scalar_lea.vmem [#allocation4], %s269
        %p271 = scmp.lt.s32.totalorder %s21, 1
        %s272 = scalar_select %p271, %s21, 1
        %s273 = smul.addr %s272, 32
        %s274 = smul.addr %s273, 8
        %s275 = scalar_lea.vmem %s0, %s274
        %vm276 = vcmask 31744
        %277 = vst.msk [vmem:[#allocation2] sm:$0xff] %vm276, 0.0
        %278 = vst.msk [vmem:[#allocation2 + $0x8] sm:$0xff] %vm276, 0.0
        %vm279 = vcmask 25600
        %280 = vst.msk [vmem:[#allocation2 + $0x10] sm:$0x3] %vm279, 0.0
        %281 = vst.msk [vmem:[#allocation2 + $0x18] sm:$0xff] %vm276, 0.0
        %282 = vst.msk [vmem:[#allocation2 + $0x20] sm:$0xff] %vm276, 0.0
        %283 = vst.msk [vmem:[#allocation2 + $0x28] sm:$0x3] %vm279, 0.0
        %284 = vst.msk [vmem:[#allocation2 + $0x30] sm:$0xff] %vm276, 0.0
        %285 = vst.msk [vmem:[#allocation2 + $0x38] sm:$0xff] %vm276, 0.0
        %286 = vst.msk [vmem:[#allocation2 + $0x40] sm:$0x3] %vm279, 0.0
        %287 = vst.msk [vmem:[#allocation2 + $0x48] sm:$0xff] %vm276, 0.0
        %288 = vst.msk [vmem:[#allocation2 + $0x50] sm:$0xff] %vm276, 0.0
        %289 = vst.msk [vmem:[#allocation2 + $0x58] sm:$0x3] %vm279, 0.0
        %290 = vst.msk [vmem:[#allocation2 + $0x60] sm:$0xff] %vm276, 0.0
        %291 = vst.msk [vmem:[#allocation2 + $0x68] sm:$0xff] %vm276, 0.0
        %292 = vst.msk [vmem:[#allocation2 + $0x70] sm:$0x3] %vm279, 0.0
        %293 = vst.msk [vmem:[#allocation2 + $0x78] sm:$0xff] %vm276, 0.0
        %294 = vst.msk [vmem:[#allocation2 + $0x80] sm:$0xff] %vm276, 0.0
        %295 = vst.msk [vmem:[#allocation2 + $0x88] sm:$0x3] %vm279, 0.0
        %296 = vst.msk [vmem:[#allocation2 + $0x90] sm:$0xff] %vm276, 0.0
        %297 = vst.msk [vmem:[#allocation2 + $0x98] sm:$0xff] %vm276, 0.0
        %298 = vst.msk [vmem:[#allocation2 + $0xa0] sm:$0x3] %vm279, 0.0
        %299 = vst.msk [vmem:[#allocation2 + $0xa8] sm:$0xff] %vm276, 0.0
        %300 = vst.msk [vmem:[#allocation2 + $0xb0] sm:$0xff] %vm276, 0.0
        %301 = vst.msk [vmem:[#allocation2 + $0xb8] sm:$0x3] %vm279, 0.0
        %302 = vst.msk [vmem:[#allocation2 + $0xc0] sm:$0xff] %vm276, 0.0
        %303 = vst.msk [vmem:[#allocation2 + $0xc8] sm:$0xff] %vm276, 0.0
        %304 = vst.msk [vmem:[#allocation2 + $0xd0] sm:$0x3] %vm279, 0.0
        %305 = vst.msk [vmem:[#allocation2 + $0xd8] sm:$0xff] %vm276, 0.0
        %306 = vst.msk [vmem:[#allocation2 + $0xe0] sm:$0xff] %vm276, 0.0
        %307 = vst.msk [vmem:[#allocation2 + $0xe8] sm:$0x3] %vm279, 0.0
        %308 = vst.msk [vmem:[#allocation2 + $0xf0] sm:$0xff] %vm276, 0.0
        %309 = vst.msk [vmem:[#allocation2 + $0xf8] sm:$0xff] %vm276, 0.0
        %310 = vst.msk [vmem:[#allocation2 + $0x100] sm:$0x3] %vm279, 0.0
        %311 = vst.msk [vmem:[#allocation2 + $0x108] sm:$0xff] %vm276, 0.0
        %312 = vst.msk [vmem:[#allocation2 + $0x110] sm:$0xff] %vm276, 0.0
        %313 = vst.msk [vmem:[#allocation2 + $0x118] sm:$0x3] %vm279, 0.0
        %314 = vst.msk [vmem:[#allocation2 + $0x120] sm:$0xff] %vm276, 0.0
        %315 = vst.msk [vmem:[#allocation2 + $0x128] sm:$0xff] %vm276, 0.0
        %316 = vst.msk [vmem:[#allocation2 + $0x130] sm:$0x3] %vm279, 0.0
        %317 = vst.msk [vmem:[#allocation2 + $0x138] sm:$0xff] %vm276, 0.0
        %318 = vst.msk [vmem:[#allocation2 + $0x140] sm:$0xff] %vm276, 0.0
        %319 = vst.msk [vmem:[#allocation2 + $0x148] sm:$0x3] %vm279, 0.0
        %320 = vst.msk [vmem:[#allocation2 + $0x150] sm:$0xff] %vm276, 0.0
        %321 = vst.msk [vmem:[#allocation2 + $0x158] sm:$0xff] %vm276, 0.0
        %322 = vst.msk [vmem:[#allocation2 + $0x160] sm:$0x3] %vm279, 0.0
        %323 = vst.msk [vmem:[#allocation2 + $0x168] sm:$0xff] %vm276, 0.0
        %324 = vst.msk [vmem:[#allocation2 + $0x170] sm:$0xff] %vm276, 0.0
        %325 = vst.msk [vmem:[#allocation2 + $0x178] sm:$0x3] %vm279, 0.0
        %326 = vst.msk [vmem:[#allocation2 + $0x180] sm:$0xff] %vm276, 0.0
        %327 = vst.msk [vmem:[#allocation2 + $0x188] sm:$0xff] %vm276, 0.0
        %328 = vst.msk [vmem:[#allocation2 + $0x190] sm:$0x3] %vm279, 0.0
        %329 = vst.msk [vmem:[#allocation2 + $0x198] sm:$0xff] %vm276, 0.0
        %330 = vst.msk [vmem:[#allocation2 + $0x1a0] sm:$0xff] %vm276, 0.0
        %331 = vst.msk [vmem:[#allocation2 + $0x1a8] sm:$0x3] %vm279, 0.0
        %vm332 = vcmask 64512
        %333 = vst.msk [vmem:[#allocation3] sm:$0xff] %vm332, 0.0
        %334 = vst.msk [vmem:[#allocation3 + $0x8] sm:$0xff] %vm332, 0.0
        %vm335 = vcmask 58368
        %336 = vst.msk [vmem:[#allocation3 + $0x10] sm:$0x3] %vm335, 0.0
        %337 = vst.msk [vmem:[#allocation3 + $0x18] sm:$0xff] %vm332, 0.0
        %338 = vst.msk [vmem:[#allocation3 + $0x20] sm:$0xff] %vm332, 0.0
        %339 = vst.msk [vmem:[#allocation3 + $0x28] sm:$0x3] %vm335, 0.0
        %340 = vst.msk [vmem:[#allocation3 + $0x30] sm:$0xff] %vm332, 0.0
        %341 = vst.msk [vmem:[#allocation3 + $0x38] sm:$0xff] %vm332, 0.0
        %342 = vst.msk [vmem:[#allocation3 + $0x40] sm:$0x3] %vm335, 0.0
        %343 = vst.msk [vmem:[#allocation3 + $0x48] sm:$0xff] %vm332, 0.0
        %344 = vst.msk [vmem:[#allocation3 + $0x50] sm:$0xff] %vm332, 0.0
        %345 = vst.msk [vmem:[#allocation3 + $0x58] sm:$0x3] %vm335, 0.0
        %346 = vst.msk [vmem:[#allocation3 + $0x60] sm:$0xff] %vm332, 0.0
        %347 = vst.msk [vmem:[#allocation3 + $0x68] sm:$0xff] %vm332, 0.0
        %348 = vst.msk [vmem:[#allocation3 + $0x70] sm:$0x3] %vm335, 0.0
        %349 = vst.msk [vmem:[#allocation3 + $0x78] sm:$0xff] %vm332, 0.0
        %350 = vst.msk [vmem:[#allocation3 + $0x80] sm:$0xff] %vm332, 0.0
        %351 = vst.msk [vmem:[#allocation3 + $0x88] sm:$0x3] %vm335, 0.0
        %352 = vst.msk [vmem:[#allocation3 + $0x90] sm:$0xff] %vm332, 0.0
        %353 = vst.msk [vmem:[#allocation3 + $0x98] sm:$0xff] %vm332, 0.0
        %354 = vst.msk [vmem:[#allocation3 + $0xa0] sm:$0x3] %vm335, 0.0
        %355 = vst.msk [vmem:[#allocation3 + $0xa8] sm:$0xff] %vm332, 0.0
        %356 = vst.msk [vmem:[#allocation3 + $0xb0] sm:$0xff] %vm332, 0.0
        %357 = vst.msk [vmem:[#allocation3 + $0xb8] sm:$0x3] %vm335, 0.0
        %358 = vst.msk [vmem:[#allocation3 + $0xc0] sm:$0xff] %vm332, 0.0
        %359 = vst.msk [vmem:[#allocation3 + $0xc8] sm:$0xff] %vm332, 0.0
        %360 = vst.msk [vmem:[#allocation3 + $0xd0] sm:$0x3] %vm335, 0.0
        %361 = vst.msk [vmem:[#allocation3 + $0xd8] sm:$0xff] %vm332, 0.0
        %362 = vst.msk [vmem:[#allocation3 + $0xe0] sm:$0xff] %vm332, 0.0
        %363 = vst.msk [vmem:[#allocation3 + $0xe8] sm:$0x3] %vm335, 0.0
        %364 = vst.msk [vmem:[#allocation3 + $0xf0] sm:$0xff] %vm332, 0.0
        %365 = vst.msk [vmem:[#allocation3 + $0xf8] sm:$0xff] %vm332, 0.0
        %366 = vst.msk [vmem:[#allocation3 + $0x100] sm:$0x3] %vm335, 0.0
        %367 = vst.msk [vmem:[#allocation3 + $0x108] sm:$0xff] %vm332, 0.0
        %368 = vst.msk [vmem:[#allocation3 + $0x110] sm:$0xff] %vm332, 0.0
        %369 = vst.msk [vmem:[#allocation3 + $0x118] sm:$0x3] %vm335, 0.0
        %370 = vst.msk [vmem:[#allocation3 + $0x120] sm:$0xff] %vm332, 0.0
        %371 = vst.msk [vmem:[#allocation3 + $0x128] sm:$0xff] %vm332, 0.0
        %372 = vst.msk [vmem:[#allocation3 + $0x130] sm:$0x3] %vm335, 0.0
        %373 = vst.msk [vmem:[#allocation3 + $0x138] sm:$0xff] %vm332, 0.0
        %374 = vst.msk [vmem:[#allocation3 + $0x140] sm:$0xff] %vm332, 0.0
        %375 = vst.msk [vmem:[#allocation3 + $0x148] sm:$0x3] %vm335, 0.0
        %376 = vst.msk [vmem:[#allocation3 + $0x150] sm:$0xff] %vm332, 0.0
        %377 = vst.msk [vmem:[#allocation3 + $0x158] sm:$0xff] %vm332, 0.0
        %378 = vst.msk [vmem:[#allocation3 + $0x160] sm:$0x3] %vm335, 0.0
        %379 = vst.msk [vmem:[#allocation3 + $0x168] sm:$0xff] %vm332, 0.0
        %380 = vst.msk [vmem:[#allocation3 + $0x170] sm:$0xff] %vm332, 0.0
        %381 = vst.msk [vmem:[#allocation3 + $0x178] sm:$0x3] %vm335, 0.0
        %382 = vst.msk [vmem:[#allocation3 + $0x180] sm:$0xff] %vm332, 0.0
        %383 = vst.msk [vmem:[#allocation3 + $0x188] sm:$0xff] %vm332, 0.0
        %384 = vst.msk [vmem:[#allocation3 + $0x190] sm:$0x3] %vm335, 0.0
        %385 = vst.msk [vmem:[#allocation3 + $0x198] sm:$0xff] %vm332, 0.0
        %386 = vst.msk [vmem:[#allocation3 + $0x1a0] sm:$0xff] %vm332, 0.0
        %387 = vst.msk [vmem:[#allocation3 + $0x1a8] sm:$0x3] %vm335, 0.0
        %v388 = vld [vmem:[%s275] sm:$0xff]
        %v389 = vld [vmem:[%s275 + $0x8] sm:$0xff]
        %v390 = vld [vmem:[%s275 + $0x10] sm:$0xff]
        %v391 = vld [vmem:[%s275 + $0x18] sm:$0xff]
        %v392 = vld [vmem:[%s275 + $0x20] sm:$0xff]
        %v393 = vld [vmem:[%s275 + $0x28] sm:$0xff]
        %v394 = vld [vmem:[%s275 + $0x30] sm:$0xff]
        %v395 = vld [vmem:[%s275 + $0x38] sm:$0xff]
        %v396 = vld [vmem:[%s275 + $0x40] sm:$0xff]
        %v397 = vld [vmem:[%s275 + $0x48] sm:$0xff]
        %v398 = vld [vmem:[%s275 + $0x50] sm:$0xff]
        %v399 = vld [vmem:[%s275 + $0x58] sm:$0xff]
        %v400 = vld [vmem:[%s275 + $0x60] sm:$0xff]
        %v401 = vld [vmem:[%s275 + $0x68] sm:$0xff]
        %v402 = vld [vmem:[%s275 + $0x70] sm:$0xff]
        %v403 = vld [vmem:[%s275 + $0x78] sm:$0xff]
        %v404 = vld [vmem:[%s275 + $0x80] sm:$0xff]
        %v405 = vld [vmem:[%s275 + $0x88] sm:$0xff]
        %v406 = vld [vmem:[%s275 + $0x90] sm:$0xff]
        %v407 = vld [vmem:[%s275 + $0x98] sm:$0xff]
        %v408 = vld [vmem:[%s275 + $0xa0] sm:$0xff]
        %v409 = vld [vmem:[%s275 + $0xa8] sm:$0xff]
        %v410 = vld [vmem:[%s275 + $0xb0] sm:$0xff]
        %v411 = vld [vmem:[%s275 + $0xb8] sm:$0xff]
        %v412 = vld [vmem:[%s275 + $0xc0] sm:$0xff]
        %v413 = vld [vmem:[%s275 + $0xc8] sm:$0xff]
        %v414 = vld [vmem:[%s275 + $0xd0] sm:$0xff]
        %v415 = vld [vmem:[%s275 + $0xd8] sm:$0xff]
        %v416 = vld [vmem:[%s275 + $0xe0] sm:$0xff]
        %v417 = vld [vmem:[%s275 + $0xe8] sm:$0xff]
        %v418 = vld [vmem:[%s275 + $0xf0] sm:$0xff]
        %v419 = vld [vmem:[%s275 + $0xf8] sm:$0xff]
        %s420 = scalar_lea.vmem [#allocation2], 24
        %421 = vst.msk [vmem:[%s420 + $0x1] sm:$0xff] %vm276, %v388
        %422 = vst.msk [vmem:[%s420 + $0x9] sm:$0xff] %vm276, %v389
        %423 = vst.msk [vmem:[%s420 + $0x19] sm:$0xff] %vm276, %v390
        %424 = vst.msk [vmem:[%s420 + $0x21] sm:$0xff] %vm276, %v391
        %425 = vst.msk [vmem:[%s420 + $0x31] sm:$0xff] %vm276, %v392
        %426 = vst.msk [vmem:[%s420 + $0x39] sm:$0xff] %vm276, %v393
        %427 = vst.msk [vmem:[%s420 + $0x49] sm:$0xff] %vm276, %v394
        %428 = vst.msk [vmem:[%s420 + $0x51] sm:$0xff] %vm276, %v395
        %429 = vst.msk [vmem:[%s420 + $0x61] sm:$0xff] %vm276, %v396
        %430 = vst.msk [vmem:[%s420 + $0x69] sm:$0xff] %vm276, %v397
        %431 = vst.msk [vmem:[%s420 + $0x79] sm:$0xff] %vm276, %v398
        %432 = vst.msk [vmem:[%s420 + $0x81] sm:$0xff] %vm276, %v399
        %433 = vst.msk [vmem:[%s420 + $0x91] sm:$0xff] %vm276, %v400
        %434 = vst.msk [vmem:[%s420 + $0x99] sm:$0xff] %vm276, %v401
        %435 = vst.msk [vmem:[%s420 + $0xa9] sm:$0xff] %vm276, %v402
        %436 = vst.msk [vmem:[%s420 + $0xb1] sm:$0xff] %vm276, %v403
        %437 = vst.msk [vmem:[%s420 + $0xc1] sm:$0xff] %vm276, %v404
        %438 = vst.msk [vmem:[%s420 + $0xc9] sm:$0xff] %vm276, %v405
        %439 = vst.msk [vmem:[%s420 + $0xd9] sm:$0xff] %vm276, %v406
        %440 = vst.msk [vmem:[%s420 + $0xe1] sm:$0xff] %vm276, %v407
        %441 = vst.msk [vmem:[%s420 + $0xf1] sm:$0xff] %vm276, %v408
        %442 = vst.msk [vmem:[%s420 + $0xf9] sm:$0xff] %vm276, %v409
        %443 = vst.msk [vmem:[%s420 + $0x109] sm:$0xff] %vm276, %v410
        %444 = vst.msk [vmem:[%s420 + $0x111] sm:$0xff] %vm276, %v411
        %445 = vst.msk [vmem:[%s420 + $0x121] sm:$0xff] %vm276, %v412
        %446 = vst.msk [vmem:[%s420 + $0x129] sm:$0xff] %vm276, %v413
        %447 = vst.msk [vmem:[%s420 + $0x139] sm:$0xff] %vm276, %v414
        %448 = vst.msk [vmem:[%s420 + $0x141] sm:$0xff] %vm276, %v415
        %449 = vst.msk [vmem:[%s420 + $0x151] sm:$0xff] %vm276, %v416
        %450 = vst.msk [vmem:[%s420 + $0x159] sm:$0xff] %vm276, %v417
        %451 = vst.msk [vmem:[%s420 + $0x169] sm:$0xff] %vm276, %v418
        %452 = vst.msk [vmem:[%s420 + $0x171] sm:$0xff] %vm276, %v419
        %v453 = vld [vmem:[#allocation2] sm:$0xff]
        %v454 = vld [vmem:[#allocation2 + $0x8] sm:$0xff]
        %v455 = vld [vmem:[#allocation2 + $0x18] sm:$0xff]
        %v456 = vld [vmem:[#allocation2 + $0x20] sm:$0xff]
        %v457 = vld [vmem:[#allocation2 + $0x30] sm:$0xff]
        %v458 = vld [vmem:[#allocation2 + $0x38] sm:$0xff]
        %v459 = vld [vmem:[#allocation2 + $0x48] sm:$0xff]
        %v460 = vld [vmem:[#allocation2 + $0x50] sm:$0xff]
        %v461 = vld [vmem:[#allocation2 + $0x60] sm:$0xff]
        %v462 = vld [vmem:[#allocation2 + $0x68] sm:$0xff]
        %v463 = vld [vmem:[#allocation2 + $0x78] sm:$0xff]
        %v464 = vld [vmem:[#allocation2 + $0x80] sm:$0xff]
        %v465 = vld [vmem:[#allocation2 + $0x90] sm:$0xff]
        %v466 = vld [vmem:[#allocation2 + $0x98] sm:$0xff]
        %v467 = vld [vmem:[#allocation2 + $0xa8] sm:$0xff]
        %v468 = vld [vmem:[#allocation2 + $0xb0] sm:$0xff]
        %v469 = vld [vmem:[#allocation2 + $0xc0] sm:$0xff]
        %v470 = vld [vmem:[#allocation2 + $0xc8] sm:$0xff]
        %v471 = vld [vmem:[#allocation2 + $0xd8] sm:$0xff]
        %v472 = vld [vmem:[#allocation2 + $0xe0] sm:$0xff]
        %v473 = vld [vmem:[#allocation2 + $0xf0] sm:$0xff]
        %v474 = vld [vmem:[#allocation2 + $0xf8] sm:$0xff]
        %v475 = vld [vmem:[#allocation2 + $0x108] sm:$0xff]
        %v476 = vld [vmem:[#allocation2 + $0x110] sm:$0xff]
        %v477 = vld [vmem:[#allocation2 + $0x120] sm:$0xff]
        %v478 = vld [vmem:[#allocation2 + $0x128] sm:$0xff]
        %v479 = vld [vmem:[#allocation2 + $0x138] sm:$0xff]
        %v480 = vld [vmem:[#allocation2 + $0x140] sm:$0xff]
        %v481 = vld [vmem:[#allocation2 + $0x150] sm:$0xff]
        %v482 = vld [vmem:[#allocation2 + $0x158] sm:$0xff]
        %v483 = vld [vmem:[#allocation2 + $0x168] sm:$0xff]
        %v484 = vld [vmem:[#allocation2 + $0x170] sm:$0xff]
        %v485 = vld [vmem:[#allocation2 + $0x1] sm:$0xff]
        %v486 = vld [vmem:[#allocation2 + $0x9] sm:$0xff]
        %v487 = vld [vmem:[#allocation2 + $0x19] sm:$0xff]
        %v488 = vld [vmem:[#allocation2 + $0x21] sm:$0xff]
        %v489 = vld [vmem:[#allocation2 + $0x31] sm:$0xff]
        %v490 = vld [vmem:[#allocation2 + $0x39] sm:$0xff]
        %v491 = vld [vmem:[#allocation2 + $0x49] sm:$0xff]
        %v492 = vld [vmem:[#allocation2 + $0x51] sm:$0xff]
        %v493 = vld [vmem:[#allocation2 + $0x61] sm:$0xff]
        %v494 = vld [vmem:[#allocation2 + $0x69] sm:$0xff]
        %v495 = vld [vmem:[#allocation2 + $0x79] sm:$0xff]
        %v496 = vld [vmem:[#allocation2 + $0x81] sm:$0xff]
        %v497 = vld [vmem:[#allocation2 + $0x91] sm:$0xff]
        %v498 = vld [vmem:[#allocation2 + $0x99] sm:$0xff]
        %v499 = vld [vmem:[#allocation2 + $0xa9] sm:$0xff]
        %v500 = vld [vmem:[#allocation2 + $0xb1] sm:$0xff]
        %v501 = vld [vmem:[#allocation2 + $0xc1] sm:$0xff]
        %v502 = vld [vmem:[#allocation2 + $0xc9] sm:$0xff]
        %v503 = vld [vmem:[#allocation2 + $0xd9] sm:$0xff]
        %v504 = vld [vmem:[#allocation2 + $0xe1] sm:$0xff]
        %v505 = vld [vmem:[#allocation2 + $0xf1] sm:$0xff]
        %v506 = vld [vmem:[#allocation2 + $0xf9] sm:$0xff]
        %v507 = vld [vmem:[#allocation2 + $0x109] sm:$0xff]
        %v508 = vld [vmem:[#allocation2 + $0x111] sm:$0xff]
        %v509 = vld [vmem:[#allocation2 + $0x121] sm:$0xff]
        %v510 = vld [vmem:[#allocation2 + $0x129] sm:$0xff]
        %v511 = vld [vmem:[#allocation2 + $0x139] sm:$0xff]
        %v512 = vld [vmem:[#allocation2 + $0x141] sm:$0xff]
        %v513 = vld [vmem:[#allocation2 + $0x151] sm:$0xff]
        %v514 = vld [vmem:[#allocation2 + $0x159] sm:$0xff]
        %v515 = vld [vmem:[#allocation2 + $0x169] sm:$0xff]
        %v516 = vld [vmem:[#allocation2 + $0x171] sm:$0xff]
        %v517 = vld [vmem:[#allocation2 + $0x2] sm:$0xff]
        %v518 = vld [vmem:[#allocation2 + $0xa] sm:$0xff]
        %v519 = vld [vmem:[#allocation2 + $0x1a] sm:$0xff]
        %v520 = vld [vmem:[#allocation2 + $0x22] sm:$0xff]
        %v521 = vld [vmem:[#allocation2 + $0x32] sm:$0xff]
        %v522 = vld [vmem:[#allocation2 + $0x3a] sm:$0xff]
        %v523 = vld [vmem:[#allocation2 + $0x4a] sm:$0xff]
        %v524 = vld [vmem:[#allocation2 + $0x52] sm:$0xff]
        %v525 = vld [vmem:[#allocation2 + $0x62] sm:$0xff]
        %v526 = vld [vmem:[#allocation2 + $0x6a] sm:$0xff]
        %v527 = vld [vmem:[#allocation2 + $0x7a] sm:$0xff]
        %v528 = vld [vmem:[#allocation2 + $0x82] sm:$0xff]
        %v529 = vld [vmem:[#allocation2 + $0x92] sm:$0xff]
        %v530 = vld [vmem:[#allocation2 + $0x9a] sm:$0xff]
        %v531 = vld [vmem:[#allocation2 + $0xaa] sm:$0xff]
        %v532 = vld [vmem:[#allocation2 + $0xb2] sm:$0xff]
        %v533 = vld [vmem:[#allocation2 + $0xc2] sm:$0xff]
        %v534 = vld [vmem:[#allocation2 + $0xca] sm:$0xff]
        %v535 = vld [vmem:[#allocation2 + $0xda] sm:$0xff]
        %v536 = vld [vmem:[#allocation2 + $0xe2] sm:$0xff]
        %v537 = vld [vmem:[#allocation2 + $0xf2] sm:$0xff]
        %v538 = vld [vmem:[#allocation2 + $0xfa] sm:$0xff]
        %v539 = vld [vmem:[#allocation2 + $0x10a] sm:$0xff]
        %v540 = vld [vmem:[#allocation2 + $0x112] sm:$0xff]
        %v541 = vld [vmem:[#allocation2 + $0x122] sm:$0xff]
        %v542 = vld [vmem:[#allocation2 + $0x12a] sm:$0xff]
        %v543 = vld [vmem:[#allocation2 + $0x13a] sm:$0xff]
        %v544 = vld [vmem:[#allocation2 + $0x142] sm:$0xff]
        %v545 = vld [vmem:[#allocation2 + $0x152] sm:$0xff]
        %v546 = vld [vmem:[#allocation2 + $0x15a] sm:$0xff]
        %v547 = vld [vmem:[#allocation2 + $0x16a] sm:$0xff]
        %v548 = vld [vmem:[#allocation2 + $0x172] sm:$0xff]
        %v549 = vld [vmem:[%s420] sm:$0xff]
        %v550 = vld [vmem:[%s420 + $0x8] sm:$0xff]
        %v551 = vld [vmem:[%s420 + $0x18] sm:$0xff]
        %v552 = vld [vmem:[%s420 + $0x20] sm:$0xff]
        %v553 = vld [vmem:[%s420 + $0x30] sm:$0xff]
        %v554 = vld [vmem:[%s420 + $0x38] sm:$0xff]
        %v555 = vld [vmem:[%s420 + $0x48] sm:$0xff]
        %v556 = vld [vmem:[%s420 + $0x50] sm:$0xff]
        %v557 = vld [vmem:[%s420 + $0x60] sm:$0xff]
        %v558 = vld [vmem:[%s420 + $0x68] sm:$0xff]
        %v559 = vld [vmem:[%s420 + $0x78] sm:$0xff]
        %v560 = vld [vmem:[%s420 + $0x80] sm:$0xff]
        %v561 = vld [vmem:[%s420 + $0x90] sm:$0xff]
        %v562 = vld [vmem:[%s420 + $0x98] sm:$0xff]
        %v563 = vld [vmem:[%s420 + $0xa8] sm:$0xff]
        %v564 = vld [vmem:[%s420 + $0xb0] sm:$0xff]
        %v565 = vld [vmem:[%s420 + $0xc0] sm:$0xff]
        %v566 = vld [vmem:[%s420 + $0xc8] sm:$0xff]
        %v567 = vld [vmem:[%s420 + $0xd8] sm:$0xff]
        %v568 = vld [vmem:[%s420 + $0xe0] sm:$0xff]
        %v569 = vld [vmem:[%s420 + $0xf0] sm:$0xff]
        %v570 = vld [vmem:[%s420 + $0xf8] sm:$0xff]
        %v571 = vld [vmem:[%s420 + $0x108] sm:$0xff]
        %v572 = vld [vmem:[%s420 + $0x110] sm:$0xff]
        %v573 = vld [vmem:[%s420 + $0x120] sm:$0xff]
        %v574 = vld [vmem:[%s420 + $0x128] sm:$0xff]
        %v575 = vld [vmem:[%s420 + $0x138] sm:$0xff]
        %v576 = vld [vmem:[%s420 + $0x140] sm:$0xff]
        %v577 = vld [vmem:[%s420 + $0x150] sm:$0xff]
        %v578 = vld [vmem:[%s420 + $0x158] sm:$0xff]
        %v579 = vld [vmem:[%s420 + $0x168] sm:$0xff]
        %v580 = vld [vmem:[%s420 + $0x170] sm:$0xff]
        %v581 = vld [vmem:[%s420 + $0x1] sm:$0xff]
        %v582 = vld [vmem:[%s420 + $0x9] sm:$0xff]
        %v583 = vld [vmem:[%s420 + $0x19] sm:$0xff]
        %v584 = vld [vmem:[%s420 + $0x21] sm:$0xff]
        %v585 = vld [vmem:[%s420 + $0x31] sm:$0xff]
        %v586 = vld [vmem:[%s420 + $0x39] sm:$0xff]
        %v587 = vld [vmem:[%s420 + $0x49] sm:$0xff]
        %v588 = vld [vmem:[%s420 + $0x51] sm:$0xff]
        %v589 = vld [vmem:[%s420 + $0x61] sm:$0xff]
        %v590 = vld [vmem:[%s420 + $0x69] sm:$0xff]
        %v591 = vld [vmem:[%s420 + $0x79] sm:$0xff]
        %v592 = vld [vmem:[%s420 + $0x81] sm:$0xff]
        %v593 = vld [vmem:[%s420 + $0x91] sm:$0xff]
        %v594 = vld [vmem:[%s420 + $0x99] sm:$0xff]
        %v595 = vld [vmem:[%s420 + $0xa9] sm:$0xff]
        %v596 = vld [vmem:[%s420 + $0xb1] sm:$0xff]
        %v597 = vld [vmem:[%s420 + $0xc1] sm:$0xff]
        %v598 = vld [vmem:[%s420 + $0xc9] sm:$0xff]
        %v599 = vld [vmem:[%s420 + $0xd9] sm:$0xff]
        %v600 = vld [vmem:[%s420 + $0xe1] sm:$0xff]
        %v601 = vld [vmem:[%s420 + $0xf1] sm:$0xff]
        %v602 = vld [vmem:[%s420 + $0xf9] sm:$0xff]
        %v603 = vld [vmem:[%s420 + $0x109] sm:$0xff]
        %v604 = vld [vmem:[%s420 + $0x111] sm:$0xff]
        %v605 = vld [vmem:[%s420 + $0x121] sm:$0xff]
        %v606 = vld [vmem:[%s420 + $0x129] sm:$0xff]
        %v607 = vld [vmem:[%s420 + $0x139] sm:$0xff]
        %v608 = vld [vmem:[%s420 + $0x141] sm:$0xff]
        %v609 = vld [vmem:[%s420 + $0x151] sm:$0xff]
        %v610 = vld [vmem:[%s420 + $0x159] sm:$0xff]
        %v611 = vld [vmem:[%s420 + $0x169] sm:$0xff]
        %v612 = vld [vmem:[%s420 + $0x171] sm:$0xff]
        %v613 = vld [vmem:[%s420 + $0x2] sm:$0xff]
        %v614 = vld [vmem:[%s420 + $0xa] sm:$0xff]
        %v615 = vld [vmem:[%s420 + $0x1a] sm:$0xff]
        %v616 = vld [vmem:[%s420 + $0x22] sm:$0xff]
        %v617 = vld [vmem:[%s420 + $0x32] sm:$0xff]
        %v618 = vld [vmem:[%s420 + $0x3a] sm:$0xff]
        %v619 = vld [vmem:[%s420 + $0x4a] sm:$0xff]
        %v620 = vld [vmem:[%s420 + $0x52] sm:$0xff]
        %v621 = vld [vmem:[%s420 + $0x62] sm:$0xff]
        %v622 = vld [vmem:[%s420 + $0x6a] sm:$0xff]
        %v623 = vld [vmem:[%s420 + $0x7a] sm:$0xff]
        %v624 = vld [vmem:[%s420 + $0x82] sm:$0xff]
        %v625 = vld [vmem:[%s420 + $0x92] sm:$0xff]
        %v626 = vld [vmem:[%s420 + $0x9a] sm:$0xff]
        %v627 = vld [vmem:[%s420 + $0xaa] sm:$0xff]
        %v628 = vld [vmem:[%s420 + $0xb2] sm:$0xff]
        %v629 = vld [vmem:[%s420 + $0xc2] sm:$0xff]
        %v630 = vld [vmem:[%s420 + $0xca] sm:$0xff]
        %v631 = vld [vmem:[%s420 + $0xda] sm:$0xff]
        %v632 = vld [vmem:[%s420 + $0xe2] sm:$0xff]
        %v633 = vld [vmem:[%s420 + $0xf2] sm:$0xff]
        %v634 = vld [vmem:[%s420 + $0xfa] sm:$0xff]
        %v635 = vld [vmem:[%s420 + $0x10a] sm:$0xff]
        %v636 = vld [vmem:[%s420 + $0x112] sm:$0xff]
        %v637 = vld [vmem:[%s420 + $0x122] sm:$0xff]
        %v638 = vld [vmem:[%s420 + $0x12a] sm:$0xff]
        %v639 = vld [vmem:[%s420 + $0x13a] sm:$0xff]
        %v640 = vld [vmem:[%s420 + $0x142] sm:$0xff]
        %v641 = vld [vmem:[%s420 + $0x152] sm:$0xff]
        %v642 = vld [vmem:[%s420 + $0x15a] sm:$0xff]
        %v643 = vld [vmem:[%s420 + $0x16a] sm:$0xff]
        %v644 = vld [vmem:[%s420 + $0x172] sm:$0xff]
        %s645 = scalar_lea.vmem [#allocation2], 48
        %v646 = vld [vmem:[%s645] sm:$0xff]
        %v647 = vld [vmem:[%s645 + $0x8] sm:$0xff]
        %v648 = vld [vmem:[%s645 + $0x18] sm:$0xff]
        %v649 = vld [vmem:[%s645 + $0x20] sm:$0xff]
        %v650 = vld [vmem:[%s645 + $0x30] sm:$0xff]
        %v651 = vld [vmem:[%s645 + $0x38] sm:$0xff]
        %v652 = vld [vmem:[%s645 + $0x48] sm:$0xff]
        %v653 = vld [vmem:[%s645 + $0x50] sm:$0xff]
        %v654 = vld [vmem:[%s645 + $0x60] sm:$0xff]
        %v655 = vld [vmem:[%s645 + $0x68] sm:$0xff]
        %v656 = vld [vmem:[%s645 + $0x78] sm:$0xff]
        %v657 = vld [vmem:[%s645 + $0x80] sm:$0xff]
        %v658 = vld [vmem:[%s645 + $0x90] sm:$0xff]
        %v659 = vld [vmem:[%s645 + $0x98] sm:$0xff]
        %v660 = vld [vmem:[%s645 + $0xa8] sm:$0xff]
        %v661 = vld [vmem:[%s645 + $0xb0] sm:$0xff]
        %v662 = vld [vmem:[%s645 + $0xc0] sm:$0xff]
        %v663 = vld [vmem:[%s645 + $0xc8] sm:$0xff]
        %v664 = vld [vmem:[%s645 + $0xd8] sm:$0xff]
        %v665 = vld [vmem:[%s645 + $0xe0] sm:$0xff]
        %v666 = vld [vmem:[%s645 + $0xf0] sm:$0xff]
        %v667 = vld [vmem:[%s645 + $0xf8] sm:$0xff]
        %v668 = vld [vmem:[%s645 + $0x108] sm:$0xff]
        %v669 = vld [vmem:[%s645 + $0x110] sm:$0xff]
        %v670 = vld [vmem:[%s645 + $0x120] sm:$0xff]
        %v671 = vld [vmem:[%s645 + $0x128] sm:$0xff]
        %v672 = vld [vmem:[%s645 + $0x138] sm:$0xff]
        %v673 = vld [vmem:[%s645 + $0x140] sm:$0xff]
        %v674 = vld [vmem:[%s645 + $0x150] sm:$0xff]
        %v675 = vld [vmem:[%s645 + $0x158] sm:$0xff]
        %v676 = vld [vmem:[%s645 + $0x168] sm:$0xff]
        %v677 = vld [vmem:[%s645 + $0x170] sm:$0xff]
        %v678 = vld [vmem:[%s645 + $0x1] sm:$0xff]
        %v679 = vld [vmem:[%s645 + $0x9] sm:$0xff]
        %v680 = vld [vmem:[%s645 + $0x19] sm:$0xff]
        %v681 = vld [vmem:[%s645 + $0x21] sm:$0xff]
        %v682 = vld [vmem:[%s645 + $0x31] sm:$0xff]
        %v683 = vld [vmem:[%s645 + $0x39] sm:$0xff]
        %v684 = vld [vmem:[%s645 + $0x49] sm:$0xff]
        %v685 = vld [vmem:[%s645 + $0x51] sm:$0xff]
        %v686 = vld [vmem:[%s645 + $0x61] sm:$0xff]
        %v687 = vld [vmem:[%s645 + $0x69] sm:$0xff]
        %v688 = vld [vmem:[%s645 + $0x79] sm:$0xff]
        %v689 = vld [vmem:[%s645 + $0x81] sm:$0xff]
        %v690 = vld [vmem:[%s645 + $0x91] sm:$0xff]
        %v691 = vld [vmem:[%s645 + $0x99] sm:$0xff]
        %v692 = vld [vmem:[%s645 + $0xa9] sm:$0xff]
        %v693 = vld [vmem:[%s645 + $0xb1] sm:$0xff]
        %v694 = vld [vmem:[%s645 + $0xc1] sm:$0xff]
        %v695 = vld [vmem:[%s645 + $0xc9] sm:$0xff]
        %v696 = vld [vmem:[%s645 + $0xd9] sm:$0xff]
        %v697 = vld [vmem:[%s645 + $0xe1] sm:$0xff]
        %v698 = vld [vmem:[%s645 + $0xf1] sm:$0xff]
        %v699 = vld [vmem:[%s645 + $0xf9] sm:$0xff]
        %v700 = vld [vmem:[%s645 + $0x109] sm:$0xff]
        %v701 = vld [vmem:[%s645 + $0x111] sm:$0xff]
        %v702 = vld [vmem:[%s645 + $0x121] sm:$0xff]
        %v703 = vld [vmem:[%s645 + $0x129] sm:$0xff]
        %v704 = vld [vmem:[%s645 + $0x139] sm:$0xff]
        %v705 = vld [vmem:[%s645 + $0x141] sm:$0xff]
        %v706 = vld [vmem:[%s645 + $0x151] sm:$0xff]
        %v707 = vld [vmem:[%s645 + $0x159] sm:$0xff]
        %v708 = vld [vmem:[%s645 + $0x169] sm:$0xff]
        %v709 = vld [vmem:[%s645 + $0x171] sm:$0xff]
        %v710 = vld [vmem:[%s645 + $0x2] sm:$0xff]
        %v711 = vld [vmem:[%s645 + $0xa] sm:$0xff]
        %v712 = vld [vmem:[%s645 + $0x1a] sm:$0xff]
        %v713 = vld [vmem:[%s645 + $0x22] sm:$0xff]
        %v714 = vld [vmem:[%s645 + $0x32] sm:$0xff]
        %v715 = vld [vmem:[%s645 + $0x3a] sm:$0xff]
        %v716 = vld [vmem:[%s645 + $0x4a] sm:$0xff]
        %v717 = vld [vmem:[%s645 + $0x52] sm:$0xff]
        %v718 = vld [vmem:[%s645 + $0x62] sm:$0xff]
        %v719 = vld [vmem:[%s645 + $0x6a] sm:$0xff]
        %v720 = vld [vmem:[%s645 + $0x7a] sm:$0xff]
        %v721 = vld [vmem:[%s645 + $0x82] sm:$0xff]
        %v722 = vld [vmem:[%s645 + $0x92] sm:$0xff]
        %v723 = vld [vmem:[%s645 + $0x9a] sm:$0xff]
        %v724 = vld [vmem:[%s645 + $0xaa] sm:$0xff]
        %v725 = vld [vmem:[%s645 + $0xb2] sm:$0xff]
        %v726 = vld [vmem:[%s645 + $0xc2] sm:$0xff]
        %v727 = vld [vmem:[%s645 + $0xca] sm:$0xff]
        %v728 = vld [vmem:[%s645 + $0xda] sm:$0xff]
        %v729 = vld [vmem:[%s645 + $0xe2] sm:$0xff]
        %v730 = vld [vmem:[%s645 + $0xf2] sm:$0xff]
        %v731 = vld [vmem:[%s645 + $0xfa] sm:$0xff]
        %v732 = vld [vmem:[%s645 + $0x10a] sm:$0xff]
        %v733 = vld [vmem:[%s645 + $0x112] sm:$0xff]
        %v734 = vld [vmem:[%s645 + $0x122] sm:$0xff]
        %v735 = vld [vmem:[%s645 + $0x12a] sm:$0xff]
        %v736 = vld [vmem:[%s645 + $0x13a] sm:$0xff]
        %v737 = vld [vmem:[%s645 + $0x142] sm:$0xff]
        %v738 = vld [vmem:[%s645 + $0x152] sm:$0xff]
        %v739 = vld [vmem:[%s645 + $0x15a] sm:$0xff]
        %v740 = vld [vmem:[%s645 + $0x16a] sm:$0xff]
        %v741 = vld [vmem:[%s645 + $0x172] sm:$0xff]
        %774 = vrot.lane.b32.xlu0 %v485, 4
        %v775 = vpop.permute.xlu0 %774
        %776 = vrot.lane.b32.xlu0 %v486, 4
        %v777 = vpop.permute.xlu0 %776
        %778 = vrot.lane.b32.xlu0 %v487, 4
        %v779 = vpop.permute.xlu0 %778
        %780 = vrot.lane.b32.xlu0 %v488, 4
        %v781 = vpop.permute.xlu0 %780
        %782 = vrot.lane.b32.xlu0 %v489, 4
        %v783 = vpop.permute.xlu0 %782
        %784 = vrot.lane.b32.xlu0 %v490, 4
        %v785 = vpop.permute.xlu0 %784
        %786 = vrot.lane.b32.xlu0 %v491, 4
        %v787 = vpop.permute.xlu0 %786
        %788 = vrot.lane.b32.xlu0 %v492, 4
        %v789 = vpop.permute.xlu0 %788
        %790 = vrot.lane.b32.xlu0 %v493, 4
        %v791 = vpop.permute.xlu0 %790
        %792 = vrot.lane.b32.xlu0 %v494, 4
        %v793 = vpop.permute.xlu0 %792
        %794 = vrot.lane.b32.xlu0 %v495, 4
        %v795 = vpop.permute.xlu0 %794
        %796 = vrot.lane.b32.xlu0 %v496, 4
        %v797 = vpop.permute.xlu0 %796
        %798 = vrot.lane.b32.xlu0 %v497, 4
        %v799 = vpop.permute.xlu0 %798
        %800 = vrot.lane.b32.xlu0 %v498, 4
        %v801 = vpop.permute.xlu0 %800
        %802 = vrot.lane.b32.xlu0 %v499, 4
        %v803 = vpop.permute.xlu0 %802
        %804 = vrot.lane.b32.xlu0 %v500, 4
        %v805 = vpop.permute.xlu0 %804
        %806 = vrot.lane.b32.xlu0 %v501, 4
        %v807 = vpop.permute.xlu0 %806
        %808 = vrot.lane.b32.xlu0 %v502, 4
        %v809 = vpop.permute.xlu0 %808
        %810 = vrot.lane.b32.xlu0 %v503, 4
        %v811 = vpop.permute.xlu0 %810
        %812 = vrot.lane.b32.xlu0 %v504, 4
        %v813 = vpop.permute.xlu0 %812
        %814 = vrot.lane.b32.xlu0 %v505, 4
        %v815 = vpop.permute.xlu0 %814
        %816 = vrot.lane.b32.xlu0 %v506, 4
        %v817 = vpop.permute.xlu0 %816
        %818 = vrot.lane.b32.xlu0 %v507, 4
        %v819 = vpop.permute.xlu0 %818
        %820 = vrot.lane.b32.xlu0 %v508, 4
        %v821 = vpop.permute.xlu0 %820
        %822 = vrot.lane.b32.xlu0 %v509, 4
        %v823 = vpop.permute.xlu0 %822
        %824 = vrot.lane.b32.xlu0 %v510, 4
        %v825 = vpop.permute.xlu0 %824
        %826 = vrot.lane.b32.xlu0 %v511, 4
        %v827 = vpop.permute.xlu0 %826
        %828 = vrot.lane.b32.xlu0 %v512, 4
        %v829 = vpop.permute.xlu0 %828
        %830 = vrot.lane.b32.xlu0 %v513, 4
        %v831 = vpop.permute.xlu0 %830
        %832 = vrot.lane.b32.xlu0 %v514, 4
        %v833 = vpop.permute.xlu0 %832
        %834 = vrot.lane.b32.xlu0 %v515, 4
        %v835 = vpop.permute.xlu0 %834
        %836 = vrot.lane.b32.xlu0 %v516, 4
        %v837 = vpop.permute.xlu0 %836
        %902 = vrot.lane.b32.xlu0 %v517, 8
        %v903 = vpop.permute.xlu0 %902
        %904 = vrot.lane.b32.xlu0 %v518, 8
        %v905 = vpop.permute.xlu0 %904
        %906 = vrot.lane.b32.xlu0 %v519, 8
        %v907 = vpop.permute.xlu0 %906
        %908 = vrot.lane.b32.xlu0 %v520, 8
        %v909 = vpop.permute.xlu0 %908
        %910 = vrot.lane.b32.xlu0 %v521, 8
        %v911 = vpop.permute.xlu0 %910
        %912 = vrot.lane.b32.xlu0 %v522, 8
        %v913 = vpop.permute.xlu0 %912
        %914 = vrot.lane.b32.xlu0 %v523, 8
        %v915 = vpop.permute.xlu0 %914
        %916 = vrot.lane.b32.xlu0 %v524, 8
        %v917 = vpop.permute.xlu0 %916
        %918 = vrot.lane.b32.xlu0 %v525, 8
        %v919 = vpop.permute.xlu0 %918
        %920 = vrot.lane.b32.xlu0 %v526, 8
        %v921 = vpop.permute.xlu0 %920
        %922 = vrot.lane.b32.xlu0 %v527, 8
        %v923 = vpop.permute.xlu0 %922
        %924 = vrot.lane.b32.xlu0 %v528, 8
        %v925 = vpop.permute.xlu0 %924
        %926 = vrot.lane.b32.xlu0 %v529, 8
        %v927 = vpop.permute.xlu0 %926
        %928 = vrot.lane.b32.xlu0 %v530, 8
        %v929 = vpop.permute.xlu0 %928
        %930 = vrot.lane.b32.xlu0 %v531, 8
        %v931 = vpop.permute.xlu0 %930
        %932 = vrot.lane.b32.xlu0 %v532, 8
        %v933 = vpop.permute.xlu0 %932
        %934 = vrot.lane.b32.xlu0 %v533, 8
        %v935 = vpop.permute.xlu0 %934
        %936 = vrot.lane.b32.xlu0 %v534, 8
        %v937 = vpop.permute.xlu0 %936
        %938 = vrot.lane.b32.xlu0 %v535, 8
        %v939 = vpop.permute.xlu0 %938
        %940 = vrot.lane.b32.xlu0 %v536, 8
        %v941 = vpop.permute.xlu0 %940
        %942 = vrot.lane.b32.xlu0 %v537, 8
        %v943 = vpop.permute.xlu0 %942
        %944 = vrot.lane.b32.xlu0 %v538, 8
        %v945 = vpop.permute.xlu0 %944
        %946 = vrot.lane.b32.xlu0 %v539, 8
        %v947 = vpop.permute.xlu0 %946
        %948 = vrot.lane.b32.xlu0 %v540, 8
        %v949 = vpop.permute.xlu0 %948
        %950 = vrot.lane.b32.xlu0 %v541, 8
        %v951 = vpop.permute.xlu0 %950
        %952 = vrot.lane.b32.xlu0 %v542, 8
        %v953 = vpop.permute.xlu0 %952
        %954 = vrot.lane.b32.xlu0 %v543, 8
        %v955 = vpop.permute.xlu0 %954
        %956 = vrot.lane.b32.xlu0 %v544, 8
        %v957 = vpop.permute.xlu0 %956
        %958 = vrot.lane.b32.xlu0 %v545, 8
        %v959 = vpop.permute.xlu0 %958
        %960 = vrot.lane.b32.xlu0 %v546, 8
        %v961 = vpop.permute.xlu0 %960
        %962 = vrot.lane.b32.xlu0 %v547, 8
        %v963 = vpop.permute.xlu0 %962
        %964 = vrot.lane.b32.xlu0 %v548, 8
        %v965 = vpop.permute.xlu0 %964
        %1030 = vrot.lane.b32.xlu0 %v549, 12
        %v1031 = vpop.permute.xlu0 %1030
        %1032 = vrot.lane.b32.xlu0 %v550, 12
        %v1033 = vpop.permute.xlu0 %1032
        %1034 = vrot.lane.b32.xlu0 %v551, 12
        %v1035 = vpop.permute.xlu0 %1034
        %1036 = vrot.lane.b32.xlu0 %v552, 12
        %v1037 = vpop.permute.xlu0 %1036
        %1038 = vrot.lane.b32.xlu0 %v553, 12
        %v1039 = vpop.permute.xlu0 %1038
        %1040 = vrot.lane.b32.xlu0 %v554, 12
        %v1041 = vpop.permute.xlu0 %1040
        %1042 = vrot.lane.b32.xlu0 %v555, 12
        %v1043 = vpop.permute.xlu0 %1042
        %1044 = vrot.lane.b32.xlu0 %v556, 12
        %v1045 = vpop.permute.xlu0 %1044
        %1046 = vrot.lane.b32.xlu0 %v557, 12
        %v1047 = vpop.permute.xlu0 %1046
        %1048 = vrot.lane.b32.xlu0 %v558, 12
        %v1049 = vpop.permute.xlu0 %1048
        %1050 = vrot.lane.b32.xlu0 %v559, 12
        %v1051 = vpop.permute.xlu0 %1050
        %1052 = vrot.lane.b32.xlu0 %v560, 12
        %v1053 = vpop.permute.xlu0 %1052
        %1054 = vrot.lane.b32.xlu0 %v561, 12
        %v1055 = vpop.permute.xlu0 %1054
        %1056 = vrot.lane.b32.xlu0 %v562, 12
        %v1057 = vpop.permute.xlu0 %1056
        %1058 = vrot.lane.b32.xlu0 %v563, 12
        %v1059 = vpop.permute.xlu0 %1058
        %1060 = vrot.lane.b32.xlu0 %v564, 12
        %v1061 = vpop.permute.xlu0 %1060
        %1062 = vrot.lane.b32.xlu0 %v565, 12
        %v1063 = vpop.permute.xlu0 %1062
        %1064 = vrot.lane.b32.xlu0 %v566, 12
        %v1065 = vpop.permute.xlu0 %1064
        %1066 = vrot.lane.b32.xlu0 %v567, 12
        %v1067 = vpop.permute.xlu0 %1066
        %1068 = vrot.lane.b32.xlu0 %v568, 12
        %v1069 = vpop.permute.xlu0 %1068
        %1070 = vrot.lane.b32.xlu0 %v569, 12
        %v1071 = vpop.permute.xlu0 %1070
        %1072 = vrot.lane.b32.xlu0 %v570, 12
        %v1073 = vpop.permute.xlu0 %1072
        %1074 = vrot.lane.b32.xlu0 %v571, 12
        %v1075 = vpop.permute.xlu0 %1074
        %1076 = vrot.lane.b32.xlu0 %v572, 12
        %v1077 = vpop.permute.xlu0 %1076
        %1078 = vrot.lane.b32.xlu0 %v573, 12
        %v1079 = vpop.permute.xlu0 %1078
        %1080 = vrot.lane.b32.xlu0 %v574, 12
        %v1081 = vpop.permute.xlu0 %1080
        %1082 = vrot.lane.b32.xlu0 %v575, 12
        %v1083 = vpop.permute.xlu0 %1082
        %1084 = vrot.lane.b32.xlu0 %v576, 12
        %v1085 = vpop.permute.xlu0 %1084
        %1086 = vrot.lane.b32.xlu0 %v577, 12
        %v1087 = vpop.permute.xlu0 %1086
        %1088 = vrot.lane.b32.xlu0 %v578, 12
        %v1089 = vpop.permute.xlu0 %1088
        %1090 = vrot.lane.b32.xlu0 %v579, 12
        %v1091 = vpop.permute.xlu0 %1090
        %1092 = vrot.lane.b32.xlu0 %v580, 12
        %v1093 = vpop.permute.xlu0 %1092
        %1158 = vrot.lane.b32.xlu0 %v581, 16
        %v1159 = vpop.permute.xlu0 %1158
        %1160 = vrot.lane.b32.xlu0 %v582, 16
        %v1161 = vpop.permute.xlu0 %1160
        %1162 = vrot.lane.b32.xlu0 %v583, 16
        %v1163 = vpop.permute.xlu0 %1162
        %1164 = vrot.lane.b32.xlu0 %v584, 16
        %v1165 = vpop.permute.xlu0 %1164
        %1166 = vrot.lane.b32.xlu0 %v585, 16
        %v1167 = vpop.permute.xlu0 %1166
        %1168 = vrot.lane.b32.xlu0 %v586, 16
        %v1169 = vpop.permute.xlu0 %1168
        %1170 = vrot.lane.b32.xlu0 %v587, 16
        %v1171 = vpop.permute.xlu0 %1170
        %1172 = vrot.lane.b32.xlu0 %v588, 16
        %v1173 = vpop.permute.xlu0 %1172
        %1174 = vrot.lane.b32.xlu0 %v589, 16
        %v1175 = vpop.permute.xlu0 %1174
        %1176 = vrot.lane.b32.xlu0 %v590, 16
        %v1177 = vpop.permute.xlu0 %1176
        %1178 = vrot.lane.b32.xlu0 %v591, 16
        %v1179 = vpop.permute.xlu0 %1178
        %1180 = vrot.lane.b32.xlu0 %v592, 16
        %v1181 = vpop.permute.xlu0 %1180
        %1182 = vrot.lane.b32.xlu0 %v593, 16
        %v1183 = vpop.permute.xlu0 %1182
        %1184 = vrot.lane.b32.xlu0 %v594, 16
        %v1185 = vpop.permute.xlu0 %1184
        %1186 = vrot.lane.b32.xlu0 %v595, 16
        %v1187 = vpop.permute.xlu0 %1186
        %1188 = vrot.lane.b32.xlu0 %v596, 16
        %v1189 = vpop.permute.xlu0 %1188
        %1190 = vrot.lane.b32.xlu0 %v597, 16
        %v1191 = vpop.permute.xlu0 %1190
        %1192 = vrot.lane.b32.xlu0 %v598, 16
        %v1193 = vpop.permute.xlu0 %1192
        %1194 = vrot.lane.b32.xlu0 %v599, 16
        %v1195 = vpop.permute.xlu0 %1194
        %1196 = vrot.lane.b32.xlu0 %v600, 16
        %v1197 = vpop.permute.xlu0 %1196
        %1198 = vrot.lane.b32.xlu0 %v601, 16
        %v1199 = vpop.permute.xlu0 %1198
        %1200 = vrot.lane.b32.xlu0 %v602, 16
        %v1201 = vpop.permute.xlu0 %1200
        %1202 = vrot.lane.b32.xlu0 %v603, 16
        %v1203 = vpop.permute.xlu0 %1202
        %1204 = vrot.lane.b32.xlu0 %v604, 16
        %v1205 = vpop.permute.xlu0 %1204
        %1206 = vrot.lane.b32.xlu0 %v605, 16
        %v1207 = vpop.permute.xlu0 %1206
        %1208 = vrot.lane.b32.xlu0 %v606, 16
        %v1209 = vpop.permute.xlu0 %1208
        %1210 = vrot.lane.b32.xlu0 %v607, 16
        %v1211 = vpop.permute.xlu0 %1210
        %1212 = vrot.lane.b32.xlu0 %v608, 16
        %v1213 = vpop.permute.xlu0 %1212
        %1214 = vrot.lane.b32.xlu0 %v609, 16
        %v1215 = vpop.permute.xlu0 %1214
        %1216 = vrot.lane.b32.xlu0 %v610, 16
        %v1217 = vpop.permute.xlu0 %1216
        %1218 = vrot.lane.b32.xlu0 %v611, 16
        %v1219 = vpop.permute.xlu0 %1218
        %1220 = vrot.lane.b32.xlu0 %v612, 16
        %v1221 = vpop.permute.xlu0 %1220
        %1286 = vrot.lane.b32.xlu0 %v613, 20
        %v1287 = vpop.permute.xlu0 %1286
        %1288 = vrot.lane.b32.xlu0 %v614, 20
        %v1289 = vpop.permute.xlu0 %1288
        %1290 = vrot.lane.b32.xlu0 %v615, 20
        %v1291 = vpop.permute.xlu0 %1290
        %1292 = vrot.lane.b32.xlu0 %v616, 20
        %v1293 = vpop.permute.xlu0 %1292
        %1294 = vrot.lane.b32.xlu0 %v617, 20
        %v1295 = vpop.permute.xlu0 %1294
        %1296 = vrot.lane.b32.xlu0 %v618, 20
        %v1297 = vpop.permute.xlu0 %1296
        %1298 = vrot.lane.b32.xlu0 %v619, 20
        %v1299 = vpop.permute.xlu0 %1298
        %1300 = vrot.lane.b32.xlu0 %v620, 20
        %v1301 = vpop.permute.xlu0 %1300
        %1302 = vrot.lane.b32.xlu0 %v621, 20
        %v1303 = vpop.permute.xlu0 %1302
        %1304 = vrot.lane.b32.xlu0 %v622, 20
        %v1305 = vpop.permute.xlu0 %1304
        %1306 = vrot.lane.b32.xlu0 %v623, 20
        %v1307 = vpop.permute.xlu0 %1306
        %1308 = vrot.lane.b32.xlu0 %v624, 20
        %v1309 = vpop.permute.xlu0 %1308
        %1310 = vrot.lane.b32.xlu0 %v625, 20
        %v1311 = vpop.permute.xlu0 %1310
        %1312 = vrot.lane.b32.xlu0 %v626, 20
        %v1313 = vpop.permute.xlu0 %1312
        %1314 = vrot.lane.b32.xlu0 %v627, 20
        %v1315 = vpop.permute.xlu0 %1314
        %1316 = vrot.lane.b32.xlu0 %v628, 20
        %v1317 = vpop.permute.xlu0 %1316
        %1318 = vrot.lane.b32.xlu0 %v629, 20
        %v1319 = vpop.permute.xlu0 %1318
        %1320 = vrot.lane.b32.xlu0 %v630, 20
        %v1321 = vpop.permute.xlu0 %1320
        %1322 = vrot.lane.b32.xlu0 %v631, 20
        %v1323 = vpop.permute.xlu0 %1322
        %1324 = vrot.lane.b32.xlu0 %v632, 20
        %v1325 = vpop.permute.xlu0 %1324
        %1326 = vrot.lane.b32.xlu0 %v633, 20
        %v1327 = vpop.permute.xlu0 %1326
        %1328 = vrot.lane.b32.xlu0 %v634, 20
        %v1329 = vpop.permute.xlu0 %1328
        %1330 = vrot.lane.b32.xlu0 %v635, 20
        %v1331 = vpop.permute.xlu0 %1330
        %1332 = vrot.lane.b32.xlu0 %v636, 20
        %v1333 = vpop.permute.xlu0 %1332
        %1334 = vrot.lane.b32.xlu0 %v637, 20
        %v1335 = vpop.permute.xlu0 %1334
        %1336 = vrot.lane.b32.xlu0 %v638, 20
        %v1337 = vpop.permute.xlu0 %1336
        %1338 = vrot.lane.b32.xlu0 %v639, 20
        %v1339 = vpop.permute.xlu0 %1338
        %1340 = vrot.lane.b32.xlu0 %v640, 20
        %v1341 = vpop.permute.xlu0 %1340
        %1342 = vrot.lane.b32.xlu0 %v641, 20
        %v1343 = vpop.permute.xlu0 %1342
        %1344 = vrot.lane.b32.xlu0 %v642, 20
        %v1345 = vpop.permute.xlu0 %1344
        %1346 = vrot.lane.b32.xlu0 %v643, 20
        %v1347 = vpop.permute.xlu0 %1346
        %1348 = vrot.lane.b32.xlu0 %v644, 20
        %v1349 = vpop.permute.xlu0 %1348
        %1414 = vrot.lane.b32.xlu0 %v646, 24
        %v1415 = vpop.permute.xlu0 %1414
        %1416 = vrot.lane.b32.xlu0 %v647, 24
        %v1417 = vpop.permute.xlu0 %1416
        %1418 = vrot.lane.b32.xlu0 %v648, 24
        %v1419 = vpop.permute.xlu0 %1418
        %1420 = vrot.lane.b32.xlu0 %v649, 24
        %v1421 = vpop.permute.xlu0 %1420
        %1422 = vrot.lane.b32.xlu0 %v650, 24
        %v1423 = vpop.permute.xlu0 %1422
        %1424 = vrot.lane.b32.xlu0 %v651, 24
        %v1425 = vpop.permute.xlu0 %1424
        %1426 = vrot.lane.b32.xlu0 %v652, 24
        %v1427 = vpop.permute.xlu0 %1426
        %1428 = vrot.lane.b32.xlu0 %v653, 24
        %v1429 = vpop.permute.xlu0 %1428
        %1430 = vrot.lane.b32.xlu0 %v654, 24
        %v1431 = vpop.permute.xlu0 %1430
        %1432 = vrot.lane.b32.xlu0 %v655, 24
        %v1433 = vpop.permute.xlu0 %1432
        %1434 = vrot.lane.b32.xlu0 %v656, 24
        %v1435 = vpop.permute.xlu0 %1434
        %1436 = vrot.lane.b32.xlu0 %v657, 24
        %v1437 = vpop.permute.xlu0 %1436
        %1438 = vrot.lane.b32.xlu0 %v658, 24
        %v1439 = vpop.permute.xlu0 %1438
        %1440 = vrot.lane.b32.xlu0 %v659, 24
        %v1441 = vpop.permute.xlu0 %1440
        %1442 = vrot.lane.b32.xlu0 %v660, 24
        %v1443 = vpop.permute.xlu0 %1442
        %1444 = vrot.lane.b32.xlu0 %v661, 24
        %v1445 = vpop.permute.xlu0 %1444
        %1446 = vrot.lane.b32.xlu0 %v662, 24
        %v1447 = vpop.permute.xlu0 %1446
        %1448 = vrot.lane.b32.xlu0 %v663, 24
        %v1449 = vpop.permute.xlu0 %1448
        %1450 = vrot.lane.b32.xlu0 %v664, 24
        %v1451 = vpop.permute.xlu0 %1450
        %1452 = vrot.lane.b32.xlu0 %v665, 24
        %v1453 = vpop.permute.xlu0 %1452
        %1454 = vrot.lane.b32.xlu0 %v666, 24
        %v1455 = vpop.permute.xlu0 %1454
        %1456 = vrot.lane.b32.xlu0 %v667, 24
        %v1457 = vpop.permute.xlu0 %1456
        %1458 = vrot.lane.b32.xlu0 %v668, 24
        %v1459 = vpop.permute.xlu0 %1458
        %1460 = vrot.lane.b32.xlu0 %v669, 24
        %v1461 = vpop.permute.xlu0 %1460
        %1462 = vrot.lane.b32.xlu0 %v670, 24
        %v1463 = vpop.permute.xlu0 %1462
        %1464 = vrot.lane.b32.xlu0 %v671, 24
        %v1465 = vpop.permute.xlu0 %1464
        %1466 = vrot.lane.b32.xlu0 %v672, 24
        %v1467 = vpop.permute.xlu0 %1466
        %1468 = vrot.lane.b32.xlu0 %v673, 24
        %v1469 = vpop.permute.xlu0 %1468
        %1470 = vrot.lane.b32.xlu0 %v674, 24
        %v1471 = vpop.permute.xlu0 %1470
        %1472 = vrot.lane.b32.xlu0 %v675, 24
        %v1473 = vpop.permute.xlu0 %1472
        %1474 = vrot.lane.b32.xlu0 %v676, 24
        %v1475 = vpop.permute.xlu0 %1474
        %1476 = vrot.lane.b32.xlu0 %v677, 24
        %v1477 = vpop.permute.xlu0 %1476
        %1542 = vrot.lane.b32.xlu0 %v678, 28
        %v1543 = vpop.permute.xlu0 %1542
        %1544 = vrot.lane.b32.xlu0 %v679, 28
        %v1545 = vpop.permute.xlu0 %1544
        %1546 = vrot.lane.b32.xlu0 %v680, 28
        %v1547 = vpop.permute.xlu0 %1546
        %1548 = vrot.lane.b32.xlu0 %v681, 28
        %v1549 = vpop.permute.xlu0 %1548
        %1550 = vrot.lane.b32.xlu0 %v682, 28
        %v1551 = vpop.permute.xlu0 %1550
        %1552 = vrot.lane.b32.xlu0 %v683, 28
        %v1553 = vpop.permute.xlu0 %1552
        %1554 = vrot.lane.b32.xlu0 %v684, 28
        %v1555 = vpop.permute.xlu0 %1554
        %1556 = vrot.lane.b32.xlu0 %v685, 28
        %v1557 = vpop.permute.xlu0 %1556
        %1558 = vrot.lane.b32.xlu0 %v686, 28
        %v1559 = vpop.permute.xlu0 %1558
        %1560 = vrot.lane.b32.xlu0 %v687, 28
        %v1561 = vpop.permute.xlu0 %1560
        %1562 = vrot.lane.b32.xlu0 %v688, 28
        %v1563 = vpop.permute.xlu0 %1562
        %1564 = vrot.lane.b32.xlu0 %v689, 28
        %v1565 = vpop.permute.xlu0 %1564
        %1566 = vrot.lane.b32.xlu0 %v690, 28
        %v1567 = vpop.permute.xlu0 %1566
        %1568 = vrot.lane.b32.xlu0 %v691, 28
        %v1569 = vpop.permute.xlu0 %1568
        %1570 = vrot.lane.b32.xlu0 %v692, 28
        %v1571 = vpop.permute.xlu0 %1570
        %1572 = vrot.lane.b32.xlu0 %v693, 28
        %v1573 = vpop.permute.xlu0 %1572
        %1574 = vrot.lane.b32.xlu0 %v694, 28
        %v1575 = vpop.permute.xlu0 %1574
        %1576 = vrot.lane.b32.xlu0 %v695, 28
        %v1577 = vpop.permute.xlu0 %1576
        %1578 = vrot.lane.b32.xlu0 %v696, 28
        %v1579 = vpop.permute.xlu0 %1578
        %1580 = vrot.lane.b32.xlu0 %v697, 28
        %v1581 = vpop.permute.xlu0 %1580
        %1582 = vrot.lane.b32.xlu0 %v698, 28
        %v1583 = vpop.permute.xlu0 %1582
        %1584 = vrot.lane.b32.xlu0 %v699, 28
        %v1585 = vpop.permute.xlu0 %1584
        %1586 = vrot.lane.b32.xlu0 %v700, 28
        %v1587 = vpop.permute.xlu0 %1586
        %1588 = vrot.lane.b32.xlu0 %v701, 28
        %v1589 = vpop.permute.xlu0 %1588
        %1590 = vrot.lane.b32.xlu0 %v702, 28
        %v1591 = vpop.permute.xlu0 %1590
        %1592 = vrot.lane.b32.xlu0 %v703, 28
        %v1593 = vpop.permute.xlu0 %1592
        %1594 = vrot.lane.b32.xlu0 %v704, 28
        %v1595 = vpop.permute.xlu0 %1594
        %1596 = vrot.lane.b32.xlu0 %v705, 28
        %v1597 = vpop.permute.xlu0 %1596
        %1598 = vrot.lane.b32.xlu0 %v706, 28
        %v1599 = vpop.permute.xlu0 %1598
        %1600 = vrot.lane.b32.xlu0 %v707, 28
        %v1601 = vpop.permute.xlu0 %1600
        %1602 = vrot.lane.b32.xlu0 %v708, 28
        %v1603 = vpop.permute.xlu0 %1602
        %1604 = vrot.lane.b32.xlu0 %v709, 28
        %v1605 = vpop.permute.xlu0 %1604
        %1670 = vrot.lane.b32.xlu0 %v710, 32
        %v1671 = vpop.permute.xlu0 %1670
        %1672 = vrot.lane.b32.xlu0 %v711, 32
        %v1673 = vpop.permute.xlu0 %1672
        %1674 = vrot.lane.b32.xlu0 %v712, 32
        %v1675 = vpop.permute.xlu0 %1674
        %1676 = vrot.lane.b32.xlu0 %v713, 32
        %v1677 = vpop.permute.xlu0 %1676
        %1678 = vrot.lane.b32.xlu0 %v714, 32
        %v1679 = vpop.permute.xlu0 %1678
        %1680 = vrot.lane.b32.xlu0 %v715, 32
        %v1681 = vpop.permute.xlu0 %1680
        %1682 = vrot.lane.b32.xlu0 %v716, 32
        %v1683 = vpop.permute.xlu0 %1682
        %1684 = vrot.lane.b32.xlu0 %v717, 32
        %v1685 = vpop.permute.xlu0 %1684
        %1686 = vrot.lane.b32.xlu0 %v718, 32
        %v1687 = vpop.permute.xlu0 %1686
        %1688 = vrot.lane.b32.xlu0 %v719, 32
        %v1689 = vpop.permute.xlu0 %1688
        %1690 = vrot.lane.b32.xlu0 %v720, 32
        %v1691 = vpop.permute.xlu0 %1690
        %1692 = vrot.lane.b32.xlu0 %v721, 32
        %v1693 = vpop.permute.xlu0 %1692
        %1694 = vrot.lane.b32.xlu0 %v722, 32
        %v1695 = vpop.permute.xlu0 %1694
        %1696 = vrot.lane.b32.xlu0 %v723, 32
        %v1697 = vpop.permute.xlu0 %1696
        %1698 = vrot.lane.b32.xlu0 %v724, 32
        %v1699 = vpop.permute.xlu0 %1698
        %1700 = vrot.lane.b32.xlu0 %v725, 32
        %v1701 = vpop.permute.xlu0 %1700
        %1702 = vrot.lane.b32.xlu0 %v726, 32
        %v1703 = vpop.permute.xlu0 %1702
        %1704 = vrot.lane.b32.xlu0 %v727, 32
        %v1705 = vpop.permute.xlu0 %1704
        %1706 = vrot.lane.b32.xlu0 %v728, 32
        %v1707 = vpop.permute.xlu0 %1706
        %1708 = vrot.lane.b32.xlu0 %v729, 32
        %v1709 = vpop.permute.xlu0 %1708
        %1710 = vrot.lane.b32.xlu0 %v730, 32
        %v1711 = vpop.permute.xlu0 %1710
        %1712 = vrot.lane.b32.xlu0 %v731, 32
        %v1713 = vpop.permute.xlu0 %1712
        %1714 = vrot.lane.b32.xlu0 %v732, 32
        %v1715 = vpop.permute.xlu0 %1714
        %1716 = vrot.lane.b32.xlu0 %v733, 32
        %v1717 = vpop.permute.xlu0 %1716
        %1718 = vrot.lane.b32.xlu0 %v734, 32
        %v1719 = vpop.permute.xlu0 %1718
        %1720 = vrot.lane.b32.xlu0 %v735, 32
        %v1721 = vpop.permute.xlu0 %1720
        %1722 = vrot.lane.b32.xlu0 %v736, 32
        %v1723 = vpop.permute.xlu0 %1722
        %1724 = vrot.lane.b32.xlu0 %v737, 32
        %v1725 = vpop.permute.xlu0 %1724
        %1726 = vrot.lane.b32.xlu0 %v738, 32
        %v1727 = vpop.permute.xlu0 %1726
        %1728 = vrot.lane.b32.xlu0 %v739, 32
        %v1729 = vpop.permute.xlu0 %1728
        %1730 = vrot.lane.b32.xlu0 %v740, 32
        %v1731 = vpop.permute.xlu0 %1730
        %1732 = vrot.lane.b32.xlu0 %v741, 32
        %v1733 = vpop.permute.xlu0 %1732
        %v1766 = vsel %vm276, %v453, %v775
        %v1767 = vsel %vm276, %v454, %v777
        %v1768 = vsel %vm276, %v455, %v779
        %v1769 = vsel %vm276, %v456, %v781
        %v1770 = vsel %vm276, %v457, %v783
        %v1771 = vsel %vm276, %v458, %v785
        %v1772 = vsel %vm276, %v459, %v787
        %v1773 = vsel %vm276, %v460, %v789
        %v1774 = vsel %vm276, %v461, %v791
        %v1775 = vsel %vm276, %v462, %v793
        %v1776 = vsel %vm276, %v463, %v795
        %v1777 = vsel %vm276, %v464, %v797
        %v1778 = vsel %vm276, %v465, %v799
        %v1779 = vsel %vm276, %v466, %v801
        %v1780 = vsel %vm276, %v467, %v803
        %v1781 = vsel %vm276, %v468, %v805
        %v1782 = vsel %vm276, %v469, %v807
        %v1783 = vsel %vm276, %v470, %v809
        %v1784 = vsel %vm276, %v471, %v811
        %v1785 = vsel %vm276, %v472, %v813
        %v1786 = vsel %vm276, %v473, %v815
        %v1787 = vsel %vm276, %v474, %v817
        %v1788 = vsel %vm276, %v475, %v819
        %v1789 = vsel %vm276, %v476, %v821
        %v1790 = vsel %vm276, %v477, %v823
        %v1791 = vsel %vm276, %v478, %v825
        %v1792 = vsel %vm276, %v479, %v827
        %v1793 = vsel %vm276, %v480, %v829
        %v1794 = vsel %vm276, %v481, %v831
        %v1795 = vsel %vm276, %v482, %v833
        %v1796 = vsel %vm276, %v483, %v835
        %v1797 = vsel %vm276, %v484, %v837
        %v1798 = vsel %vm332, %v1766, %v903
        %v1799 = vsel %vm332, %v1767, %v905
        %v1800 = vsel %vm332, %v1768, %v907
        %v1801 = vsel %vm332, %v1769, %v909
        %v1802 = vsel %vm332, %v1770, %v911
        %v1803 = vsel %vm332, %v1771, %v913
        %v1804 = vsel %vm332, %v1772, %v915
        %v1805 = vsel %vm332, %v1773, %v917
        %v1806 = vsel %vm332, %v1774, %v919
        %v1807 = vsel %vm332, %v1775, %v921
        %v1808 = vsel %vm332, %v1776, %v923
        %v1809 = vsel %vm332, %v1777, %v925
        %v1810 = vsel %vm332, %v1778, %v927
        %v1811 = vsel %vm332, %v1779, %v929
        %v1812 = vsel %vm332, %v1780, %v931
        %v1813 = vsel %vm332, %v1781, %v933
        %v1814 = vsel %vm332, %v1782, %v935
        %v1815 = vsel %vm332, %v1783, %v937
        %v1816 = vsel %vm332, %v1784, %v939
        %v1817 = vsel %vm332, %v1785, %v941
        %v1818 = vsel %vm332, %v1786, %v943
        %v1819 = vsel %vm332, %v1787, %v945
        %v1820 = vsel %vm332, %v1788, %v947
        %v1821 = vsel %vm332, %v1789, %v949
        %v1822 = vsel %vm332, %v1790, %v951
        %v1823 = vsel %vm332, %v1791, %v953
        %v1824 = vsel %vm332, %v1792, %v955
        %v1825 = vsel %vm332, %v1793, %v957
        %v1826 = vsel %vm332, %v1794, %v959
        %v1827 = vsel %vm332, %v1795, %v961
        %v1828 = vsel %vm332, %v1796, %v963
        %v1829 = vsel %vm332, %v1797, %v965
        %vm1830 = vcmask 97280
        %v1831 = vsel %vm1830, %v1798, %v1031
        %v1832 = vsel %vm1830, %v1799, %v1033
        %v1833 = vsel %vm1830, %v1800, %v1035
        %v1834 = vsel %vm1830, %v1801, %v1037
        %v1835 = vsel %vm1830, %v1802, %v1039
        %v1836 = vsel %vm1830, %v1803, %v1041
        %v1837 = vsel %vm1830, %v1804, %v1043
        %v1838 = vsel %vm1830, %v1805, %v1045
        %v1839 = vsel %vm1830, %v1806, %v1047
        %v1840 = vsel %vm1830, %v1807, %v1049
        %v1841 = vsel %vm1830, %v1808, %v1051
        %v1842 = vsel %vm1830, %v1809, %v1053
        %v1843 = vsel %vm1830, %v1810, %v1055
        %v1844 = vsel %vm1830, %v1811, %v1057
        %v1845 = vsel %vm1830, %v1812, %v1059
        %v1846 = vsel %vm1830, %v1813, %v1061
        %v1847 = vsel %vm1830, %v1814, %v1063
        %v1848 = vsel %vm1830, %v1815, %v1065
        %v1849 = vsel %vm1830, %v1816, %v1067
        %v1850 = vsel %vm1830, %v1817, %v1069
        %v1851 = vsel %vm1830, %v1818, %v1071
        %v1852 = vsel %vm1830, %v1819, %v1073
        %v1853 = vsel %vm1830, %v1820, %v1075
        %v1854 = vsel %vm1830, %v1821, %v1077
        %v1855 = vsel %vm1830, %v1822, %v1079
        %v1856 = vsel %vm1830, %v1823, %v1081
        %v1857 = vsel %vm1830, %v1824, %v1083
        %v1858 = vsel %vm1830, %v1825, %v1085
        %v1859 = vsel %vm1830, %v1826, %v1087
        %v1860 = vsel %vm1830, %v1827, %v1089
        %v1861 = vsel %vm1830, %v1828, %v1091
        %v1862 = vsel %vm1830, %v1829, %v1093
        %vm1863 = vcmask 130048
        %v1864 = vsel %vm1863, %v1831, %v1159
        %v1865 = vsel %vm1863, %v1832, %v1161
        %v1866 = vsel %vm1863, %v1833, %v1163
        %v1867 = vsel %vm1863, %v1834, %v1165
        %v1868 = vsel %vm1863, %v1835, %v1167
        %v1869 = vsel %vm1863, %v1836, %v1169
        %v1870 = vsel %vm1863, %v1837, %v1171
        %v1871 = vsel %vm1863, %v1838, %v1173
        %v1872 = vsel %vm1863, %v1839, %v1175
        %v1873 = vsel %vm1863, %v1840, %v1177
        %v1874 = vsel %vm1863, %v1841, %v1179
        %v1875 = vsel %vm1863, %v1842, %v1181
        %v1876 = vsel %vm1863, %v1843, %v1183
        %v1877 = vsel %vm1863, %v1844, %v1185
        %v1878 = vsel %vm1863, %v1845, %v1187
        %v1879 = vsel %vm1863, %v1846, %v1189
        %v1880 = vsel %vm1863, %v1847, %v1191
        %v1881 = vsel %vm1863, %v1848, %v1193
        %v1882 = vsel %vm1863, %v1849, %v1195
        %v1883 = vsel %vm1863, %v1850, %v1197
        %v1884 = vsel %vm1863, %v1851, %v1199
        %v1885 = vsel %vm1863, %v1852, %v1201
        %v1886 = vsel %vm1863, %v1853, %v1203
        %v1887 = vsel %vm1863, %v1854, %v1205
        %v1888 = vsel %vm1863, %v1855, %v1207
        %v1889 = vsel %vm1863, %v1856, %v1209
        %v1890 = vsel %vm1863, %v1857, %v1211
        %v1891 = vsel %vm1863, %v1858, %v1213
        %v1892 = vsel %vm1863, %v1859, %v1215
        %v1893 = vsel %vm1863, %v1860, %v1217
        %v1894 = vsel %vm1863, %v1861, %v1219
        %v1895 = vsel %vm1863, %v1862, %v1221
        %vm1896 = vcmask 162816
        %v1897 = vsel %vm1896, %v1864, %v1287
        %v1898 = vsel %vm1896, %v1865, %v1289
        %v1899 = vsel %vm1896, %v1866, %v1291
        %v1900 = vsel %vm1896, %v1867, %v1293
        %v1901 = vsel %vm1896, %v1868, %v1295
        %v1902 = vsel %vm1896, %v1869, %v1297
        %v1903 = vsel %vm1896, %v1870, %v1299
        %v1904 = vsel %vm1896, %v1871, %v1301
        %v1905 = vsel %vm1896, %v1872, %v1303
        %v1906 = vsel %vm1896, %v1873, %v1305
        %v1907 = vsel %vm1896, %v1874, %v1307
        %v1908 = vsel %vm1896, %v1875, %v1309
        %v1909 = vsel %vm1896, %v1876, %v1311
        %v1910 = vsel %vm1896, %v1877, %v1313
        %v1911 = vsel %vm1896, %v1878, %v1315
        %v1912 = vsel %vm1896, %v1879, %v1317
        %v1913 = vsel %vm1896, %v1880, %v1319
        %v1914 = vsel %vm1896, %v1881, %v1321
        %v1915 = vsel %vm1896, %v1882, %v1323
        %v1916 = vsel %vm1896, %v1883, %v1325
        %v1917 = vsel %vm1896, %v1884, %v1327
        %v1918 = vsel %vm1896, %v1885, %v1329
        %v1919 = vsel %vm1896, %v1886, %v1331
        %v1920 = vsel %vm1896, %v1887, %v1333
        %v1921 = vsel %vm1896, %v1888, %v1335
        %v1922 = vsel %vm1896, %v1889, %v1337
        %v1923 = vsel %vm1896, %v1890, %v1339
        %v1924 = vsel %vm1896, %v1891, %v1341
        %v1925 = vsel %vm1896, %v1892, %v1343
        %v1926 = vsel %vm1896, %v1893, %v1345
        %v1927 = vsel %vm1896, %v1894, %v1347
        %v1928 = vsel %vm1896, %v1895, %v1349
        %vm1929 = vcmask 195584
        %v1930 = vsel %vm1929, %v1897, %v1415
        %v1931 = vsel %vm1929, %v1898, %v1417
        %v1932 = vsel %vm1929, %v1899, %v1419
        %v1933 = vsel %vm1929, %v1900, %v1421
        %v1934 = vsel %vm1929, %v1901, %v1423
        %v1935 = vsel %vm1929, %v1902, %v1425
        %v1936 = vsel %vm1929, %v1903, %v1427
        %v1937 = vsel %vm1929, %v1904, %v1429
        %v1938 = vsel %vm1929, %v1905, %v1431
        %v1939 = vsel %vm1929, %v1906, %v1433
        %v1940 = vsel %vm1929, %v1907, %v1435
        %v1941 = vsel %vm1929, %v1908, %v1437
        %v1942 = vsel %vm1929, %v1909, %v1439
        %v1943 = vsel %vm1929, %v1910, %v1441
        %v1944 = vsel %vm1929, %v1911, %v1443
        %v1945 = vsel %vm1929, %v1912, %v1445
        %v1946 = vsel %vm1929, %v1913, %v1447
        %v1947 = vsel %vm1929, %v1914, %v1449
        %v1948 = vsel %vm1929, %v1915, %v1451
        %v1949 = vsel %vm1929, %v1916, %v1453
        %v1950 = vsel %vm1929, %v1917, %v1455
        %v1951 = vsel %vm1929, %v1918, %v1457
        %v1952 = vsel %vm1929, %v1919, %v1459
        %v1953 = vsel %vm1929, %v1920, %v1461
        %v1954 = vsel %vm1929, %v1921, %v1463
        %v1955 = vsel %vm1929, %v1922, %v1465
        %v1956 = vsel %vm1929, %v1923, %v1467
        %v1957 = vsel %vm1929, %v1924, %v1469
        %v1958 = vsel %vm1929, %v1925, %v1471
        %v1959 = vsel %vm1929, %v1926, %v1473
        %v1960 = vsel %vm1929, %v1927, %v1475
        %v1961 = vsel %vm1929, %v1928, %v1477
        %vm1962 = vcmask 228352
        %v1963 = vsel %vm1962, %v1930, %v1543
        %v1964 = vsel %vm1962, %v1931, %v1545
        %v1965 = vsel %vm1962, %v1932, %v1547
        %v1966 = vsel %vm1962, %v1933, %v1549
        %v1967 = vsel %vm1962, %v1934, %v1551
        %v1968 = vsel %vm1962, %v1935, %v1553
        %v1969 = vsel %vm1962, %v1936, %v1555
        %v1970 = vsel %vm1962, %v1937, %v1557
        %v1971 = vsel %vm1962, %v1938, %v1559
        %v1972 = vsel %vm1962, %v1939, %v1561
        %v1973 = vsel %vm1962, %v1940, %v1563
        %v1974 = vsel %vm1962, %v1941, %v1565
        %v1975 = vsel %vm1962, %v1942, %v1567
        %v1976 = vsel %vm1962, %v1943, %v1569
        %v1977 = vsel %vm1962, %v1944, %v1571
        %v1978 = vsel %vm1962, %v1945, %v1573
        %v1979 = vsel %vm1962, %v1946, %v1575
        %v1980 = vsel %vm1962, %v1947, %v1577
        %v1981 = vsel %vm1962, %v1948, %v1579
        %v1982 = vsel %vm1962, %v1949, %v1581
        %v1983 = vsel %vm1962, %v1950, %v1583
        %v1984 = vsel %vm1962, %v1951, %v1585
        %v1985 = vsel %vm1962, %v1952, %v1587
        %v1986 = vsel %vm1962, %v1953, %v1589
        %v1987 = vsel %vm1962, %v1954, %v1591
        %v1988 = vsel %vm1962, %v1955, %v1593
        %v1989 = vsel %vm1962, %v1956, %v1595
        %v1990 = vsel %vm1962, %v1957, %v1597
        %v1991 = vsel %vm1962, %v1958, %v1599
        %v1992 = vsel %vm1962, %v1959, %v1601
        %v1993 = vsel %vm1962, %v1960, %v1603
        %v1994 = vsel %vm1962, %v1961, %v1605
        %vm1995 = vcmask 261120
        %v1996 = vsel %vm1995, %v1963, %v1671
        %v1997 = vsel %vm1995, %v1964, %v1673
        %v1998 = vsel %vm1995, %v1965, %v1675
        %v1999 = vsel %vm1995, %v1966, %v1677
        %v2000 = vsel %vm1995, %v1967, %v1679
        %v2001 = vsel %vm1995, %v1968, %v1681
        %v2002 = vsel %vm1995, %v1969, %v1683
        %v2003 = vsel %vm1995, %v1970, %v1685
        %v2004 = vsel %vm1995, %v1971, %v1687
        %v2005 = vsel %vm1995, %v1972, %v1689
        %v2006 = vsel %vm1995, %v1973, %v1691
        %v2007 = vsel %vm1995, %v1974, %v1693
        %v2008 = vsel %vm1995, %v1975, %v1695
        %v2009 = vsel %vm1995, %v1976, %v1697
        %v2010 = vsel %vm1995, %v1977, %v1699
        %v2011 = vsel %vm1995, %v1978, %v1701
        %v2012 = vsel %vm1995, %v1979, %v1703
        %v2013 = vsel %vm1995, %v1980, %v1705
        %v2014 = vsel %vm1995, %v1981, %v1707
        %v2015 = vsel %vm1995, %v1982, %v1709
        %v2016 = vsel %vm1995, %v1983, %v1711
        %v2017 = vsel %vm1995, %v1984, %v1713
        %v2018 = vsel %vm1995, %v1985, %v1715
        %v2019 = vsel %vm1995, %v1986, %v1717
        %v2020 = vsel %vm1995, %v1987, %v1719
        %v2021 = vsel %vm1995, %v1988, %v1721
        %v2022 = vsel %vm1995, %v1989, %v1723
        %v2023 = vsel %vm1995, %v1990, %v1725
        %v2024 = vsel %vm1995, %v1991, %v1727
        %v2025 = vsel %vm1995, %v1992, %v1729
        %v2026 = vsel %vm1995, %v1993, %v1731
        %v2027 = vsel %vm1995, %v1994, %v1733
        %v2028 = vld [vmem:[%s1] sm:$0xff]
        %v2029 = vld [vmem:[%s1 + $0x8] sm:$0xff]
        %v2030 = vld [vmem:[%s1 + $0x10] sm:$0xff]
        %v2031 = vld [vmem:[%s1 + $0x18] sm:$0xff]
        %v2032 = vld [vmem:[%s1 + $0x20] sm:$0xf]
        %v2033 = vld [vmem:[%s2] sm:$0x1]
        %v2035 = vperm.slane %v2033, 0
        %vm2037 = vcmask 293888
        %v2039 = vsel %vm2037, %v1996, 0
        %v2042 = vsel %vm2037, %v1997, 0
        %v2045 = vsel %vm2037, %v1998, 0
        %v2048 = vsel %vm2037, %v1999, 0
        %v2051 = vsel %vm2037, %v2000, 0
        %v2054 = vsel %vm2037, %v2001, 0
        %v2057 = vsel %vm2037, %v2002, 0
        %v2060 = vsel %vm2037, %v2003, 0
        %v2063 = vsel %vm2037, %v2004, 0
        %v2066 = vsel %vm2037, %v2005, 0
        %v2069 = vsel %vm2037, %v2006, 0
        %v2072 = vsel %vm2037, %v2007, 0
        %v2075 = vsel %vm2037, %v2008, 0
        %v2078 = vsel %vm2037, %v2009, 0
        %v2081 = vsel %vm2037, %v2010, 0
        %v2084 = vsel %vm2037, %v2011, 0
        %v2087 = vsel %vm2037, %v2012, 0
        %v2090 = vsel %vm2037, %v2013, 0
        %v2093 = vsel %vm2037, %v2014, 0
        %v2096 = vsel %vm2037, %v2015, 0
        %v2099 = vsel %vm2037, %v2016, 0
        %v2102 = vsel %vm2037, %v2017, 0
        %v2105 = vsel %vm2037, %v2018, 0
        %v2108 = vsel %vm2037, %v2019, 0
        %v2111 = vsel %vm2037, %v2020, 0
        %v2114 = vsel %vm2037, %v2021, 0
        %v2117 = vsel %vm2037, %v2022, 0
        %v2120 = vsel %vm2037, %v2023, 0
        %v2123 = vsel %vm2037, %v2024, 0
        %v2126 = vsel %vm2037, %v2025, 0
        %v2129 = vsel %vm2037, %v2026, 0
        %v2132 = vsel %vm2037, %v2027, 0
        %vm2134 = vcmask 1043456
        %v2136 = vsel %vm2134, %v2032, 0
        %2138 = vmatpush.msra.mxu0 0.0
        %2139 = vmatpush.msra.mxu0 0.0
        %2140 = vmatpush.msra.mxu0 0.0
        %2141 = vmatpush.msra.mxu0 0.0
        %2142 = vmatpush.msra.mxu0 0.0
        %2143 = vmatpush.msra.mxu0 0.0
        %2144 = vmatpush.msra.mxu0 0.0
        %2145 = vmatpush.msra.mxu0 0.0
        %2146 = vmatpush.msra.mxu0 0.0
        %2147 = vmatpush.msra.mxu0 0.0
        %2148 = vmatpush.msra.mxu0 0.0
        %2149 = vmatpush.msra.mxu0 %v2136
        %2150 = vmatpush.msra.mxu0 %v2031
        %2151 = vmatpush.msra.mxu0 %v2030
        %2152 = vmatpush.msra.mxu0 %v2029
        %2153 = vmatpush.msra.mxu0 %v2028
        %2154 = vmatmul.f32.gmra.mxu0 %v2039
        %v2155 = vpop.f32.mrf.mxu0
        %v2156 = vadd.f32 %v2035, %v2155
        %2157 = vmatmul.f32.gmra.mxu0 %v2042
        %v2158 = vpop.f32.mrf.mxu0
        %v2159 = vadd.f32 %v2035, %v2158
        %2160 = vmatmul.f32.gmra.mxu0 %v2045
        %v2161 = vpop.f32.mrf.mxu0
        %v2162 = vadd.f32 %v2035, %v2161
        %2163 = vmatmul.f32.gmra.mxu0 %v2048
        %v2164 = vpop.f32.mrf.mxu0
        %v2165 = vadd.f32 %v2035, %v2164
        %2166 = vmatmul.f32.gmra.mxu0 %v2051
        %v2167 = vpop.f32.mrf.mxu0
        %v2168 = vadd.f32 %v2035, %v2167
        %2169 = vmatmul.f32.gmra.mxu0 %v2054
        %v2170 = vpop.f32.mrf.mxu0
        %v2171 = vadd.f32 %v2035, %v2170
        %2172 = vmatmul.f32.gmra.mxu0 %v2057
        %v2173 = vpop.f32.mrf.mxu0
        %v2174 = vadd.f32 %v2035, %v2173
        %2175 = vmatmul.f32.gmra.mxu0 %v2060
        %v2176 = vpop.f32.mrf.mxu0
        %v2177 = vadd.f32 %v2035, %v2176
        %2178 = vmatmul.f32.gmra.mxu0 %v2063
        %v2179 = vpop.f32.mrf.mxu0
        %v2180 = vadd.f32 %v2035, %v2179
        %2181 = vmatmul.f32.gmra.mxu0 %v2066
        %v2182 = vpop.f32.mrf.mxu0
        %v2183 = vadd.f32 %v2035, %v2182
        %2184 = vmatmul.f32.gmra.mxu0 %v2069
        %v2185 = vpop.f32.mrf.mxu0
        %v2186 = vadd.f32 %v2035, %v2185
        %2187 = vmatmul.f32.gmra.mxu0 %v2072
        %v2188 = vpop.f32.mrf.mxu0
        %v2189 = vadd.f32 %v2035, %v2188
        %2190 = vmatmul.f32.gmra.mxu0 %v2075
        %v2191 = vpop.f32.mrf.mxu0
        %v2192 = vadd.f32 %v2035, %v2191
        %2193 = vmatmul.f32.gmra.mxu0 %v2078
        %v2194 = vpop.f32.mrf.mxu0
        %v2195 = vadd.f32 %v2035, %v2194
        %2196 = vmatmul.f32.gmra.mxu0 %v2081
        %v2197 = vpop.f32.mrf.mxu0
        %v2198 = vadd.f32 %v2035, %v2197
        %2199 = vmatmul.f32.gmra.mxu0 %v2084
        %v2200 = vpop.f32.mrf.mxu0
        %v2201 = vadd.f32 %v2035, %v2200
        %2202 = vmatmul.f32.gmra.mxu0 %v2087
        %v2203 = vpop.f32.mrf.mxu0
        %v2204 = vadd.f32 %v2035, %v2203
        %2205 = vmatmul.f32.gmra.mxu0 %v2090
        %v2206 = vpop.f32.mrf.mxu0
        %v2207 = vadd.f32 %v2035, %v2206
        %2208 = vmatmul.f32.gmra.mxu0 %v2093
        %v2209 = vpop.f32.mrf.mxu0
        %v2210 = vadd.f32 %v2035, %v2209
        %2211 = vmatmul.f32.gmra.mxu0 %v2096
        %v2212 = vpop.f32.mrf.mxu0
        %v2213 = vadd.f32 %v2035, %v2212
        %2214 = vmatmul.f32.gmra.mxu0 %v2099
        %v2215 = vpop.f32.mrf.mxu0
        %v2216 = vadd.f32 %v2035, %v2215
        %2217 = vmatmul.f32.gmra.mxu0 %v2102
        %v2218 = vpop.f32.mrf.mxu0
        %v2219 = vadd.f32 %v2035, %v2218
        %2220 = vmatmul.f32.gmra.mxu0 %v2105
        %v2221 = vpop.f32.mrf.mxu0
        %v2222 = vadd.f32 %v2035, %v2221
        %2223 = vmatmul.f32.gmra.mxu0 %v2108
        %v2224 = vpop.f32.mrf.mxu0
        %v2225 = vadd.f32 %v2035, %v2224
        %2226 = vmatmul.f32.gmra.mxu0 %v2111
        %v2227 = vpop.f32.mrf.mxu0
        %v2228 = vadd.f32 %v2035, %v2227
        %2229 = vmatmul.f32.gmra.mxu0 %v2114
        %v2230 = vpop.f32.mrf.mxu0
        %v2231 = vadd.f32 %v2035, %v2230
        %2232 = vmatmul.f32.gmra.mxu0 %v2117
        %v2233 = vpop.f32.mrf.mxu0
        %v2234 = vadd.f32 %v2035, %v2233
        %2235 = vmatmul.f32.gmra.mxu0 %v2120
        %v2236 = vpop.f32.mrf.mxu0
        %v2237 = vadd.f32 %v2035, %v2236
        %2238 = vmatmul.f32.gmra.mxu0 %v2123
        %v2239 = vpop.f32.mrf.mxu0
        %v2240 = vadd.f32 %v2035, %v2239
        %2241 = vmatmul.f32.gmra.mxu0 %v2126
        %v2242 = vpop.f32.mrf.mxu0
        %v2243 = vadd.f32 %v2035, %v2242
        %2244 = vmatmul.f32.gmra.mxu0 %v2129
        %v2245 = vpop.f32.mrf.mxu0
        %v2246 = vadd.f32 %v2035, %v2245
        %2247 = vmatmul.f32.gmra.mxu0 %v2132
        %v2248 = vpop.f32.mrf.mxu0
        %v2249 = vadd.f32 %v2035, %v2248
        %2250 = vdwg.mxu0
        %v2251 = vmax.f32 %v2156, 0.0
        %v2252 = vmax.f32 %v2159, 0.0
        %v2253 = vmax.f32 %v2162, 0.0
        %v2254 = vmax.f32 %v2165, 0.0
        %v2255 = vmax.f32 %v2168, 0.0
        %v2256 = vmax.f32 %v2171, 0.0
        %v2257 = vmax.f32 %v2174, 0.0
        %v2258 = vmax.f32 %v2177, 0.0
        %v2259 = vmax.f32 %v2180, 0.0
        %v2260 = vmax.f32 %v2183, 0.0
        %v2261 = vmax.f32 %v2186, 0.0
        %v2262 = vmax.f32 %v2189, 0.0
        %v2263 = vmax.f32 %v2192, 0.0
        %v2264 = vmax.f32 %v2195, 0.0
        %v2265 = vmax.f32 %v2198, 0.0
        %v2266 = vmax.f32 %v2201, 0.0
        %v2267 = vmax.f32 %v2204, 0.0
        %v2268 = vmax.f32 %v2207, 0.0
        %v2269 = vmax.f32 %v2210, 0.0
        %v2270 = vmax.f32 %v2213, 0.0
        %v2271 = vmax.f32 %v2216, 0.0
        %v2272 = vmax.f32 %v2219, 0.0
        %v2273 = vmax.f32 %v2222, 0.0
        %v2274 = vmax.f32 %v2225, 0.0
        %v2275 = vmax.f32 %v2228, 0.0
        %v2276 = vmax.f32 %v2231, 0.0
        %v2277 = vmax.f32 %v2234, 0.0
        %v2278 = vmax.f32 %v2237, 0.0
        %v2279 = vmax.f32 %v2240, 0.0
        %v2280 = vmax.f32 %v2243, 0.0
        %v2281 = vmax.f32 %v2246, 0.0
        %v2282 = vmax.f32 %v2249, 0.0
        %s2283 = scalar_lea.vmem [#allocation3], 24
        %2284 = vst.msk [vmem:[%s2283 + $0x1] sm:$0xff] %vm332, %v2251
        %2285 = vst.msk [vmem:[%s2283 + $0x9] sm:$0xff] %vm332, %v2252
        %2286 = vst.msk [vmem:[%s2283 + $0x19] sm:$0xff] %vm332, %v2253
        %2287 = vst.msk [vmem:[%s2283 + $0x21] sm:$0xff] %vm332, %v2254
        %2288 = vst.msk [vmem:[%s2283 + $0x31] sm:$0xff] %vm332, %v2255
        %2289 = vst.msk [vmem:[%s2283 + $0x39] sm:$0xff] %vm332, %v2256
        %2290 = vst.msk [vmem:[%s2283 + $0x49] sm:$0xff] %vm332, %v2257
        %2291 = vst.msk [vmem:[%s2283 + $0x51] sm:$0xff] %vm332, %v2258
        %2292 = vst.msk [vmem:[%s2283 + $0x61] sm:$0xff] %vm332, %v2259
        %2293 = vst.msk [vmem:[%s2283 + $0x69] sm:$0xff] %vm332, %v2260
        %2294 = vst.msk [vmem:[%s2283 + $0x79] sm:$0xff] %vm332, %v2261
        %2295 = vst.msk [vmem:[%s2283 + $0x81] sm:$0xff] %vm332, %v2262
        %2296 = vst.msk [vmem:[%s2283 + $0x91] sm:$0xff] %vm332, %v2263
        %2297 = vst.msk [vmem:[%s2283 + $0x99] sm:$0xff] %vm332, %v2264
        %2298 = vst.msk [vmem:[%s2283 + $0xa9] sm:$0xff] %vm332, %v2265
        %2299 = vst.msk [vmem:[%s2283 + $0xb1] sm:$0xff] %vm332, %v2266
        %2300 = vst.msk [vmem:[%s2283 + $0xc1] sm:$0xff] %vm332, %v2267
        %2301 = vst.msk [vmem:[%s2283 + $0xc9] sm:$0xff] %vm332, %v2268
        %2302 = vst.msk [vmem:[%s2283 + $0xd9] sm:$0xff] %vm332, %v2269
        %2303 = vst.msk [vmem:[%s2283 + $0xe1] sm:$0xff] %vm332, %v2270
        %2304 = vst.msk [vmem:[%s2283 + $0xf1] sm:$0xff] %vm332, %v2271
        %2305 = vst.msk [vmem:[%s2283 + $0xf9] sm:$0xff] %vm332, %v2272
        %2306 = vst.msk [vmem:[%s2283 + $0x109] sm:$0xff] %vm332, %v2273
        %2307 = vst.msk [vmem:[%s2283 + $0x111] sm:$0xff] %vm332, %v2274
        %2308 = vst.msk [vmem:[%s2283 + $0x121] sm:$0xff] %vm332, %v2275
        %2309 = vst.msk [vmem:[%s2283 + $0x129] sm:$0xff] %vm332, %v2276
        %2310 = vst.msk [vmem:[%s2283 + $0x139] sm:$0xff] %vm332, %v2277
        %2311 = vst.msk [vmem:[%s2283 + $0x141] sm:$0xff] %vm332, %v2278
        %2312 = vst.msk [vmem:[%s2283 + $0x151] sm:$0xff] %vm332, %v2279
        %2313 = vst.msk [vmem:[%s2283 + $0x159] sm:$0xff] %vm332, %v2280
        %2314 = vst.msk [vmem:[%s2283 + $0x169] sm:$0xff] %vm332, %v2281
        %2315 = vst.msk [vmem:[%s2283 + $0x171] sm:$0xff] %vm332, %v2282
        %v2316 = vld [vmem:[#allocation3] sm:$0xff]
        %v2317 = vld [vmem:[#allocation3 + $0x8] sm:$0xff]
        %v2318 = vld [vmem:[#allocation3 + $0x18] sm:$0xff]
        %v2319 = vld [vmem:[#allocation3 + $0x20] sm:$0xff]
        %v2320 = vld [vmem:[#allocation3 + $0x30] sm:$0xff]
        %v2321 = vld [vmem:[#allocation3 + $0x38] sm:$0xff]
        %v2322 = vld [vmem:[#allocation3 + $0x48] sm:$0xff]
        %v2323 = vld [vmem:[#allocation3 + $0x50] sm:$0xff]
        %v2324 = vld [vmem:[#allocation3 + $0x60] sm:$0xff]
        %v2325 = vld [vmem:[#allocation3 + $0x68] sm:$0xff]
        %v2326 = vld [vmem:[#allocation3 + $0x78] sm:$0xff]
        %v2327 = vld [vmem:[#allocation3 + $0x80] sm:$0xff]
        %v2328 = vld [vmem:[#allocation3 + $0x90] sm:$0xff]
        %v2329 = vld [vmem:[#allocation3 + $0x98] sm:$0xff]
        %v2330 = vld [vmem:[#allocation3 + $0xa8] sm:$0xff]
        %v2331 = vld [vmem:[#allocation3 + $0xb0] sm:$0xff]
        %v2332 = vld [vmem:[#allocation3 + $0xc0] sm:$0xff]
        %v2333 = vld [vmem:[#allocation3 + $0xc8] sm:$0xff]
        %v2334 = vld [vmem:[#allocation3 + $0xd8] sm:$0xff]
        %v2335 = vld [vmem:[#allocation3 + $0xe0] sm:$0xff]
        %v2336 = vld [vmem:[#allocation3 + $0xf0] sm:$0xff]
        %v2337 = vld [vmem:[#allocation3 + $0xf8] sm:$0xff]
        %v2338 = vld [vmem:[#allocation3 + $0x108] sm:$0xff]
        %v2339 = vld [vmem:[#allocation3 + $0x110] sm:$0xff]
        %v2340 = vld [vmem:[#allocation3 + $0x120] sm:$0xff]
        %v2341 = vld [vmem:[#allocation3 + $0x128] sm:$0xff]
        %v2342 = vld [vmem:[#allocation3 + $0x138] sm:$0xff]
        %v2343 = vld [vmem:[#allocation3 + $0x140] sm:$0xff]
        %v2344 = vld [vmem:[#allocation3 + $0x150] sm:$0xff]
        %v2345 = vld [vmem:[#allocation3 + $0x158] sm:$0xff]
        %v2346 = vld [vmem:[#allocation3 + $0x168] sm:$0xff]
        %v2347 = vld [vmem:[#allocation3 + $0x170] sm:$0xff]
        %v2348 = vld [vmem:[#allocation3 + $0x1] sm:$0xff]
        %v2349 = vld [vmem:[#allocation3 + $0x9] sm:$0xff]
        %v2350 = vld [vmem:[#allocation3 + $0x19] sm:$0xff]
        %v2351 = vld [vmem:[#allocation3 + $0x21] sm:$0xff]
        %v2352 = vld [vmem:[#allocation3 + $0x31] sm:$0xff]
        %v2353 = vld [vmem:[#allocation3 + $0x39] sm:$0xff]
        %v2354 = vld [vmem:[#allocation3 + $0x49] sm:$0xff]
        %v2355 = vld [vmem:[#allocation3 + $0x51] sm:$0xff]
        %v2356 = vld [vmem:[#allocation3 + $0x61] sm:$0xff]
        %v2357 = vld [vmem:[#allocation3 + $0x69] sm:$0xff]
        %v2358 = vld [vmem:[#allocation3 + $0x79] sm:$0xff]
        %v2359 = vld [vmem:[#allocation3 + $0x81] sm:$0xff]
        %v2360 = vld [vmem:[#allocation3 + $0x91] sm:$0xff]
        %v2361 = vld [vmem:[#allocation3 + $0x99] sm:$0xff]
        %v2362 = vld [vmem:[#allocation3 + $0xa9] sm:$0xff]
        %v2363 = vld [vmem:[#allocation3 + $0xb1] sm:$0xff]
        %v2364 = vld [vmem:[#allocation3 + $0xc1] sm:$0xff]
        %v2365 = vld [vmem:[#allocation3 + $0xc9] sm:$0xff]
        %v2366 = vld [vmem:[#allocation3 + $0xd9] sm:$0xff]
        %v2367 = vld [vmem:[#allocation3 + $0xe1] sm:$0xff]
        %v2368 = vld [vmem:[#allocation3 + $0xf1] sm:$0xff]
        %v2369 = vld [vmem:[#allocation3 + $0xf9] sm:$0xff]
        %v2370 = vld [vmem:[#allocation3 + $0x109] sm:$0xff]
        %v2371 = vld [vmem:[#allocation3 + $0x111] sm:$0xff]
        %v2372 = vld [vmem:[#allocation3 + $0x121] sm:$0xff]
        %v2373 = vld [vmem:[#allocation3 + $0x129] sm:$0xff]
        %v2374 = vld [vmem:[#allocation3 + $0x139] sm:$0xff]
        %v2375 = vld [vmem:[#allocation3 + $0x141] sm:$0xff]
        %v2376 = vld [vmem:[#allocation3 + $0x151] sm:$0xff]
        %v2377 = vld [vmem:[#allocation3 + $0x159] sm:$0xff]
        %v2378 = vld [vmem:[#allocation3 + $0x169] sm:$0xff]
        %v2379 = vld [vmem:[#allocation3 + $0x171] sm:$0xff]
        %v2380 = vld [vmem:[#allocation3 + $0x2] sm:$0xff]
        %v2381 = vld [vmem:[#allocation3 + $0xa] sm:$0xff]
        %v2382 = vld [vmem:[#allocation3 + $0x1a] sm:$0xff]
        %v2383 = vld [vmem:[#allocation3 + $0x22] sm:$0xff]
        %v2384 = vld [vmem:[#allocation3 + $0x32] sm:$0xff]
        %v2385 = vld [vmem:[#allocation3 + $0x3a] sm:$0xff]
        %v2386 = vld [vmem:[#allocation3 + $0x4a] sm:$0xff]
        %v2387 = vld [vmem:[#allocation3 + $0x52] sm:$0xff]
        %v2388 = vld [vmem:[#allocation3 + $0x62] sm:$0xff]
        %v2389 = vld [vmem:[#allocation3 + $0x6a] sm:$0xff]
        %v2390 = vld [vmem:[#allocation3 + $0x7a] sm:$0xff]
        %v2391 = vld [vmem:[#allocation3 + $0x82] sm:$0xff]
        %v2392 = vld [vmem:[#allocation3 + $0x92] sm:$0xff]
        %v2393 = vld [vmem:[#allocation3 + $0x9a] sm:$0xff]
        %v2394 = vld [vmem:[#allocation3 + $0xaa] sm:$0xff]
        %v2395 = vld [vmem:[#allocation3 + $0xb2] sm:$0xff]
        %v2396 = vld [vmem:[#allocation3 + $0xc2] sm:$0xff]
        %v2397 = vld [vmem:[#allocation3 + $0xca] sm:$0xff]
        %v2398 = vld [vmem:[#allocation3 + $0xda] sm:$0xff]
        %v2399 = vld [vmem:[#allocation3 + $0xe2] sm:$0xff]
        %v2400 = vld [vmem:[#allocation3 + $0xf2] sm:$0xff]
        %v2401 = vld [vmem:[#allocation3 + $0xfa] sm:$0xff]
        %v2402 = vld [vmem:[#allocation3 + $0x10a] sm:$0xff]
        %v2403 = vld [vmem:[#allocation3 + $0x112] sm:$0xff]
        %v2404 = vld [vmem:[#allocation3 + $0x122] sm:$0xff]
        %v2405 = vld [vmem:[#allocation3 + $0x12a] sm:$0xff]
        %v2406 = vld [vmem:[#allocation3 + $0x13a] sm:$0xff]
        %v2407 = vld [vmem:[#allocation3 + $0x142] sm:$0xff]
        %v2408 = vld [vmem:[#allocation3 + $0x152] sm:$0xff]
        %v2409 = vld [vmem:[#allocation3 + $0x15a] sm:$0xff]
        %v2410 = vld [vmem:[#allocation3 + $0x16a] sm:$0xff]
        %v2411 = vld [vmem:[#allocation3 + $0x172] sm:$0xff]
        %v2412 = vld [vmem:[%s2283] sm:$0xff]
        %v2413 = vld [vmem:[%s2283 + $0x8] sm:$0xff]
        %v2414 = vld [vmem:[%s2283 + $0x18] sm:$0xff]
        %v2415 = vld [vmem:[%s2283 + $0x20] sm:$0xff]
        %v2416 = vld [vmem:[%s2283 + $0x30] sm:$0xff]
        %v2417 = vld [vmem:[%s2283 + $0x38] sm:$0xff]
        %v2418 = vld [vmem:[%s2283 + $0x48] sm:$0xff]
        %v2419 = vld [vmem:[%s2283 + $0x50] sm:$0xff]
        %v2420 = vld [vmem:[%s2283 + $0x60] sm:$0xff]
        %v2421 = vld [vmem:[%s2283 + $0x68] sm:$0xff]
        %v2422 = vld [vmem:[%s2283 + $0x78] sm:$0xff]
        %v2423 = vld [vmem:[%s2283 + $0x80] sm:$0xff]
        %v2424 = vld [vmem:[%s2283 + $0x90] sm:$0xff]
        %v2425 = vld [vmem:[%s2283 + $0x98] sm:$0xff]
        %v2426 = vld [vmem:[%s2283 + $0xa8] sm:$0xff]
        %v2427 = vld [vmem:[%s2283 + $0xb0] sm:$0xff]
        %v2428 = vld [vmem:[%s2283 + $0xc0] sm:$0xff]
        %v2429 = vld [vmem:[%s2283 + $0xc8] sm:$0xff]
        %v2430 = vld [vmem:[%s2283 + $0xd8] sm:$0xff]
        %v2431 = vld [vmem:[%s2283 + $0xe0] sm:$0xff]
        %v2432 = vld [vmem:[%s2283 + $0xf0] sm:$0xff]
        %v2433 = vld [vmem:[%s2283 + $0xf8] sm:$0xff]
        %v2434 = vld [vmem:[%s2283 + $0x108] sm:$0xff]
        %v2435 = vld [vmem:[%s2283 + $0x110] sm:$0xff]
        %v2436 = vld [vmem:[%s2283 + $0x120] sm:$0xff]
        %v2437 = vld [vmem:[%s2283 + $0x128] sm:$0xff]
        %v2438 = vld [vmem:[%s2283 + $0x138] sm:$0xff]
        %v2439 = vld [vmem:[%s2283 + $0x140] sm:$0xff]
        %v2440 = vld [vmem:[%s2283 + $0x150] sm:$0xff]
        %v2441 = vld [vmem:[%s2283 + $0x158] sm:$0xff]
        %v2442 = vld [vmem:[%s2283 + $0x168] sm:$0xff]
        %v2443 = vld [vmem:[%s2283 + $0x170] sm:$0xff]
        %v2444 = vld [vmem:[%s2283 + $0x1] sm:$0xff]
        %v2445 = vld [vmem:[%s2283 + $0x9] sm:$0xff]
        %v2446 = vld [vmem:[%s2283 + $0x19] sm:$0xff]
        %v2447 = vld [vmem:[%s2283 + $0x21] sm:$0xff]
        %v2448 = vld [vmem:[%s2283 + $0x31] sm:$0xff]
        %v2449 = vld [vmem:[%s2283 + $0x39] sm:$0xff]
        %v2450 = vld [vmem:[%s2283 + $0x49] sm:$0xff]
        %v2451 = vld [vmem:[%s2283 + $0x51] sm:$0xff]
        %v2452 = vld [vmem:[%s2283 + $0x61] sm:$0xff]
        %v2453 = vld [vmem:[%s2283 + $0x69] sm:$0xff]
        %v2454 = vld [vmem:[%s2283 + $0x79] sm:$0xff]
        %v2455 = vld [vmem:[%s2283 + $0x81] sm:$0xff]
        %v2456 = vld [vmem:[%s2283 + $0x91] sm:$0xff]
        %v2457 = vld [vmem:[%s2283 + $0x99] sm:$0xff]
        %v2458 = vld [vmem:[%s2283 + $0xa9] sm:$0xff]
        %v2459 = vld [vmem:[%s2283 + $0xb1] sm:$0xff]
        %v2460 = vld [vmem:[%s2283 + $0xc1] sm:$0xff]
        %v2461 = vld [vmem:[%s2283 + $0xc9] sm:$0xff]
        %v2462 = vld [vmem:[%s2283 + $0xd9] sm:$0xff]
        %v2463 = vld [vmem:[%s2283 + $0xe1] sm:$0xff]
        %v2464 = vld [vmem:[%s2283 + $0xf1] sm:$0xff]
        %v2465 = vld [vmem:[%s2283 + $0xf9] sm:$0xff]
        %v2466 = vld [vmem:[%s2283 + $0x109] sm:$0xff]
        %v2467 = vld [vmem:[%s2283 + $0x111] sm:$0xff]
        %v2468 = vld [vmem:[%s2283 + $0x121] sm:$0xff]
        %v2469 = vld [vmem:[%s2283 + $0x129] sm:$0xff]
        %v2470 = vld [vmem:[%s2283 + $0x139] sm:$0xff]
        %v2471 = vld [vmem:[%s2283 + $0x141] sm:$0xff]
        %v2472 = vld [vmem:[%s2283 + $0x151] sm:$0xff]
        %v2473 = vld [vmem:[%s2283 + $0x159] sm:$0xff]
        %v2474 = vld [vmem:[%s2283 + $0x169] sm:$0xff]
        %v2475 = vld [vmem:[%s2283 + $0x171] sm:$0xff]
        %v2476 = vld [vmem:[%s2283 + $0x2] sm:$0xff]
        %v2477 = vld [vmem:[%s2283 + $0xa] sm:$0xff]
        %v2478 = vld [vmem:[%s2283 + $0x1a] sm:$0xff]
        %v2479 = vld [vmem:[%s2283 + $0x22] sm:$0xff]
        %v2480 = vld [vmem:[%s2283 + $0x32] sm:$0xff]
        %v2481 = vld [vmem:[%s2283 + $0x3a] sm:$0xff]
        %v2482 = vld [vmem:[%s2283 + $0x4a] sm:$0xff]
        %v2483 = vld [vmem:[%s2283 + $0x52] sm:$0xff]
        %v2484 = vld [vmem:[%s2283 + $0x62] sm:$0xff]
        %v2485 = vld [vmem:[%s2283 + $0x6a] sm:$0xff]
        %v2486 = vld [vmem:[%s2283 + $0x7a] sm:$0xff]
        %v2487 = vld [vmem:[%s2283 + $0x82] sm:$0xff]
        %v2488 = vld [vmem:[%s2283 + $0x92] sm:$0xff]
        %v2489 = vld [vmem:[%s2283 + $0x9a] sm:$0xff]
        %v2490 = vld [vmem:[%s2283 + $0xaa] sm:$0xff]
        %v2491 = vld [vmem:[%s2283 + $0xb2] sm:$0xff]
        %v2492 = vld [vmem:[%s2283 + $0xc2] sm:$0xff]
        %v2493 = vld [vmem:[%s2283 + $0xca] sm:$0xff]
        %v2494 = vld [vmem:[%s2283 + $0xda] sm:$0xff]
        %v2495 = vld [vmem:[%s2283 + $0xe2] sm:$0xff]
        %v2496 = vld [vmem:[%s2283 + $0xf2] sm:$0xff]
        %v2497 = vld [vmem:[%s2283 + $0xfa] sm:$0xff]
        %v2498 = vld [vmem:[%s2283 + $0x10a] sm:$0xff]
        %v2499 = vld [vmem:[%s2283 + $0x112] sm:$0xff]
        %v2500 = vld [vmem:[%s2283 + $0x122] sm:$0xff]
        %v2501 = vld [vmem:[%s2283 + $0x12a] sm:$0xff]
        %v2502 = vld [vmem:[%s2283 + $0x13a] sm:$0xff]
        %v2503 = vld [vmem:[%s2283 + $0x142] sm:$0xff]
        %v2504 = vld [vmem:[%s2283 + $0x152] sm:$0xff]
        %v2505 = vld [vmem:[%s2283 + $0x15a] sm:$0xff]
        %v2506 = vld [vmem:[%s2283 + $0x16a] sm:$0xff]
        %v2507 = vld [vmem:[%s2283 + $0x172] sm:$0xff]
        %s2508 = scalar_lea.vmem [#allocation3], 48
        %v2509 = vld [vmem:[%s2508] sm:$0xff]
        %v2510 = vld [vmem:[%s2508 + $0x8] sm:$0xff]
        %v2511 = vld [vmem:[%s2508 + $0x18] sm:$0xff]
        %v2512 = vld [vmem:[%s2508 + $0x20] sm:$0xff]
        %v2513 = vld [vmem:[%s2508 + $0x30] sm:$0xff]
        %v2514 = vld [vmem:[%s2508 + $0x38] sm:$0xff]
        %v2515 = vld [vmem:[%s2508 + $0x48] sm:$0xff]
        %v2516 = vld [vmem:[%s2508 + $0x50] sm:$0xff]
        %v2517 = vld [vmem:[%s2508 + $0x60] sm:$0xff]
        %v2518 = vld [vmem:[%s2508 + $0x68] sm:$0xff]
        %v2519 = vld [vmem:[%s2508 + $0x78] sm:$0xff]
        %v2520 = vld [vmem:[%s2508 + $0x80] sm:$0xff]
        %v2521 = vld [vmem:[%s2508 + $0x90] sm:$0xff]
        %v2522 = vld [vmem:[%s2508 + $0x98] sm:$0xff]
        %v2523 = vld [vmem:[%s2508 + $0xa8] sm:$0xff]
        %v2524 = vld [vmem:[%s2508 + $0xb0] sm:$0xff]
        %v2525 = vld [vmem:[%s2508 + $0xc0] sm:$0xff]
        %v2526 = vld [vmem:[%s2508 + $0xc8] sm:$0xff]
        %v2527 = vld [vmem:[%s2508 + $0xd8] sm:$0xff]
        %v2528 = vld [vmem:[%s2508 + $0xe0] sm:$0xff]
        %v2529 = vld [vmem:[%s2508 + $0xf0] sm:$0xff]
        %v2530 = vld [vmem:[%s2508 + $0xf8] sm:$0xff]
        %v2531 = vld [vmem:[%s2508 + $0x108] sm:$0xff]
        %v2532 = vld [vmem:[%s2508 + $0x110] sm:$0xff]
        %v2533 = vld [vmem:[%s2508 + $0x120] sm:$0xff]
        %v2534 = vld [vmem:[%s2508 + $0x128] sm:$0xff]
        %v2535 = vld [vmem:[%s2508 + $0x138] sm:$0xff]
        %v2536 = vld [vmem:[%s2508 + $0x140] sm:$0xff]
        %v2537 = vld [vmem:[%s2508 + $0x150] sm:$0xff]
        %v2538 = vld [vmem:[%s2508 + $0x158] sm:$0xff]
        %v2539 = vld [vmem:[%s2508 + $0x168] sm:$0xff]
        %v2540 = vld [vmem:[%s2508 + $0x170] sm:$0xff]
        %v2541 = vld [vmem:[%s2508 + $0x1] sm:$0xff]
        %v2542 = vld [vmem:[%s2508 + $0x9] sm:$0xff]
        %v2543 = vld [vmem:[%s2508 + $0x19] sm:$0xff]
        %v2544 = vld [vmem:[%s2508 + $0x21] sm:$0xff]
        %v2545 = vld [vmem:[%s2508 + $0x31] sm:$0xff]
        %v2546 = vld [vmem:[%s2508 + $0x39] sm:$0xff]
        %v2547 = vld [vmem:[%s2508 + $0x49] sm:$0xff]
        %v2548 = vld [vmem:[%s2508 + $0x51] sm:$0xff]
        %v2549 = vld [vmem:[%s2508 + $0x61] sm:$0xff]
        %v2550 = vld [vmem:[%s2508 + $0x69] sm:$0xff]
        %v2551 = vld [vmem:[%s2508 + $0x79] sm:$0xff]
        %v2552 = vld [vmem:[%s2508 + $0x81] sm:$0xff]
        %v2553 = vld [vmem:[%s2508 + $0x91] sm:$0xff]
        %v2554 = vld [vmem:[%s2508 + $0x99] sm:$0xff]
        %v2555 = vld [vmem:[%s2508 + $0xa9] sm:$0xff]
        %v2556 = vld [vmem:[%s2508 + $0xb1] sm:$0xff]
        %v2557 = vld [vmem:[%s2508 + $0xc1] sm:$0xff]
        %v2558 = vld [vmem:[%s2508 + $0xc9] sm:$0xff]
        %v2559 = vld [vmem:[%s2508 + $0xd9] sm:$0xff]
        %v2560 = vld [vmem:[%s2508 + $0xe1] sm:$0xff]
        %v2561 = vld [vmem:[%s2508 + $0xf1] sm:$0xff]
        %v2562 = vld [vmem:[%s2508 + $0xf9] sm:$0xff]
        %v2563 = vld [vmem:[%s2508 + $0x109] sm:$0xff]
        %v2564 = vld [vmem:[%s2508 + $0x111] sm:$0xff]
        %v2565 = vld [vmem:[%s2508 + $0x121] sm:$0xff]
        %v2566 = vld [vmem:[%s2508 + $0x129] sm:$0xff]
        %v2567 = vld [vmem:[%s2508 + $0x139] sm:$0xff]
        %v2568 = vld [vmem:[%s2508 + $0x141] sm:$0xff]
        %v2569 = vld [vmem:[%s2508 + $0x151] sm:$0xff]
        %v2570 = vld [vmem:[%s2508 + $0x159] sm:$0xff]
        %v2571 = vld [vmem:[%s2508 + $0x169] sm:$0xff]
        %v2572 = vld [vmem:[%s2508 + $0x171] sm:$0xff]
        %v2573 = vld [vmem:[%s2508 + $0x2] sm:$0xff]
        %v2574 = vld [vmem:[%s2508 + $0xa] sm:$0xff]
        %v2575 = vld [vmem:[%s2508 + $0x1a] sm:$0xff]
        %v2576 = vld [vmem:[%s2508 + $0x22] sm:$0xff]
        %v2577 = vld [vmem:[%s2508 + $0x32] sm:$0xff]
        %v2578 = vld [vmem:[%s2508 + $0x3a] sm:$0xff]
        %v2579 = vld [vmem:[%s2508 + $0x4a] sm:$0xff]
        %v2580 = vld [vmem:[%s2508 + $0x52] sm:$0xff]
        %v2581 = vld [vmem:[%s2508 + $0x62] sm:$0xff]
        %v2582 = vld [vmem:[%s2508 + $0x6a] sm:$0xff]
        %v2583 = vld [vmem:[%s2508 + $0x7a] sm:$0xff]
        %v2584 = vld [vmem:[%s2508 + $0x82] sm:$0xff]
        %v2585 = vld [vmem:[%s2508 + $0x92] sm:$0xff]
        %v2586 = vld [vmem:[%s2508 + $0x9a] sm:$0xff]
        %v2587 = vld [vmem:[%s2508 + $0xaa] sm:$0xff]
        %v2588 = vld [vmem:[%s2508 + $0xb2] sm:$0xff]
        %v2589 = vld [vmem:[%s2508 + $0xc2] sm:$0xff]
        %v2590 = vld [vmem:[%s2508 + $0xca] sm:$0xff]
        %v2591 = vld [vmem:[%s2508 + $0xda] sm:$0xff]
        %v2592 = vld [vmem:[%s2508 + $0xe2] sm:$0xff]
        %v2593 = vld [vmem:[%s2508 + $0xf2] sm:$0xff]
        %v2594 = vld [vmem:[%s2508 + $0xfa] sm:$0xff]
        %v2595 = vld [vmem:[%s2508 + $0x10a] sm:$0xff]
        %v2596 = vld [vmem:[%s2508 + $0x112] sm:$0xff]
        %v2597 = vld [vmem:[%s2508 + $0x122] sm:$0xff]
        %v2598 = vld [vmem:[%s2508 + $0x12a] sm:$0xff]
        %v2599 = vld [vmem:[%s2508 + $0x13a] sm:$0xff]
        %v2600 = vld [vmem:[%s2508 + $0x142] sm:$0xff]
        %v2601 = vld [vmem:[%s2508 + $0x152] sm:$0xff]
        %v2602 = vld [vmem:[%s2508 + $0x15a] sm:$0xff]
        %v2603 = vld [vmem:[%s2508 + $0x16a] sm:$0xff]
        %v2604 = vld [vmem:[%s2508 + $0x172] sm:$0xff]
        %2637 = vrot.lane.b32.xlu0 %v2348, 8
        %v2638 = vpop.permute.xlu0 %2637
        %2639 = vrot.lane.b32.xlu0 %v2349, 8
        %v2640 = vpop.permute.xlu0 %2639
        %2641 = vrot.lane.b32.xlu0 %v2350, 8
        %v2642 = vpop.permute.xlu0 %2641
        %2643 = vrot.lane.b32.xlu0 %v2351, 8
        %v2644 = vpop.permute.xlu0 %2643
        %2645 = vrot.lane.b32.xlu0 %v2352, 8
        %v2646 = vpop.permute.xlu0 %2645
        %2647 = vrot.lane.b32.xlu0 %v2353, 8
        %v2648 = vpop.permute.xlu0 %2647
        %2649 = vrot.lane.b32.xlu0 %v2354, 8
        %v2650 = vpop.permute.xlu0 %2649
        %2651 = vrot.lane.b32.xlu0 %v2355, 8
        %v2652 = vpop.permute.xlu0 %2651
        %2653 = vrot.lane.b32.xlu0 %v2356, 8
        %v2654 = vpop.permute.xlu0 %2653
        %2655 = vrot.lane.b32.xlu0 %v2357, 8
        %v2656 = vpop.permute.xlu0 %2655
        %2657 = vrot.lane.b32.xlu0 %v2358, 8
        %v2658 = vpop.permute.xlu0 %2657
        %2659 = vrot.lane.b32.xlu0 %v2359, 8
        %v2660 = vpop.permute.xlu0 %2659
        %2661 = vrot.lane.b32.xlu0 %v2360, 8
        %v2662 = vpop.permute.xlu0 %2661
        %2663 = vrot.lane.b32.xlu0 %v2361, 8
        %v2664 = vpop.permute.xlu0 %2663
        %2665 = vrot.lane.b32.xlu0 %v2362, 8
        %v2666 = vpop.permute.xlu0 %2665
        %2667 = vrot.lane.b32.xlu0 %v2363, 8
        %v2668 = vpop.permute.xlu0 %2667
        %2669 = vrot.lane.b32.xlu0 %v2364, 8
        %v2670 = vpop.permute.xlu0 %2669
        %2671 = vrot.lane.b32.xlu0 %v2365, 8
        %v2672 = vpop.permute.xlu0 %2671
        %2673 = vrot.lane.b32.xlu0 %v2366, 8
        %v2674 = vpop.permute.xlu0 %2673
        %2675 = vrot.lane.b32.xlu0 %v2367, 8
        %v2676 = vpop.permute.xlu0 %2675
        %2677 = vrot.lane.b32.xlu0 %v2368, 8
        %v2678 = vpop.permute.xlu0 %2677
        %2679 = vrot.lane.b32.xlu0 %v2369, 8
        %v2680 = vpop.permute.xlu0 %2679
        %2681 = vrot.lane.b32.xlu0 %v2370, 8
        %v2682 = vpop.permute.xlu0 %2681
        %2683 = vrot.lane.b32.xlu0 %v2371, 8
        %v2684 = vpop.permute.xlu0 %2683
        %2685 = vrot.lane.b32.xlu0 %v2372, 8
        %v2686 = vpop.permute.xlu0 %2685
        %2687 = vrot.lane.b32.xlu0 %v2373, 8
        %v2688 = vpop.permute.xlu0 %2687
        %2689 = vrot.lane.b32.xlu0 %v2374, 8
        %v2690 = vpop.permute.xlu0 %2689
        %2691 = vrot.lane.b32.xlu0 %v2375, 8
        %v2692 = vpop.permute.xlu0 %2691
        %2693 = vrot.lane.b32.xlu0 %v2376, 8
        %v2694 = vpop.permute.xlu0 %2693
        %2695 = vrot.lane.b32.xlu0 %v2377, 8
        %v2696 = vpop.permute.xlu0 %2695
        %2697 = vrot.lane.b32.xlu0 %v2378, 8
        %v2698 = vpop.permute.xlu0 %2697
        %2699 = vrot.lane.b32.xlu0 %v2379, 8
        %v2700 = vpop.permute.xlu0 %2699
        %2765 = vrot.lane.b32.xlu0 %v2380, 16
        %v2766 = vpop.permute.xlu0 %2765
        %2767 = vrot.lane.b32.xlu0 %v2381, 16
        %v2768 = vpop.permute.xlu0 %2767
        %2769 = vrot.lane.b32.xlu0 %v2382, 16
        %v2770 = vpop.permute.xlu0 %2769
        %2771 = vrot.lane.b32.xlu0 %v2383, 16
        %v2772 = vpop.permute.xlu0 %2771
        %2773 = vrot.lane.b32.xlu0 %v2384, 16
        %v2774 = vpop.permute.xlu0 %2773
        %2775 = vrot.lane.b32.xlu0 %v2385, 16
        %v2776 = vpop.permute.xlu0 %2775
        %2777 = vrot.lane.b32.xlu0 %v2386, 16
        %v2778 = vpop.permute.xlu0 %2777
        %2779 = vrot.lane.b32.xlu0 %v2387, 16
        %v2780 = vpop.permute.xlu0 %2779
        %2781 = vrot.lane.b32.xlu0 %v2388, 16
        %v2782 = vpop.permute.xlu0 %2781
        %2783 = vrot.lane.b32.xlu0 %v2389, 16
        %v2784 = vpop.permute.xlu0 %2783
        %2785 = vrot.lane.b32.xlu0 %v2390, 16
        %v2786 = vpop.permute.xlu0 %2785
        %2787 = vrot.lane.b32.xlu0 %v2391, 16
        %v2788 = vpop.permute.xlu0 %2787
        %2789 = vrot.lane.b32.xlu0 %v2392, 16
        %v2790 = vpop.permute.xlu0 %2789
        %2791 = vrot.lane.b32.xlu0 %v2393, 16
        %v2792 = vpop.permute.xlu0 %2791
        %2793 = vrot.lane.b32.xlu0 %v2394, 16
        %v2794 = vpop.permute.xlu0 %2793
        %2795 = vrot.lane.b32.xlu0 %v2395, 16
        %v2796 = vpop.permute.xlu0 %2795
        %2797 = vrot.lane.b32.xlu0 %v2396, 16
        %v2798 = vpop.permute.xlu0 %2797
        %2799 = vrot.lane.b32.xlu0 %v2397, 16
        %v2800 = vpop.permute.xlu0 %2799
        %2801 = vrot.lane.b32.xlu0 %v2398, 16
        %v2802 = vpop.permute.xlu0 %2801
        %2803 = vrot.lane.b32.xlu0 %v2399, 16
        %v2804 = vpop.permute.xlu0 %2803
        %2805 = vrot.lane.b32.xlu0 %v2400, 16
        %v2806 = vpop.permute.xlu0 %2805
        %2807 = vrot.lane.b32.xlu0 %v2401, 16
        %v2808 = vpop.permute.xlu0 %2807
        %2809 = vrot.lane.b32.xlu0 %v2402, 16
        %v2810 = vpop.permute.xlu0 %2809
        %2811 = vrot.lane.b32.xlu0 %v2403, 16
        %v2812 = vpop.permute.xlu0 %2811
        %2813 = vrot.lane.b32.xlu0 %v2404, 16
        %v2814 = vpop.permute.xlu0 %2813
        %2815 = vrot.lane.b32.xlu0 %v2405, 16
        %v2816 = vpop.permute.xlu0 %2815
        %2817 = vrot.lane.b32.xlu0 %v2406, 16
        %v2818 = vpop.permute.xlu0 %2817
        %2819 = vrot.lane.b32.xlu0 %v2407, 16
        %v2820 = vpop.permute.xlu0 %2819
        %2821 = vrot.lane.b32.xlu0 %v2408, 16
        %v2822 = vpop.permute.xlu0 %2821
        %2823 = vrot.lane.b32.xlu0 %v2409, 16
        %v2824 = vpop.permute.xlu0 %2823
        %2825 = vrot.lane.b32.xlu0 %v2410, 16
        %v2826 = vpop.permute.xlu0 %2825
        %2827 = vrot.lane.b32.xlu0 %v2411, 16
        %v2828 = vpop.permute.xlu0 %2827
        %2893 = vrot.lane.b32.xlu0 %v2412, 24
        %v2894 = vpop.permute.xlu0 %2893
        %2895 = vrot.lane.b32.xlu0 %v2413, 24
        %v2896 = vpop.permute.xlu0 %2895
        %2897 = vrot.lane.b32.xlu0 %v2414, 24
        %v2898 = vpop.permute.xlu0 %2897
        %2899 = vrot.lane.b32.xlu0 %v2415, 24
        %v2900 = vpop.permute.xlu0 %2899
        %2901 = vrot.lane.b32.xlu0 %v2416, 24
        %v2902 = vpop.permute.xlu0 %2901
        %2903 = vrot.lane.b32.xlu0 %v2417, 24
        %v2904 = vpop.permute.xlu0 %2903
        %2905 = vrot.lane.b32.xlu0 %v2418, 24
        %v2906 = vpop.permute.xlu0 %2905
        %2907 = vrot.lane.b32.xlu0 %v2419, 24
        %v2908 = vpop.permute.xlu0 %2907
        %2909 = vrot.lane.b32.xlu0 %v2420, 24
        %v2910 = vpop.permute.xlu0 %2909
        %2911 = vrot.lane.b32.xlu0 %v2421, 24
        %v2912 = vpop.permute.xlu0 %2911
        %2913 = vrot.lane.b32.xlu0 %v2422, 24
        %v2914 = vpop.permute.xlu0 %2913
        %2915 = vrot.lane.b32.xlu0 %v2423, 24
        %v2916 = vpop.permute.xlu0 %2915
        %2917 = vrot.lane.b32.xlu0 %v2424, 24
        %v2918 = vpop.permute.xlu0 %2917
        %2919 = vrot.lane.b32.xlu0 %v2425, 24
        %v2920 = vpop.permute.xlu0 %2919
        %2921 = vrot.lane.b32.xlu0 %v2426, 24
        %v2922 = vpop.permute.xlu0 %2921
        %2923 = vrot.lane.b32.xlu0 %v2427, 24
        %v2924 = vpop.permute.xlu0 %2923
        %2925 = vrot.lane.b32.xlu0 %v2428, 24
        %v2926 = vpop.permute.xlu0 %2925
        %2927 = vrot.lane.b32.xlu0 %v2429, 24
        %v2928 = vpop.permute.xlu0 %2927
        %2929 = vrot.lane.b32.xlu0 %v2430, 24
        %v2930 = vpop.permute.xlu0 %2929
        %2931 = vrot.lane.b32.xlu0 %v2431, 24
        %v2932 = vpop.permute.xlu0 %2931
        %2933 = vrot.lane.b32.xlu0 %v2432, 24
        %v2934 = vpop.permute.xlu0 %2933
        %2935 = vrot.lane.b32.xlu0 %v2433, 24
        %v2936 = vpop.permute.xlu0 %2935
        %2937 = vrot.lane.b32.xlu0 %v2434, 24
        %v2938 = vpop.permute.xlu0 %2937
        %2939 = vrot.lane.b32.xlu0 %v2435, 24
        %v2940 = vpop.permute.xlu0 %2939
        %2941 = vrot.lane.b32.xlu0 %v2436, 24
        %v2942 = vpop.permute.xlu0 %2941
        %2943 = vrot.lane.b32.xlu0 %v2437, 24
        %v2944 = vpop.permute.xlu0 %2943
        %2945 = vrot.lane.b32.xlu0 %v2438, 24
        %v2946 = vpop.permute.xlu0 %2945
        %2947 = vrot.lane.b32.xlu0 %v2439, 24
        %v2948 = vpop.permute.xlu0 %2947
        %2949 = vrot.lane.b32.xlu0 %v2440, 24
        %v2950 = vpop.permute.xlu0 %2949
        %2951 = vrot.lane.b32.xlu0 %v2441, 24
        %v2952 = vpop.permute.xlu0 %2951
        %2953 = vrot.lane.b32.xlu0 %v2442, 24
        %v2954 = vpop.permute.xlu0 %2953
        %2955 = vrot.lane.b32.xlu0 %v2443, 24
        %v2956 = vpop.permute.xlu0 %2955
        %3021 = vrot.lane.b32.xlu0 %v2444, 32
        %v3022 = vpop.permute.xlu0 %3021
        %3023 = vrot.lane.b32.xlu0 %v2445, 32
        %v3024 = vpop.permute.xlu0 %3023
        %3025 = vrot.lane.b32.xlu0 %v2446, 32
        %v3026 = vpop.permute.xlu0 %3025
        %3027 = vrot.lane.b32.xlu0 %v2447, 32
        %v3028 = vpop.permute.xlu0 %3027
        %3029 = vrot.lane.b32.xlu0 %v2448, 32
        %v3030 = vpop.permute.xlu0 %3029
        %3031 = vrot.lane.b32.xlu0 %v2449, 32
        %v3032 = vpop.permute.xlu0 %3031
        %3033 = vrot.lane.b32.xlu0 %v2450, 32
        %v3034 = vpop.permute.xlu0 %3033
        %3035 = vrot.lane.b32.xlu0 %v2451, 32
        %v3036 = vpop.permute.xlu0 %3035
        %3037 = vrot.lane.b32.xlu0 %v2452, 32
        %v3038 = vpop.permute.xlu0 %3037
        %3039 = vrot.lane.b32.xlu0 %v2453, 32
        %v3040 = vpop.permute.xlu0 %3039
        %3041 = vrot.lane.b32.xlu0 %v2454, 32
        %v3042 = vpop.permute.xlu0 %3041
        %3043 = vrot.lane.b32.xlu0 %v2455, 32
        %v3044 = vpop.permute.xlu0 %3043
        %3045 = vrot.lane.b32.xlu0 %v2456, 32
        %v3046 = vpop.permute.xlu0 %3045
        %3047 = vrot.lane.b32.xlu0 %v2457, 32
        %v3048 = vpop.permute.xlu0 %3047
        %3049 = vrot.lane.b32.xlu0 %v2458, 32
        %v3050 = vpop.permute.xlu0 %3049
        %3051 = vrot.lane.b32.xlu0 %v2459, 32
        %v3052 = vpop.permute.xlu0 %3051
        %3053 = vrot.lane.b32.xlu0 %v2460, 32
        %v3054 = vpop.permute.xlu0 %3053
        %3055 = vrot.lane.b32.xlu0 %v2461, 32
        %v3056 = vpop.permute.xlu0 %3055
        %3057 = vrot.lane.b32.xlu0 %v2462, 32
        %v3058 = vpop.permute.xlu0 %3057
        %3059 = vrot.lane.b32.xlu0 %v2463, 32
        %v3060 = vpop.permute.xlu0 %3059
        %3061 = vrot.lane.b32.xlu0 %v2464, 32
        %v3062 = vpop.permute.xlu0 %3061
        %3063 = vrot.lane.b32.xlu0 %v2465, 32
        %v3064 = vpop.permute.xlu0 %3063
        %3065 = vrot.lane.b32.xlu0 %v2466, 32
        %v3066 = vpop.permute.xlu0 %3065
        %3067 = vrot.lane.b32.xlu0 %v2467, 32
        %v3068 = vpop.permute.xlu0 %3067
        %3069 = vrot.lane.b32.xlu0 %v2468, 32
        %v3070 = vpop.permute.xlu0 %3069
        %3071 = vrot.lane.b32.xlu0 %v2469, 32
        %v3072 = vpop.permute.xlu0 %3071
        %3073 = vrot.lane.b32.xlu0 %v2470, 32
        %v3074 = vpop.permute.xlu0 %3073
        %3075 = vrot.lane.b32.xlu0 %v2471, 32
        %v3076 = vpop.permute.xlu0 %3075
        %3077 = vrot.lane.b32.xlu0 %v2472, 32
        %v3078 = vpop.permute.xlu0 %3077
        %3079 = vrot.lane.b32.xlu0 %v2473, 32
        %v3080 = vpop.permute.xlu0 %3079
        %3081 = vrot.lane.b32.xlu0 %v2474, 32
        %v3082 = vpop.permute.xlu0 %3081
        %3083 = vrot.lane.b32.xlu0 %v2475, 32
        %v3084 = vpop.permute.xlu0 %3083
        %3149 = vrot.lane.b32.xlu0 %v2476, 40
        %v3150 = vpop.permute.xlu0 %3149
        %3151 = vrot.lane.b32.xlu0 %v2477, 40
        %v3152 = vpop.permute.xlu0 %3151
        %3153 = vrot.lane.b32.xlu0 %v2478, 40
        %v3154 = vpop.permute.xlu0 %3153
        %3155 = vrot.lane.b32.xlu0 %v2479, 40
        %v3156 = vpop.permute.xlu0 %3155
        %3157 = vrot.lane.b32.xlu0 %v2480, 40
        %v3158 = vpop.permute.xlu0 %3157
        %3159 = vrot.lane.b32.xlu0 %v2481, 40
        %v3160 = vpop.permute.xlu0 %3159
        %3161 = vrot.lane.b32.xlu0 %v2482, 40
        %v3162 = vpop.permute.xlu0 %3161
        %3163 = vrot.lane.b32.xlu0 %v2483, 40
        %v3164 = vpop.permute.xlu0 %3163
        %3165 = vrot.lane.b32.xlu0 %v2484, 40
        %v3166 = vpop.permute.xlu0 %3165
        %3167 = vrot.lane.b32.xlu0 %v2485, 40
        %v3168 = vpop.permute.xlu0 %3167
        %3169 = vrot.lane.b32.xlu0 %v2486, 40
        %v3170 = vpop.permute.xlu0 %3169
        %3171 = vrot.lane.b32.xlu0 %v2487, 40
        %v3172 = vpop.permute.xlu0 %3171
        %3173 = vrot.lane.b32.xlu0 %v2488, 40
        %v3174 = vpop.permute.xlu0 %3173
        %3175 = vrot.lane.b32.xlu0 %v2489, 40
        %v3176 = vpop.permute.xlu0 %3175
        %3177 = vrot.lane.b32.xlu0 %v2490, 40
        %v3178 = vpop.permute.xlu0 %3177
        %3179 = vrot.lane.b32.xlu0 %v2491, 40
        %v3180 = vpop.permute.xlu0 %3179
        %3181 = vrot.lane.b32.xlu0 %v2492, 40
        %v3182 = vpop.permute.xlu0 %3181
        %3183 = vrot.lane.b32.xlu0 %v2493, 40
        %v3184 = vpop.permute.xlu0 %3183
        %3185 = vrot.lane.b32.xlu0 %v2494, 40
        %v3186 = vpop.permute.xlu0 %3185
        %3187 = vrot.lane.b32.xlu0 %v2495, 40
        %v3188 = vpop.permute.xlu0 %3187
        %3189 = vrot.lane.b32.xlu0 %v2496, 40
        %v3190 = vpop.permute.xlu0 %3189
        %3191 = vrot.lane.b32.xlu0 %v2497, 40
        %v3192 = vpop.permute.xlu0 %3191
        %3193 = vrot.lane.b32.xlu0 %v2498, 40
        %v3194 = vpop.permute.xlu0 %3193
        %3195 = vrot.lane.b32.xlu0 %v2499, 40
        %v3196 = vpop.permute.xlu0 %3195
        %3197 = vrot.lane.b32.xlu0 %v2500, 40
        %v3198 = vpop.permute.xlu0 %3197
        %3199 = vrot.lane.b32.xlu0 %v2501, 40
        %v3200 = vpop.permute.xlu0 %3199
        %3201 = vrot.lane.b32.xlu0 %v2502, 40
        %v3202 = vpop.permute.xlu0 %3201
        %3203 = vrot.lane.b32.xlu0 %v2503, 40
        %v3204 = vpop.permute.xlu0 %3203
        %3205 = vrot.lane.b32.xlu0 %v2504, 40
        %v3206 = vpop.permute.xlu0 %3205
        %3207 = vrot.lane.b32.xlu0 %v2505, 40
        %v3208 = vpop.permute.xlu0 %3207
        %3209 = vrot.lane.b32.xlu0 %v2506, 40
        %v3210 = vpop.permute.xlu0 %3209
        %3211 = vrot.lane.b32.xlu0 %v2507, 40
        %v3212 = vpop.permute.xlu0 %3211
        %3277 = vrot.lane.b32.xlu0 %v2509, 48
        %v3278 = vpop.permute.xlu0 %3277
        %3279 = vrot.lane.b32.xlu0 %v2510, 48
        %v3280 = vpop.permute.xlu0 %3279
        %3281 = vrot.lane.b32.xlu0 %v2511, 48
        %v3282 = vpop.permute.xlu0 %3281
        %3283 = vrot.lane.b32.xlu0 %v2512, 48
        %v3284 = vpop.permute.xlu0 %3283
        %3285 = vrot.lane.b32.xlu0 %v2513, 48
        %v3286 = vpop.permute.xlu0 %3285
        %3287 = vrot.lane.b32.xlu0 %v2514, 48
        %v3288 = vpop.permute.xlu0 %3287
        %3289 = vrot.lane.b32.xlu0 %v2515, 48
        %v3290 = vpop.permute.xlu0 %3289
        %3291 = vrot.lane.b32.xlu0 %v2516, 48
        %v3292 = vpop.permute.xlu0 %3291
        %3293 = vrot.lane.b32.xlu0 %v2517, 48
        %v3294 = vpop.permute.xlu0 %3293
        %3295 = vrot.lane.b32.xlu0 %v2518, 48
        %v3296 = vpop.permute.xlu0 %3295
        %3297 = vrot.lane.b32.xlu0 %v2519, 48
        %v3298 = vpop.permute.xlu0 %3297
        %3299 = vrot.lane.b32.xlu0 %v2520, 48
        %v3300 = vpop.permute.xlu0 %3299
        %3301 = vrot.lane.b32.xlu0 %v2521, 48
        %v3302 = vpop.permute.xlu0 %3301
        %3303 = vrot.lane.b32.xlu0 %v2522, 48
        %v3304 = vpop.permute.xlu0 %3303
        %3305 = vrot.lane.b32.xlu0 %v2523, 48
        %v3306 = vpop.permute.xlu0 %3305
        %3307 = vrot.lane.b32.xlu0 %v2524, 48
        %v3308 = vpop.permute.xlu0 %3307
        %3309 = vrot.lane.b32.xlu0 %v2525, 48
        %v3310 = vpop.permute.xlu0 %3309
        %3311 = vrot.lane.b32.xlu0 %v2526, 48
        %v3312 = vpop.permute.xlu0 %3311
        %3313 = vrot.lane.b32.xlu0 %v2527, 48
        %v3314 = vpop.permute.xlu0 %3313
        %3315 = vrot.lane.b32.xlu0 %v2528, 48
        %v3316 = vpop.permute.xlu0 %3315
        %3317 = vrot.lane.b32.xlu0 %v2529, 48
        %v3318 = vpop.permute.xlu0 %3317
        %3319 = vrot.lane.b32.xlu0 %v2530, 48
        %v3320 = vpop.permute.xlu0 %3319
        %3321 = vrot.lane.b32.xlu0 %v2531, 48
        %v3322 = vpop.permute.xlu0 %3321
        %3323 = vrot.lane.b32.xlu0 %v2532, 48
        %v3324 = vpop.permute.xlu0 %3323
        %3325 = vrot.lane.b32.xlu0 %v2533, 48
        %v3326 = vpop.permute.xlu0 %3325
        %3327 = vrot.lane.b32.xlu0 %v2534, 48
        %v3328 = vpop.permute.xlu0 %3327
        %3329 = vrot.lane.b32.xlu0 %v2535, 48
        %v3330 = vpop.permute.xlu0 %3329
        %3331 = vrot.lane.b32.xlu0 %v2536, 48
        %v3332 = vpop.permute.xlu0 %3331
        %3333 = vrot.lane.b32.xlu0 %v2537, 48
        %v3334 = vpop.permute.xlu0 %3333
        %3335 = vrot.lane.b32.xlu0 %v2538, 48
        %v3336 = vpop.permute.xlu0 %3335
        %3337 = vrot.lane.b32.xlu0 %v2539, 48
        %v3338 = vpop.permute.xlu0 %3337
        %3339 = vrot.lane.b32.xlu0 %v2540, 48
        %v3340 = vpop.permute.xlu0 %3339
        %3405 = vrot.lane.b32.xlu0 %v2541, 56
        %v3406 = vpop.permute.xlu0 %3405
        %3407 = vrot.lane.b32.xlu0 %v2542, 56
        %v3408 = vpop.permute.xlu0 %3407
        %3409 = vrot.lane.b32.xlu0 %v2543, 56
        %v3410 = vpop.permute.xlu0 %3409
        %3411 = vrot.lane.b32.xlu0 %v2544, 56
        %v3412 = vpop.permute.xlu0 %3411
        %3413 = vrot.lane.b32.xlu0 %v2545, 56
        %v3414 = vpop.permute.xlu0 %3413
        %3415 = vrot.lane.b32.xlu0 %v2546, 56
        %v3416 = vpop.permute.xlu0 %3415
        %3417 = vrot.lane.b32.xlu0 %v2547, 56
        %v3418 = vpop.permute.xlu0 %3417
        %3419 = vrot.lane.b32.xlu0 %v2548, 56
        %v3420 = vpop.permute.xlu0 %3419
        %3421 = vrot.lane.b32.xlu0 %v2549, 56
        %v3422 = vpop.permute.xlu0 %3421
        %3423 = vrot.lane.b32.xlu0 %v2550, 56
        %v3424 = vpop.permute.xlu0 %3423
        %3425 = vrot.lane.b32.xlu0 %v2551, 56
        %v3426 = vpop.permute.xlu0 %3425
        %3427 = vrot.lane.b32.xlu0 %v2552, 56
        %v3428 = vpop.permute.xlu0 %3427
        %3429 = vrot.lane.b32.xlu0 %v2553, 56
        %v3430 = vpop.permute.xlu0 %3429
        %3431 = vrot.lane.b32.xlu0 %v2554, 56
        %v3432 = vpop.permute.xlu0 %3431
        %3433 = vrot.lane.b32.xlu0 %v2555, 56
        %v3434 = vpop.permute.xlu0 %3433
        %3435 = vrot.lane.b32.xlu0 %v2556, 56
        %v3436 = vpop.permute.xlu0 %3435
        %3437 = vrot.lane.b32.xlu0 %v2557, 56
        %v3438 = vpop.permute.xlu0 %3437
        %3439 = vrot.lane.b32.xlu0 %v2558, 56
        %v3440 = vpop.permute.xlu0 %3439
        %3441 = vrot.lane.b32.xlu0 %v2559, 56
        %v3442 = vpop.permute.xlu0 %3441
        %3443 = vrot.lane.b32.xlu0 %v2560, 56
        %v3444 = vpop.permute.xlu0 %3443
        %3445 = vrot.lane.b32.xlu0 %v2561, 56
        %v3446 = vpop.permute.xlu0 %3445
        %3447 = vrot.lane.b32.xlu0 %v2562, 56
        %v3448 = vpop.permute.xlu0 %3447
        %3449 = vrot.lane.b32.xlu0 %v2563, 56
        %v3450 = vpop.permute.xlu0 %3449
        %3451 = vrot.lane.b32.xlu0 %v2564, 56
        %v3452 = vpop.permute.xlu0 %3451
        %3453 = vrot.lane.b32.xlu0 %v2565, 56
        %v3454 = vpop.permute.xlu0 %3453
        %3455 = vrot.lane.b32.xlu0 %v2566, 56
        %v3456 = vpop.permute.xlu0 %3455
        %3457 = vrot.lane.b32.xlu0 %v2567, 56
        %v3458 = vpop.permute.xlu0 %3457
        %3459 = vrot.lane.b32.xlu0 %v2568, 56
        %v3460 = vpop.permute.xlu0 %3459
        %3461 = vrot.lane.b32.xlu0 %v2569, 56
        %v3462 = vpop.permute.xlu0 %3461
        %3463 = vrot.lane.b32.xlu0 %v2570, 56
        %v3464 = vpop.permute.xlu0 %3463
        %3465 = vrot.lane.b32.xlu0 %v2571, 56
        %v3466 = vpop.permute.xlu0 %3465
        %3467 = vrot.lane.b32.xlu0 %v2572, 56
        %v3468 = vpop.permute.xlu0 %3467
        %3533 = vrot.lane.b32.xlu0 %v2573, 64
        %v3534 = vpop.permute.xlu0 %3533
        %3535 = vrot.lane.b32.xlu0 %v2574, 64
        %v3536 = vpop.permute.xlu0 %3535
        %3537 = vrot.lane.b32.xlu0 %v2575, 64
        %v3538 = vpop.permute.xlu0 %3537
        %3539 = vrot.lane.b32.xlu0 %v2576, 64
        %v3540 = vpop.permute.xlu0 %3539
        %3541 = vrot.lane.b32.xlu0 %v2577, 64
        %v3542 = vpop.permute.xlu0 %3541
        %3543 = vrot.lane.b32.xlu0 %v2578, 64
        %v3544 = vpop.permute.xlu0 %3543
        %3545 = vrot.lane.b32.xlu0 %v2579, 64
        %v3546 = vpop.permute.xlu0 %3545
        %3547 = vrot.lane.b32.xlu0 %v2580, 64
        %v3548 = vpop.permute.xlu0 %3547
        %3549 = vrot.lane.b32.xlu0 %v2581, 64
        %v3550 = vpop.permute.xlu0 %3549
        %3551 = vrot.lane.b32.xlu0 %v2582, 64
        %v3552 = vpop.permute.xlu0 %3551
        %3553 = vrot.lane.b32.xlu0 %v2583, 64
        %v3554 = vpop.permute.xlu0 %3553
        %3555 = vrot.lane.b32.xlu0 %v2584, 64
        %v3556 = vpop.permute.xlu0 %3555
        %3557 = vrot.lane.b32.xlu0 %v2585, 64
        %v3558 = vpop.permute.xlu0 %3557
        %3559 = vrot.lane.b32.xlu0 %v2586, 64
        %v3560 = vpop.permute.xlu0 %3559
        %3561 = vrot.lane.b32.xlu0 %v2587, 64
        %v3562 = vpop.permute.xlu0 %3561
        %3563 = vrot.lane.b32.xlu0 %v2588, 64
        %v3564 = vpop.permute.xlu0 %3563
        %3565 = vrot.lane.b32.xlu0 %v2589, 64
        %v3566 = vpop.permute.xlu0 %3565
        %3567 = vrot.lane.b32.xlu0 %v2590, 64
        %v3568 = vpop.permute.xlu0 %3567
        %3569 = vrot.lane.b32.xlu0 %v2591, 64
        %v3570 = vpop.permute.xlu0 %3569
        %3571 = vrot.lane.b32.xlu0 %v2592, 64
        %v3572 = vpop.permute.xlu0 %3571
        %3573 = vrot.lane.b32.xlu0 %v2593, 64
        %v3574 = vpop.permute.xlu0 %3573
        %3575 = vrot.lane.b32.xlu0 %v2594, 64
        %v3576 = vpop.permute.xlu0 %3575
        %3577 = vrot.lane.b32.xlu0 %v2595, 64
        %v3578 = vpop.permute.xlu0 %3577
        %3579 = vrot.lane.b32.xlu0 %v2596, 64
        %v3580 = vpop.permute.xlu0 %3579
        %3581 = vrot.lane.b32.xlu0 %v2597, 64
        %v3582 = vpop.permute.xlu0 %3581
        %3583 = vrot.lane.b32.xlu0 %v2598, 64
        %v3584 = vpop.permute.xlu0 %3583
        %3585 = vrot.lane.b32.xlu0 %v2599, 64
        %v3586 = vpop.permute.xlu0 %3585
        %3587 = vrot.lane.b32.xlu0 %v2600, 64
        %v3588 = vpop.permute.xlu0 %3587
        %3589 = vrot.lane.b32.xlu0 %v2601, 64
        %v3590 = vpop.permute.xlu0 %3589
        %3591 = vrot.lane.b32.xlu0 %v2602, 64
        %v3592 = vpop.permute.xlu0 %3591
        %3593 = vrot.lane.b32.xlu0 %v2603, 64
        %v3594 = vpop.permute.xlu0 %3593
        %3595 = vrot.lane.b32.xlu0 %v2604, 64
        %v3596 = vpop.permute.xlu0 %3595
        %v3629 = vsel %vm332, %v2316, %v2638
        %v3630 = vsel %vm332, %v2317, %v2640
        %v3631 = vsel %vm332, %v2318, %v2642
        %v3632 = vsel %vm332, %v2319, %v2644
        %v3633 = vsel %vm332, %v2320, %v2646
        %v3634 = vsel %vm332, %v2321, %v2648
        %v3635 = vsel %vm332, %v2322, %v2650
        %v3636 = vsel %vm332, %v2323, %v2652
        %v3637 = vsel %vm332, %v2324, %v2654
        %v3638 = vsel %vm332, %v2325, %v2656
        %v3639 = vsel %vm332, %v2326, %v2658
        %v3640 = vsel %vm332, %v2327, %v2660
        %v3641 = vsel %vm332, %v2328, %v2662
        %v3642 = vsel %vm332, %v2329, %v2664
        %v3643 = vsel %vm332, %v2330, %v2666
        %v3644 = vsel %vm332, %v2331, %v2668
        %v3645 = vsel %vm332, %v2332, %v2670
        %v3646 = vsel %vm332, %v2333, %v2672
        %v3647 = vsel %vm332, %v2334, %v2674
        %v3648 = vsel %vm332, %v2335, %v2676
        %v3649 = vsel %vm332, %v2336, %v2678
        %v3650 = vsel %vm332, %v2337, %v2680
        %v3651 = vsel %vm332, %v2338, %v2682
        %v3652 = vsel %vm332, %v2339, %v2684
        %v3653 = vsel %vm332, %v2340, %v2686
        %v3654 = vsel %vm332, %v2341, %v2688
        %v3655 = vsel %vm332, %v2342, %v2690
        %v3656 = vsel %vm332, %v2343, %v2692
        %v3657 = vsel %vm332, %v2344, %v2694
        %v3658 = vsel %vm332, %v2345, %v2696
        %v3659 = vsel %vm332, %v2346, %v2698
        %v3660 = vsel %vm332, %v2347, %v2700
        %v3661 = vsel %vm1863, %v3629, %v2766
        %v3662 = vsel %vm1863, %v3630, %v2768
        %v3663 = vsel %vm1863, %v3631, %v2770
        %v3664 = vsel %vm1863, %v3632, %v2772
        %v3665 = vsel %vm1863, %v3633, %v2774
        %v3666 = vsel %vm1863, %v3634, %v2776
        %v3667 = vsel %vm1863, %v3635, %v2778
        %v3668 = vsel %vm1863, %v3636, %v2780
        %v3669 = vsel %vm1863, %v3637, %v2782
        %v3670 = vsel %vm1863, %v3638, %v2784
        %v3671 = vsel %vm1863, %v3639, %v2786
        %v3672 = vsel %vm1863, %v3640, %v2788
        %v3673 = vsel %vm1863, %v3641, %v2790
        %v3674 = vsel %vm1863, %v3642, %v2792
        %v3675 = vsel %vm1863, %v3643, %v2794
        %v3676 = vsel %vm1863, %v3644, %v2796
        %v3677 = vsel %vm1863, %v3645, %v2798
        %v3678 = vsel %vm1863, %v3646, %v2800
        %v3679 = vsel %vm1863, %v3647, %v2802
        %v3680 = vsel %vm1863, %v3648, %v2804
        %v3681 = vsel %vm1863, %v3649, %v2806
        %v3682 = vsel %vm1863, %v3650, %v2808
        %v3683 = vsel %vm1863, %v3651, %v2810
        %v3684 = vsel %vm1863, %v3652, %v2812
        %v3685 = vsel %vm1863, %v3653, %v2814
        %v3686 = vsel %vm1863, %v3654, %v2816
        %v3687 = vsel %vm1863, %v3655, %v2818
        %v3688 = vsel %vm1863, %v3656, %v2820
        %v3689 = vsel %vm1863, %v3657, %v2822
        %v3690 = vsel %vm1863, %v3658, %v2824
        %v3691 = vsel %vm1863, %v3659, %v2826
        %v3692 = vsel %vm1863, %v3660, %v2828
        %v3693 = vsel %vm1929, %v3661, %v2894
        %v3694 = vsel %vm1929, %v3662, %v2896
        %v3695 = vsel %vm1929, %v3663, %v2898
        %v3696 = vsel %vm1929, %v3664, %v2900
        %v3697 = vsel %vm1929, %v3665, %v2902
        %v3698 = vsel %vm1929, %v3666, %v2904
        %v3699 = vsel %vm1929, %v3667, %v2906
        %v3700 = vsel %vm1929, %v3668, %v2908
        %v3701 = vsel %vm1929, %v3669, %v2910
        %v3702 = vsel %vm1929, %v3670, %v2912
        %v3703 = vsel %vm1929, %v3671, %v2914
        %v3704 = vsel %vm1929, %v3672, %v2916
        %v3705 = vsel %vm1929, %v3673, %v2918
        %v3706 = vsel %vm1929, %v3674, %v2920
        %v3707 = vsel %vm1929, %v3675, %v2922
        %v3708 = vsel %vm1929, %v3676, %v2924
        %v3709 = vsel %vm1929, %v3677, %v2926
        %v3710 = vsel %vm1929, %v3678, %v2928
        %v3711 = vsel %vm1929, %v3679, %v2930
        %v3712 = vsel %vm1929, %v3680, %v2932
        %v3713 = vsel %vm1929, %v3681, %v2934
        %v3714 = vsel %vm1929, %v3682, %v2936
        %v3715 = vsel %vm1929, %v3683, %v2938
        %v3716 = vsel %vm1929, %v3684, %v2940
        %v3717 = vsel %vm1929, %v3685, %v2942
        %v3718 = vsel %vm1929, %v3686, %v2944
        %v3719 = vsel %vm1929, %v3687, %v2946
        %v3720 = vsel %vm1929, %v3688, %v2948
        %v3721 = vsel %vm1929, %v3689, %v2950
        %v3722 = vsel %vm1929, %v3690, %v2952
        %v3723 = vsel %vm1929, %v3691, %v2954
        %v3724 = vsel %vm1929, %v3692, %v2956
        %v3725 = vsel %vm1995, %v3693, %v3022
        %v3726 = vsel %vm1995, %v3694, %v3024
        %v3727 = vsel %vm1995, %v3695, %v3026
        %v3728 = vsel %vm1995, %v3696, %v3028
        %v3729 = vsel %vm1995, %v3697, %v3030
        %v3730 = vsel %vm1995, %v3698, %v3032
        %v3731 = vsel %vm1995, %v3699, %v3034
        %v3732 = vsel %vm1995, %v3700, %v3036
        %v3733 = vsel %vm1995, %v3701, %v3038
        %v3734 = vsel %vm1995, %v3702, %v3040
        %v3735 = vsel %vm1995, %v3703, %v3042
        %v3736 = vsel %vm1995, %v3704, %v3044
        %v3737 = vsel %vm1995, %v3705, %v3046
        %v3738 = vsel %vm1995, %v3706, %v3048
        %v3739 = vsel %vm1995, %v3707, %v3050
        %v3740 = vsel %vm1995, %v3708, %v3052
        %v3741 = vsel %vm1995, %v3709, %v3054
        %v3742 = vsel %vm1995, %v3710, %v3056
        %v3743 = vsel %vm1995, %v3711, %v3058
        %v3744 = vsel %vm1995, %v3712, %v3060
        %v3745 = vsel %vm1995, %v3713, %v3062
        %v3746 = vsel %vm1995, %v3714, %v3064
        %v3747 = vsel %vm1995, %v3715, %v3066
        %v3748 = vsel %vm1995, %v3716, %v3068
        %v3749 = vsel %vm1995, %v3717, %v3070
        %v3750 = vsel %vm1995, %v3718, %v3072
        %v3751 = vsel %vm1995, %v3719, %v3074
        %v3752 = vsel %vm1995, %v3720, %v3076
        %v3753 = vsel %vm1995, %v3721, %v3078
        %v3754 = vsel %vm1995, %v3722, %v3080
        %v3755 = vsel %vm1995, %v3723, %v3082
        %v3756 = vsel %vm1995, %v3724, %v3084
        %vm3757 = vcmask 326656
        %v3758 = vsel %vm3757, %v3725, %v3150
        %v3759 = vsel %vm3757, %v3726, %v3152
        %v3760 = vsel %vm3757, %v3727, %v3154
        %v3761 = vsel %vm3757, %v3728, %v3156
        %v3762 = vsel %vm3757, %v3729, %v3158
        %v3763 = vsel %vm3757, %v3730, %v3160
        %v3764 = vsel %vm3757, %v3731, %v3162
        %v3765 = vsel %vm3757, %v3732, %v3164
        %v3766 = vsel %vm3757, %v3733, %v3166
        %v3767 = vsel %vm3757, %v3734, %v3168
        %v3768 = vsel %vm3757, %v3735, %v3170
        %v3769 = vsel %vm3757, %v3736, %v3172
        %v3770 = vsel %vm3757, %v3737, %v3174
        %v3771 = vsel %vm3757, %v3738, %v3176
        %v3772 = vsel %vm3757, %v3739, %v3178
        %v3773 = vsel %vm3757, %v3740, %v3180
        %v3774 = vsel %vm3757, %v3741, %v3182
        %v3775 = vsel %vm3757, %v3742, %v3184
        %v3776 = vsel %vm3757, %v3743, %v3186
        %v3777 = vsel %vm3757, %v3744, %v3188
        %v3778 = vsel %vm3757, %v3745, %v3190
        %v3779 = vsel %vm3757, %v3746, %v3192
        %v3780 = vsel %vm3757, %v3747, %v3194
        %v3781 = vsel %vm3757, %v3748, %v3196
        %v3782 = vsel %vm3757, %v3749, %v3198
        %v3783 = vsel %vm3757, %v3750, %v3200
        %v3784 = vsel %vm3757, %v3751, %v3202
        %v3785 = vsel %vm3757, %v3752, %v3204
        %v3786 = vsel %vm3757, %v3753, %v3206
        %v3787 = vsel %vm3757, %v3754, %v3208
        %v3788 = vsel %vm3757, %v3755, %v3210
        %v3789 = vsel %vm3757, %v3756, %v3212
        %vm3790 = vcmask 392192
        %v3791 = vsel %vm3790, %v3758, %v3278
        %v3792 = vsel %vm3790, %v3759, %v3280
        %v3793 = vsel %vm3790, %v3760, %v3282
        %v3794 = vsel %vm3790, %v3761, %v3284
        %v3795 = vsel %vm3790, %v3762, %v3286
        %v3796 = vsel %vm3790, %v3763, %v3288
        %v3797 = vsel %vm3790, %v3764, %v3290
        %v3798 = vsel %vm3790, %v3765, %v3292
        %v3799 = vsel %vm3790, %v3766, %v3294
        %v3800 = vsel %vm3790, %v3767, %v3296
        %v3801 = vsel %vm3790, %v3768, %v3298
        %v3802 = vsel %vm3790, %v3769, %v3300
        %v3803 = vsel %vm3790, %v3770, %v3302
        %v3804 = vsel %vm3790, %v3771, %v3304
        %v3805 = vsel %vm3790, %v3772, %v3306
        %v3806 = vsel %vm3790, %v3773, %v3308
        %v3807 = vsel %vm3790, %v3774, %v3310
        %v3808 = vsel %vm3790, %v3775, %v3312
        %v3809 = vsel %vm3790, %v3776, %v3314
        %v3810 = vsel %vm3790, %v3777, %v3316
        %v3811 = vsel %vm3790, %v3778, %v3318
        %v3812 = vsel %vm3790, %v3779, %v3320
        %v3813 = vsel %vm3790, %v3780, %v3322
        %v3814 = vsel %vm3790, %v3781, %v3324
        %v3815 = vsel %vm3790, %v3782, %v3326
        %v3816 = vsel %vm3790, %v3783, %v3328
        %v3817 = vsel %vm3790, %v3784, %v3330
        %v3818 = vsel %vm3790, %v3785, %v3332
        %v3819 = vsel %vm3790, %v3786, %v3334
        %v3820 = vsel %vm3790, %v3787, %v3336
        %v3821 = vsel %vm3790, %v3788, %v3338
        %v3822 = vsel %vm3790, %v3789, %v3340
        %vm3823 = vcmask 457728
        %v3824 = vsel %vm3823, %v3791, %v3406
        %v3825 = vsel %vm3823, %v3792, %v3408
        %v3826 = vsel %vm3823, %v3793, %v3410
        %v3827 = vsel %vm3823, %v3794, %v3412
        %v3828 = vsel %vm3823, %v3795, %v3414
        %v3829 = vsel %vm3823, %v3796, %v3416
        %v3830 = vsel %vm3823, %v3797, %v3418
        %v3831 = vsel %vm3823, %v3798, %v3420
        %v3832 = vsel %vm3823, %v3799, %v3422
        %v3833 = vsel %vm3823, %v3800, %v3424
        %v3834 = vsel %vm3823, %v3801, %v3426
        %v3835 = vsel %vm3823, %v3802, %v3428
        %v3836 = vsel %vm3823, %v3803, %v3430
        %v3837 = vsel %vm3823, %v3804, %v3432
        %v3838 = vsel %vm3823, %v3805, %v3434
        %v3839 = vsel %vm3823, %v3806, %v3436
        %v3840 = vsel %vm3823, %v3807, %v3438
        %v3841 = vsel %vm3823, %v3808, %v3440
        %v3842 = vsel %vm3823, %v3809, %v3442
        %v3843 = vsel %vm3823, %v3810, %v3444
        %v3844 = vsel %vm3823, %v3811, %v3446
        %v3845 = vsel %vm3823, %v3812, %v3448
        %v3846 = vsel %vm3823, %v3813, %v3450
        %v3847 = vsel %vm3823, %v3814, %v3452
        %v3848 = vsel %vm3823, %v3815, %v3454
        %v3849 = vsel %vm3823, %v3816, %v3456
        %v3850 = vsel %vm3823, %v3817, %v3458
        %v3851 = vsel %vm3823, %v3818, %v3460
        %v3852 = vsel %vm3823, %v3819, %v3462
        %v3853 = vsel %vm3823, %v3820, %v3464
        %v3854 = vsel %vm3823, %v3821, %v3466
        %v3855 = vsel %vm3823, %v3822, %v3468
        %vm3856 = vcmask 523264
        %v3857 = vsel %vm3856, %v3824, %v3534
        %v3858 = vsel %vm3856, %v3825, %v3536
        %v3859 = vsel %vm3856, %v3826, %v3538
        %v3860 = vsel %vm3856, %v3827, %v3540
        %v3861 = vsel %vm3856, %v3828, %v3542
        %v3862 = vsel %vm3856, %v3829, %v3544
        %v3863 = vsel %vm3856, %v3830, %v3546
        %v3864 = vsel %vm3856, %v3831, %v3548
        %v3865 = vsel %vm3856, %v3832, %v3550
        %v3866 = vsel %vm3856, %v3833, %v3552
        %v3867 = vsel %vm3856, %v3834, %v3554
        %v3868 = vsel %vm3856, %v3835, %v3556
        %v3869 = vsel %vm3856, %v3836, %v3558
        %v3870 = vsel %vm3856, %v3837, %v3560
        %v3871 = vsel %vm3856, %v3838, %v3562
        %v3872 = vsel %vm3856, %v3839, %v3564
        %v3873 = vsel %vm3856, %v3840, %v3566
        %v3874 = vsel %vm3856, %v3841, %v3568
        %v3875 = vsel %vm3856, %v3842, %v3570
        %v3876 = vsel %vm3856, %v3843, %v3572
        %v3877 = vsel %vm3856, %v3844, %v3574
        %v3878 = vsel %vm3856, %v3845, %v3576
        %v3879 = vsel %vm3856, %v3846, %v3578
        %v3880 = vsel %vm3856, %v3847, %v3580
        %v3881 = vsel %vm3856, %v3848, %v3582
        %v3882 = vsel %vm3856, %v3849, %v3584
        %v3883 = vsel %vm3856, %v3850, %v3586
        %v3884 = vsel %vm3856, %v3851, %v3588
        %v3885 = vsel %vm3856, %v3852, %v3590
        %v3886 = vsel %vm3856, %v3853, %v3592
        %v3887 = vsel %vm3856, %v3854, %v3594
        %v3888 = vsel %vm3856, %v3855, %v3596
        %v3889 = vld [vmem:[%s3] sm:$0xff]
        %v3890 = vld [vmem:[%s3 + $0x8] sm:$0xff]
        %v3891 = vld [vmem:[%s3 + $0x10] sm:$0xff]
        %v3892 = vld [vmem:[%s3 + $0x18] sm:$0xff]
        %v3893 = vld [vmem:[%s3 + $0x20] sm:$0xff]
        %v3894 = vld [vmem:[%s3 + $0x28] sm:$0xff]
        %v3895 = vld [vmem:[%s3 + $0x30] sm:$0xff]
        %v3896 = vld [vmem:[%s3 + $0x38] sm:$0xff]
        %v3897 = vld [vmem:[%s3 + $0x40] sm:$0xff]
        %v3898 = vld [vmem:[%s4] sm:$0x1]
        %v3900 = vperm.slane %v3898, 0
        %vm3902 = vcmask 588800
        %v3904 = vsel %vm3902, %v3857, 0
        %v3907 = vsel %vm3902, %v3858, 0
        %v3910 = vsel %vm3902, %v3859, 0
        %v3913 = vsel %vm3902, %v3860, 0
        %v3916 = vsel %vm3902, %v3861, 0
        %v3919 = vsel %vm3902, %v3862, 0
        %v3922 = vsel %vm3902, %v3863, 0
        %v3925 = vsel %vm3902, %v3864, 0
        %v3928 = vsel %vm3902, %v3865, 0
        %v3931 = vsel %vm3902, %v3866, 0
        %v3934 = vsel %vm3902, %v3867, 0
        %v3937 = vsel %vm3902, %v3868, 0
        %v3940 = vsel %vm3902, %v3869, 0
        %v3943 = vsel %vm3902, %v3870, 0
        %v3946 = vsel %vm3902, %v3871, 0
        %v3949 = vsel %vm3902, %v3872, 0
        %v3952 = vsel %vm3902, %v3873, 0
        %v3955 = vsel %vm3902, %v3874, 0
        %v3958 = vsel %vm3902, %v3875, 0
        %v3961 = vsel %vm3902, %v3876, 0
        %v3964 = vsel %vm3902, %v3877, 0
        %v3967 = vsel %vm3902, %v3878, 0
        %v3970 = vsel %vm3902, %v3879, 0
        %v3973 = vsel %vm3902, %v3880, 0
        %v3976 = vsel %vm3902, %v3881, 0
        %v3979 = vsel %vm3902, %v3882, 0
        %v3982 = vsel %vm3902, %v3883, 0
        %v3985 = vsel %vm3902, %v3884, 0
        %v3988 = vsel %vm3902, %v3885, 0
        %v3991 = vsel %vm3902, %v3886, 0
        %v3994 = vsel %vm3902, %v3887, 0
        %v3997 = vsel %vm3902, %v3888, 0
        %3999 = vmatpush.msra.mxu0 0.0
        %4000 = vmatpush.msra.mxu0 0.0
        %4001 = vmatpush.msra.mxu0 0.0
        %4002 = vmatpush.msra.mxu0 0.0
        %4003 = vmatpush.msra.mxu0 0.0
        %4004 = vmatpush.msra.mxu0 0.0
        %4005 = vmatpush.msra.mxu0 0.0
        %4006 = vmatpush.msra.mxu0 %v3897
        %4007 = vmatpush.msra.mxu0 %v3896
        %4008 = vmatpush.msra.mxu0 %v3895
        %4009 = vmatpush.msra.mxu0 %v3894
        %4010 = vmatpush.msra.mxu0 %v3893
        %4011 = vmatpush.msra.mxu0 %v3892
        %4012 = vmatpush.msra.mxu0 %v3891
        %4013 = vmatpush.msra.mxu0 %v3890
        %4014 = vmatpush.msra.mxu0 %v3889
        %4015 = vmatmul.f32.gmra.mxu0 %v3904
        %v4016 = vpop.f32.mrf.mxu0
        %v4017 = vadd.f32 %v3900, %v4016
        %4018 = vmatmul.f32.gmra.mxu0 %v3907
        %v4019 = vpop.f32.mrf.mxu0
        %v4020 = vadd.f32 %v3900, %v4019
        %4021 = vmatmul.f32.gmra.mxu0 %v3910
        %v4022 = vpop.f32.mrf.mxu0
        %v4023 = vadd.f32 %v3900, %v4022
        %4024 = vmatmul.f32.gmra.mxu0 %v3913
        %v4025 = vpop.f32.mrf.mxu0
        %v4026 = vadd.f32 %v3900, %v4025
        %4027 = vmatmul.f32.gmra.mxu0 %v3916
        %v4028 = vpop.f32.mrf.mxu0
        %v4029 = vadd.f32 %v3900, %v4028
        %4030 = vmatmul.f32.gmra.mxu0 %v3919
        %v4031 = vpop.f32.mrf.mxu0
        %v4032 = vadd.f32 %v3900, %v4031
        %4033 = vmatmul.f32.gmra.mxu0 %v3922
        %v4034 = vpop.f32.mrf.mxu0
        %v4035 = vadd.f32 %v3900, %v4034
        %4036 = vmatmul.f32.gmra.mxu0 %v3925
        %v4037 = vpop.f32.mrf.mxu0
        %v4038 = vadd.f32 %v3900, %v4037
        %4039 = vmatmul.f32.gmra.mxu0 %v3928
        %v4040 = vpop.f32.mrf.mxu0
        %v4041 = vadd.f32 %v3900, %v4040
        %4042 = vmatmul.f32.gmra.mxu0 %v3931
        %v4043 = vpop.f32.mrf.mxu0
        %v4044 = vadd.f32 %v3900, %v4043
        %4045 = vmatmul.f32.gmra.mxu0 %v3934
        %v4046 = vpop.f32.mrf.mxu0
        %v4047 = vadd.f32 %v3900, %v4046
        %4048 = vmatmul.f32.gmra.mxu0 %v3937
        %v4049 = vpop.f32.mrf.mxu0
        %v4050 = vadd.f32 %v3900, %v4049
        %4051 = vmatmul.f32.gmra.mxu0 %v3940
        %v4052 = vpop.f32.mrf.mxu0
        %v4053 = vadd.f32 %v3900, %v4052
        %4054 = vmatmul.f32.gmra.mxu0 %v3943
        %v4055 = vpop.f32.mrf.mxu0
        %v4056 = vadd.f32 %v3900, %v4055
        %4057 = vmatmul.f32.gmra.mxu0 %v3946
        %v4058 = vpop.f32.mrf.mxu0
        %v4059 = vadd.f32 %v3900, %v4058
        %4060 = vmatmul.f32.gmra.mxu0 %v3949
        %v4061 = vpop.f32.mrf.mxu0
        %v4062 = vadd.f32 %v3900, %v4061
        %4063 = vmatmul.f32.gmra.mxu0 %v3952
        %v4064 = vpop.f32.mrf.mxu0
        %v4065 = vadd.f32 %v3900, %v4064
        %4066 = vmatmul.f32.gmra.mxu0 %v3955
        %v4067 = vpop.f32.mrf.mxu0
        %v4068 = vadd.f32 %v3900, %v4067
        %4069 = vmatmul.f32.gmra.mxu0 %v3958
        %v4070 = vpop.f32.mrf.mxu0
        %v4071 = vadd.f32 %v3900, %v4070
        %4072 = vmatmul.f32.gmra.mxu0 %v3961
        %v4073 = vpop.f32.mrf.mxu0
        %v4074 = vadd.f32 %v3900, %v4073
        %4075 = vmatmul.f32.gmra.mxu0 %v3964
        %v4076 = vpop.f32.mrf.mxu0
        %v4077 = vadd.f32 %v3900, %v4076
        %4078 = vmatmul.f32.gmra.mxu0 %v3967
        %v4079 = vpop.f32.mrf.mxu0
        %v4080 = vadd.f32 %v3900, %v4079
        %4081 = vmatmul.f32.gmra.mxu0 %v3970
        %v4082 = vpop.f32.mrf.mxu0
        %v4083 = vadd.f32 %v3900, %v4082
        %4084 = vmatmul.f32.gmra.mxu0 %v3973
        %v4085 = vpop.f32.mrf.mxu0
        %v4086 = vadd.f32 %v3900, %v4085
        %4087 = vmatmul.f32.gmra.mxu0 %v3976
        %v4088 = vpop.f32.mrf.mxu0
        %v4089 = vadd.f32 %v3900, %v4088
        %4090 = vmatmul.f32.gmra.mxu0 %v3979
        %v4091 = vpop.f32.mrf.mxu0
        %v4092 = vadd.f32 %v3900, %v4091
        %4093 = vmatmul.f32.gmra.mxu0 %v3982
        %v4094 = vpop.f32.mrf.mxu0
        %v4095 = vadd.f32 %v3900, %v4094
        %4096 = vmatmul.f32.gmra.mxu0 %v3985
        %v4097 = vpop.f32.mrf.mxu0
        %v4098 = vadd.f32 %v3900, %v4097
        %4099 = vmatmul.f32.gmra.mxu0 %v3988
        %v4100 = vpop.f32.mrf.mxu0
        %v4101 = vadd.f32 %v3900, %v4100
        %4102 = vmatmul.f32.gmra.mxu0 %v3991
        %v4103 = vpop.f32.mrf.mxu0
        %v4104 = vadd.f32 %v3900, %v4103
        %4105 = vmatmul.f32.gmra.mxu0 %v3994
        %v4106 = vpop.f32.mrf.mxu0
        %v4107 = vadd.f32 %v3900, %v4106
        %4108 = vmatmul.f32.gmra.mxu0 %v3997
        %v4109 = vpop.f32.mrf.mxu0
        %v4110 = vadd.f32 %v3900, %v4109
        %4111 = vdwg.mxu0
        %v4112 = vmax.f32 %v4017, 0.0
        %v4113 = vmax.f32 %v4020, 0.0
        %v4114 = vmax.f32 %v4023, 0.0
        %v4115 = vmax.f32 %v4026, 0.0
        %v4116 = vmax.f32 %v4029, 0.0
        %v4117 = vmax.f32 %v4032, 0.0
        %v4118 = vmax.f32 %v4035, 0.0
        %v4119 = vmax.f32 %v4038, 0.0
        %v4120 = vmax.f32 %v4041, 0.0
        %v4121 = vmax.f32 %v4044, 0.0
        %v4122 = vmax.f32 %v4047, 0.0
        %v4123 = vmax.f32 %v4050, 0.0
        %v4124 = vmax.f32 %v4053, 0.0
        %v4125 = vmax.f32 %v4056, 0.0
        %v4126 = vmax.f32 %v4059, 0.0
        %v4127 = vmax.f32 %v4062, 0.0
        %v4128 = vmax.f32 %v4065, 0.0
        %v4129 = vmax.f32 %v4068, 0.0
        %v4130 = vmax.f32 %v4071, 0.0
        %v4131 = vmax.f32 %v4074, 0.0
        %v4132 = vmax.f32 %v4077, 0.0
        %v4133 = vmax.f32 %v4080, 0.0
        %v4134 = vmax.f32 %v4083, 0.0
        %v4135 = vmax.f32 %v4086, 0.0
        %v4136 = vmax.f32 %v4089, 0.0
        %v4137 = vmax.f32 %v4092, 0.0
        %v4138 = vmax.f32 %v4095, 0.0
        %v4139 = vmax.f32 %v4098, 0.0
        %v4140 = vmax.f32 %v4101, 0.0
        %v4141 = vmax.f32 %v4104, 0.0
        %v4142 = vmax.f32 %v4107, 0.0
        %v4143 = vmax.f32 %v4110, 0.0
        %4144 = vmatpush.msra.mxu0 %v4127
        %4145 = vmatpush.msra.mxu0 %v4126
        %4146 = vmatpush.msra.mxu0 %v4125
        %4147 = vmatpush.msra.mxu0 %v4124
        %4148 = vmatpush.msra.mxu0 %v4123
        %4149 = vmatpush.msra.mxu0 %v4122
        %4150 = vmatpush.msra.mxu0 %v4121
        %4151 = vmatpush.msra.mxu0 %v4120
        %4152 = vmatpush.msra.mxu0 %v4119
        %4153 = vmatpush.msra.mxu0 %v4118
        %4154 = vmatpush.msra.mxu0 %v4117
        %4155 = vmatpush.msra.mxu0 %v4116
        %4156 = vmatpush.msra.mxu0 %v4115
        %4157 = vmatpush.msra.mxu0 %v4114
        %4158 = vmatpush.msra.mxu0 %v4113
        %4159 = vmatpush.msra.mxu0 %v4112
        %4160 = vmatmul.f32.gmra.mxu0 0.00390625
        %v4161 = vpop.f32.mrf.mxu0
        %v4162 = vadd.f32 0.0, %v4161
        %4163 = vdwg.mxu0
        %4164 = vmatpush.msra.mxu0 %v4143
        %4165 = vmatpush.msra.mxu0 %v4142
        %4166 = vmatpush.msra.mxu0 %v4141
        %4167 = vmatpush.msra.mxu0 %v4140
        %4168 = vmatpush.msra.mxu0 %v4139
        %4169 = vmatpush.msra.mxu0 %v4138
        %4170 = vmatpush.msra.mxu0 %v4137
        %4171 = vmatpush.msra.mxu0 %v4136
        %4172 = vmatpush.msra.mxu0 %v4135
        %4173 = vmatpush.msra.mxu0 %v4134
        %4174 = vmatpush.msra.mxu0 %v4133
        %4175 = vmatpush.msra.mxu0 %v4132
        %4176 = vmatpush.msra.mxu0 %v4131
        %4177 = vmatpush.msra.mxu0 %v4130
        %4178 = vmatpush.msra.mxu0 %v4129
        %4179 = vmatpush.msra.mxu0 %v4128
        %4180 = vmatmul.f32.gmra.mxu0 0.00390625
        %v4181 = vpop.f32.mrf.mxu0
        %v4182 = vadd.f32 %v4162, %v4181
        %4183 = vdwg.mxu0
        %v4184 = vld [vmem:[%s5] sm:$0xff]
        %v4185 = vld [vmem:[%s6] sm:$0x1]
        %v4187 = vsel %vm332, %v4182, 0
        %4189 = vmatpush.msra.mxu0 0.0
        %4190 = vmatpush.msra.mxu0 0.0
        %4191 = vmatpush.msra.mxu0 0.0
        %4192 = vmatpush.msra.mxu0 0.0
        %4193 = vmatpush.msra.mxu0 0.0
        %4194 = vmatpush.msra.mxu0 0.0
        %4195 = vmatpush.msra.mxu0 0.0
        %4196 = vmatpush.msra.mxu0 0.0
        %4197 = vmatpush.msra.mxu0 0.0
        %4198 = vmatpush.msra.mxu0 0.0
        %4199 = vmatpush.msra.mxu0 0.0
        %4200 = vmatpush.msra.mxu0 0.0
        %4201 = vmatpush.msra.mxu0 0.0
        %4202 = vmatpush.msra.mxu0 0.0
        %4203 = vmatpush.msra.mxu0 0.0
        %4204 = vmatpush.msra.mxu0 %v4184
        %4205 = vmatmul.f32.gmra.mxu0 %v4187
        %v4206 = vpop.f32.mrf.mxu0
        %v4207 = vadd.f32 %v4185, %v4206
        %4208 = vdwg.mxu0
        %4209 = vst [vmem:[%s270] sm:$0x1] %v4207
        %s4210 = sand.u32 %s181, 1
        %s4211 = scalar_lea.sflag [#allocation5], %s4210
        %s4212 = sand.u32 %s181, 1
        %s4213 = scalar_lea.vmem [#allocation4], %s4212
        // Predicated region
        $region49: #{tpu_custom_call.1} parent=47 // pred_check
          %p4214 = pneg %p191
        $region50: #{tpu_custom_call.1} parent=47 // pred_check_branch
          %4216 = sbr.rel (%p4214) target = $region52
        $region51: #{tpu_custom_call.1} parent=47 // pred_region
          %4218 = vsyncadd %s4211, 0
          %s4219 = scalar_lea.hbm %s7, %s21
          %s4221 = sshll.u32 %s4213, 4
          %s4222 = int_to_ptr.vmem [resolvable:$true] %s4221
          %s4223 = sshll.u32 %s4219, 4
          %s4224 = int_to_ptr.hbm [resolvable:$true] %s4223
          %4226 = dma.vmem_to_hbm [thread:$0]  %s4222, 16, %s4224, %s4211
        $region52: #{tpu_custom_call.1} parent=47 // pred_fallthru
          _
      $region48: #{tpu_custom_call.1} parent=5 // pred_fallthru
        _
      %p4227 = scmp.le.s32.totalorder 2, %s16
      // Predicated region
      $region53: #{tpu_custom_call.1} parent=5 // pred_check
        %p4228 = pneg %p4227
      $region54: #{tpu_custom_call.1} parent=5 // pred_check_branch
        %4230 = sbr.rel (%p4228) target = $region56
      $region55: #{tpu_custom_call.1} parent=5 // pred_region
        %s4231 = ssub.s32 %s16, 2
        // Predicated region
        $region57: #{tpu_custom_call.1} parent=55 // pred_check
          %p4232 = pneg %p197
        $region58: #{tpu_custom_call.1} parent=55 // pred_check_branch
          %4234 = sbr.rel (%p4232) target = $region60
        $region59: #{tpu_custom_call.1} parent=55 // pred_region
          %s4235 = sand.u32 %s182, 1
          %s4236 = scalar_lea.sflag [#allocation5], %s4235
          %s4237 = sand.u32 %s182, 1
          %s4238 = scalar_lea.vmem [#allocation4], %s4237
          %4240 = dma.done %s4236, 16
        $region60: #{tpu_custom_call.1} parent=55 // pred_fallthru
          _
      $region56: #{tpu_custom_call.1} parent=5 // pred_fallthru
        _
    $region6: #{tpu_custom_call.1} parent=1 // loop_footer
      %s20 = sadd.s32 1, %s16
    $region7: #{tpu_custom_call.1} parent=1 // loop_footer_branch
      %15 = sbr.rel target = $region3
    $region8: #{tpu_custom_call.1} parent=1 // loop_exit
      _
    %4241 = vsyncpa [#allocation5], 1
    %s4242 = scalar_lea.sflag [#allocation5], 1
    %4243 = vsyncpa %s4242, 1

</llo_original>
